<compile_context>
chip_gen: v7x
topology: tpu7x:2x2x1
jax: 0.10.0
libtpu: 0.0.40
codegen_flags: <defaults>
</compile_context>

<pallas_src>
import functools
import math

import jax
import jax.numpy as jnp
from jax.experimental import pallas as pl
from jax.experimental.pallas import tpu as pltpu


CONFIG = dict(
    vocab_size=100,
    hidden_size=32,
    num_heads=4,
    num_layers=2,
    intermediate_size=64,
    max_position=16,
    type_vocab_size=2,
    hidden_dim=32,     # classifier hidden_dim
    num_classes=4,
)

LN_EPS = 1e-12
MASK_NEG = -10000.0


# ---------------------------------------------------------------------------
# Exact (erf) GELU via Abramowitz–Stegun 7.1.26 (max abs err ~1.5e-7).
# Uses only exp / abs / where / polynomials, all of which lower on Mosaic.
# ---------------------------------------------------------------------------
def _erf(z):
    a1, a2, a3, a4, a5 = (0.254829592, -0.284496736, 1.421413741,
                          -1.453152027, 1.061405429)
    p = 0.3275911
    sgn = jnp.where(z >= 0.0, 1.0, -1.0)
    az = jnp.abs(z)
    t = 1.0 / (1.0 + p * az)
    poly = ((((a5 * t + a4) * t + a3) * t + a2) * t + a1) * t
    return sgn * (1.0 - poly * jnp.exp(-az * az))


def _gelu_exact(v):
    return 0.5 * v * (1.0 + _erf(v * (1.0 / math.sqrt(2.0))))


# ---------------------------------------------------------------------------
# Fused whole-model Pallas kernel (single call, no grid)
# ---------------------------------------------------------------------------
def build_fused_forward(cfg, B, S):
    H = cfg["hidden_size"]
    nH = cfg["num_heads"]
    d = H // nH
    L = cfg["num_layers"]
    Iff = cfg["intermediate_size"]
    Hd = cfg["hidden_dim"]
    C = cfg["num_classes"]
    BS = B * S
    scale = 1.0 / math.sqrt(d)

    def kernel(ids_ref, mask_ref, wtab_ref, pospt_ref,
               wqkv_ref, wo_ref, wi_ref, wo2_ref, whead_ref, vec_ref,
               o_ref, x_buf, ctx_buf):

        def vrow(r, w):
            # one packed bias / LayerNorm row (f32), kept 2-D for broadcasting
            return vec_ref[r:r + 1, 0:w]

        def layer_norm(v, g, b):
            mu = jnp.mean(v, axis=-1, keepdims=True)
            var = jnp.mean((v - mu) * (v - mu), axis=-1, keepdims=True)
            return (v - mu) * jax.lax.rsqrt(var + LN_EPS) * g + b

        def wdot(a, w_bf16):
            # activations cast to bf16 at the MXU input, f32 accumulation
            return jnp.dot(a.astype(jnp.bfloat16), w_bf16,
                           preferred_element_type=jnp.float32)

        # ---- in-kernel embedding gather: word row + (pos + type0) row ------
        for t in range(BS):
            tok = ids_ref[t // S, t % S]                       # SMEM scalar
            wrow = wtab_ref[pl.ds(tok, 1), :]                  # (1, H) dyn gather
            si = t % S
            x_buf[t:t + 1, :] = wrow + pospt_ref[si:si + 1, :]

        x = layer_norm(x_buf[...], vrow(0, H), vrow(1, H))     # (BS, H) f32

        # ---- transformer layers (static unrolled, L=2) ----------------------
        for l in range(L):
            base = 2 + 8 * l
            # fused QKV projection for the whole batch: one (BS,H)@(H,3H) matmul
            qkv = wdot(x, wqkv_ref[l]) + vrow(base + 0, 3 * H)   # (BS, 3H)

            # multi-head attention; per-head context written into a VMEM
            # scratch so the output projection is ONE (BS,H)@(H,H) matmul.
            for b in range(B):
                r0 = b * S
                neg = (1.0 - mask_ref[b:b + 1, :]) * MASK_NEG    # (1, S)
                for h in range(nH):
                    lo = h * d
                    qh = qkv[r0:r0 + S, lo:lo + d]               # (S, d)
                    kh = qkv[r0:r0 + S, H + lo:H + lo + d]       # (S, d)
                    vh = qkv[r0:r0 + S, 2 * H + lo:2 * H + lo + d]
                    # q @ k^T without materialising a transpose
                    s = jax.lax.dot_general(
                        qh, kh, (((1,), (1,)), ((), ())),
                        preferred_element_type=jnp.float32) * scale + neg
                    s = s - jnp.max(s, axis=-1, keepdims=True)
                    p = jnp.exp(s)
                    p = p * pl.reciprocal(
                        jnp.sum(p, axis=-1, keepdims=True), approx=True)
                    ctx_buf[r0:r0 + S, lo:lo + d] = jnp.dot(
                        p, vh, preferred_element_type=jnp.float32)

            attn = wdot(ctx_buf[...], wo_ref[l]) + vrow(base + 1, H)
            x = layer_norm(x + attn, vrow(base + 2, H), vrow(base + 3, H))

            ffn = wdot(x, wi_ref[l]) + vrow(base + 4, Iff)
            ffn = _gelu_exact(ffn)                               # exact erf GELU
            ffn = wdot(ffn, wo2_ref[l]) + vrow(base + 5, H)
            x = layer_norm(x + ffn, vrow(base + 6, H), vrow(base + 7, H))

        # ---- classifier head on the [CLS] rows, batched over B --------------
        cbase = 2 + 8 * L
        cls = jnp.concatenate([x[b * S:b * S + 1, :] for b in range(B)], axis=0)
        h0 = jnp.maximum(wdot(cls, whead_ref[:, 0:Hd]) + vrow(cbase + 0, Hd), 0.0)
        h1 = jnp.maximum(wdot(h0, whead_ref[:, Hd:2 * Hd]) + vrow(cbase + 1, Hd), 0.0)
        logits = wdot(h1, whead_ref[:, 2 * Hd:2 * Hd + C]) + vrow(cbase + 2, C)
        mmax = jnp.max(logits, axis=-1, keepdims=True)
        lse = jnp.log(jnp.sum(jnp.exp(logits - mmax), axis=-1, keepdims=True)) + mmax
        o_ref[...] = logits - lse                               # (B, C) log-softmax

    vmem = pltpu.MemorySpace.VMEM
    smem = pltpu.MemorySpace.SMEM
    in_specs = [
        pl.BlockSpec(memory_space=smem),   # input_ids (scalars for indexing)
        pl.BlockSpec(memory_space=vmem),   # attention mask (B, S) f32
        pl.BlockSpec(memory_space=vmem),   # word embedding table (V, H) f32
        pl.BlockSpec(memory_space=vmem),   # pos + type0 embeddings (S, H) f32
        pl.BlockSpec(memory_space=vmem),   # Wqkv (L, H, 3H) bf16
        pl.BlockSpec(memory_space=vmem),   # Wo   (L, H, H)  bf16
        pl.BlockSpec(memory_space=vmem),   # Wi   (L, H, I)  bf16
        pl.BlockSpec(memory_space=vmem),   # Wo2  (L, I, H)  bf16
        pl.BlockSpec(memory_space=vmem),   # Whead (H, 2*Hd+C) bf16
        pl.BlockSpec(memory_space=vmem),   # packed bias/LN slab (21, 3H) f32
    ]

    return pl.pallas_call(
        kernel,
        out_shape=jax.ShapeDtypeStruct((B, C), jnp.float32),
        in_specs=in_specs,
        out_specs=pl.BlockSpec(memory_space=vmem),
        scratch_shapes=[
            pltpu.VMEM((BS, H), jnp.float32),   # gathered embeddings
            pltpu.VMEM((BS, H), jnp.float32),   # attention context
        ],
    )


# ---------------------------------------------------------------------------
# Parameters (deterministic synthetic init; no checkpoint loading)
# ---------------------------------------------------------------------------
def init_params(key, cfg):
    H = cfg["hidden_size"]
    Iff = cfg["intermediate_size"]
    Hd = cfg["hidden_dim"]
    C = cfg["num_classes"]

    def nrm(k, shape, scale=0.02):
        return (scale * jax.random.normal(k, shape)).astype(jnp.float32)

    keys = iter(jax.random.split(key, 64))
    p = {
        "word_emb": nrm(next(keys), (cfg["vocab_size"], H)),
        "pos_emb": nrm(next(keys), (cfg["max_position"], H)),
        "type_emb": nrm(next(keys), (cfg["type_vocab_size"], H)),
        "emb_ln_g": jnp.ones((H,), jnp.float32),
        "emb_ln_b": jnp.zeros((H,), jnp.float32),
        "layers": [],
        "Wc": nrm(next(keys), (H, Hd)), "bc": jnp.zeros((Hd,), jnp.float32),
        "W1": nrm(next(keys), (Hd, Hd)), "b1": jnp.zeros((Hd,), jnp.float32),
        "W2": nrm(next(keys), (Hd, C)), "b2": jnp.zeros((C,), jnp.float32),
    }
    for _ in range(cfg["num_layers"]):
        p["layers"].append({
            "Wq": nrm(next(keys), (H, H)), "bq": jnp.zeros((H,), jnp.float32),
            "Wk": nrm(next(keys), (H, H)), "bk": jnp.zeros((H,), jnp.float32),
            "Wv": nrm(next(keys), (H, H)), "bv": jnp.zeros((H,), jnp.float32),
            "Wo": nrm(next(keys), (H, H)), "bo": jnp.zeros((H,), jnp.float32),
            "ln1_g": jnp.ones((H,), jnp.float32), "ln1_b": jnp.zeros((H,), jnp.float32),
            "Wi": nrm(next(keys), (H, Iff)), "bi": jnp.zeros((Iff,), jnp.float32),
            "Wo2": nrm(next(keys), (Iff, H)), "bo2": jnp.zeros((H,), jnp.float32),
            "ln2_g": jnp.ones((H,), jnp.float32), "ln2_b": jnp.zeros((H,), jnp.float32),
        })
    return p


def pack_params(params, cfg, S):
    """Fuse Wq|Wk|Wv, stack per-layer matrices (bf16), pack all small vectors
    into one f32 slab, and pre-sum pos + type(0) embeddings."""
    H = cfg["hidden_size"]
    layers = params["layers"]
    vec_w = 3 * H
    bf16 = jnp.bfloat16

    def row(v):
        v = v.reshape(1, -1).astype(jnp.float32)
        return jnp.pad(v, ((0, 0), (0, vec_w - v.shape[1])))

    vec_rows = [row(params["emb_ln_g"]), row(params["emb_ln_b"])]
    for l in layers:
        vec_rows += [
            row(jnp.concatenate([l["bq"], l["bk"], l["bv"]])),
            row(l["bo"]), row(l["ln1_g"]), row(l["ln1_b"]),
            row(l["bi"]), row(l["bo2"]), row(l["ln2_g"]), row(l["ln2_b"]),
        ]
    vec_rows += [row(params["bc"]), row(params["b1"]), row(params["b2"])]

    def stack(fn):
        return jnp.stack([fn(l) for l in layers], axis=0)

    return dict(
        word_emb=params["word_emb"].astype(jnp.float32),
        pospt=(params["pos_emb"][:S]
               + params["type_emb"][0][None, :]).astype(jnp.float32),
        Wqkv=stack(lambda l: jnp.concatenate([l["Wq"], l["Wk"], l["Wv"]],
                                             axis=1)).astype(bf16),
        Wo=stack(lambda l: l["Wo"]).astype(bf16),
        Wi=stack(lambda l: l["Wi"]).astype(bf16),
        Wo2=stack(lambda l: l["Wo2"]).astype(bf16),
        Whead=jnp.concatenate([params["Wc"], params["W1"], params["W2"]],
                              axis=1).astype(bf16),
        vec=jnp.concatenate(vec_rows, axis=0),
    )


# ---------------------------------------------------------------------------
# Forward pass: everything (gather included) in ONE Pallas call
# ---------------------------------------------------------------------------
def bert_classification_forward(packed, input_ids, attention_mask, cfg=CONFIG):
    B, S = input_ids.shape
    fused = build_fused_forward(cfg, B, S)
    return fused(
        input_ids.astype(jnp.int32),
        attention_mask.astype(jnp.float32),
        packed["word_emb"], packed["pospt"],
        packed["Wqkv"], packed["Wo"], packed["Wi"], packed["Wo2"],
        packed["Whead"], packed["vec"],
    )


# ---------------------------------------------------------------------------
if __name__ == "__main__":
    key = jax.random.PRNGKey(0)
    k_param, k_ids = jax.random.split(key)

    B, S = 2, 8
    params = init_params(k_param, CONFIG)
    packed = pack_params(params, CONFIG, S)

    input_ids = jax.random.randint(k_ids, (B, S), 0, CONFIG["vocab_size"],
                                   dtype=jnp.int32)
    attention_mask = jnp.ones((B, S), dtype=jnp.int32)

    fwd = jax.jit(functools.partial(bert_classification_forward, cfg=CONFIG))
    log_probs = jax.block_until_ready(fwd(packed, input_ids, attention_mask))

    assert log_probs.shape == (B, CONFIG["num_classes"])
    assert bool(jnp.all(jnp.isfinite(log_probs)))
    # log-softmax rows must sum to ~1 in probability space
    assert jnp.allclose(jnp.exp(log_probs).sum(-1), 1.0, atol=1e-4)
    print("KERNEL_OK")
</pallas_src>

<mosaic_0001>
module attributes {stable_mosaic.version = 11 : i64} {
  func.func @kernel(%arg0: memref<2x8xi32, #tpu.memory_space<smem>>, %arg1: memref<2x8xf32, #tpu.memory_space<vmem>>, %arg2: memref<100x32xf32, #tpu.memory_space<vmem>>, %arg3: memref<8x32xf32, #tpu.memory_space<vmem>>, %arg4: memref<2x32x96xbf16, #tpu.memory_space<vmem>>, %arg5: memref<2x32x32xbf16, #tpu.memory_space<vmem>>, %arg6: memref<2x32x64xbf16, #tpu.memory_space<vmem>>, %arg7: memref<2x64x32xbf16, #tpu.memory_space<vmem>>, %arg8: memref<32x68xbf16, #tpu.memory_space<vmem>>, %arg9: memref<21x96xf32, #tpu.memory_space<vmem>>, %arg10: memref<2x4xf32, #tpu.memory_space<vmem>>, %arg11: memref<16x32xf32, #tpu.memory_space<vmem>>, %arg12: memref<16x32xf32, #tpu.memory_space<vmem>>) attributes {dimension_semantics = [], scalar_prefetch = 0 : i64, scratch_operands = 2 : i64, tpu.core_type = #tpu.core_type<tc>} {
    %c0 = arith.constant 0 : index
    %c0_0 = arith.constant 0 : index
    %0 = memref.load %arg0[%c0, %c0_0] : memref<2x8xi32, #tpu.memory_space<smem>>
    %1 = arith.index_cast %0 : i32 to index
    %c0_1 = arith.constant 0 : index
    %2 = vector.load %arg2[%1, %c0_1] : memref<100x32xf32, #tpu.memory_space<vmem>>, vector<1x32xf32>
    %c0_2 = arith.constant 0 : index
    %c0_3 = arith.constant 0 : index
    %3 = vector.load %arg3[%c0_2, %c0_3] : memref<8x32xf32, #tpu.memory_space<vmem>>, vector<1x32xf32>
    %4 = arith.addf %2, %3 : vector<1x32xf32>
    %c0_4 = arith.constant 0 : index
    %c0_5 = arith.constant 0 : index
    %5 = vector.load %arg11[%c0_4, %c0_5] : memref<16x32xf32, #tpu.memory_space<vmem>>, vector<1x32xf32>
    tpu.vector_store %arg11[%c0_4, %c0_5], %4 {strides = array<i32>} : memref<16x32xf32, #tpu.memory_space<vmem>>, vector<1x32xf32>,
    %c0_6 = arith.constant 0 : index
    %c1 = arith.constant 1 : index
    %6 = memref.load %arg0[%c0_6, %c1] : memref<2x8xi32, #tpu.memory_space<smem>>
    %7 = arith.index_cast %6 : i32 to index
    %c0_7 = arith.constant 0 : index
    %8 = vector.load %arg2[%7, %c0_7] : memref<100x32xf32, #tpu.memory_space<vmem>>, vector<1x32xf32>
    %c1_8 = arith.constant 1 : index
    %c0_9 = arith.constant 0 : index
    %9 = vector.load %arg3[%c1_8, %c0_9] : memref<8x32xf32, #tpu.memory_space<vmem>>, vector<1x32xf32>
    %10 = arith.addf %8, %9 : vector<1x32xf32>
    %c1_10 = arith.constant 1 : index
    %c0_11 = arith.constant 0 : index
    %11 = vector.load %arg11[%c1_10, %c0_11] : memref<16x32xf32, #tpu.memory_space<vmem>>, vector<1x32xf32>
    tpu.vector_store %arg11[%c1_10, %c0_11], %10 {strides = array<i32>} : memref<16x32xf32, #tpu.memory_space<vmem>>, vector<1x32xf32>,
    %c0_12 = arith.constant 0 : index
    %c2 = arith.constant 2 : index
    %12 = memref.load %arg0[%c0_12, %c2] : memref<2x8xi32, #tpu.memory_space<smem>>
    %13 = arith.index_cast %12 : i32 to index
    %c0_13 = arith.constant 0 : index
    %14 = vector.load %arg2[%13, %c0_13] : memref<100x32xf32, #tpu.memory_space<vmem>>, vector<1x32xf32>
    %c2_14 = arith.constant 2 : index
    %c0_15 = arith.constant 0 : index
    %15 = vector.load %arg3[%c2_14, %c0_15] : memref<8x32xf32, #tpu.memory_space<vmem>>, vector<1x32xf32>
    %16 = arith.addf %14, %15 : vector<1x32xf32>
    %c2_16 = arith.constant 2 : index
    %c0_17 = arith.constant 0 : index
    %17 = vector.load %arg11[%c2_16, %c0_17] : memref<16x32xf32, #tpu.memory_space<vmem>>, vector<1x32xf32>
    tpu.vector_store %arg11[%c2_16, %c0_17], %16 {strides = array<i32>} : memref<16x32xf32, #tpu.memory_space<vmem>>, vector<1x32xf32>,
    %c0_18 = arith.constant 0 : index
    %c3 = arith.constant 3 : index
    %18 = memref.load %arg0[%c0_18, %c3] : memref<2x8xi32, #tpu.memory_space<smem>>
    %19 = arith.index_cast %18 : i32 to index
    %c0_19 = arith.constant 0 : index
    %20 = vector.load %arg2[%19, %c0_19] : memref<100x32xf32, #tpu.memory_space<vmem>>, vector<1x32xf32>
    %c3_20 = arith.constant 3 : index
    %c0_21 = arith.constant 0 : index
    %21 = vector.load %arg3[%c3_20, %c0_21] : memref<8x32xf32, #tpu.memory_space<vmem>>, vector<1x32xf32>
    %22 = arith.addf %20, %21 : vector<1x32xf32>
    %c3_22 = arith.constant 3 : index
    %c0_23 = arith.constant 0 : index
    %23 = vector.load %arg11[%c3_22, %c0_23] : memref<16x32xf32, #tpu.memory_space<vmem>>, vector<1x32xf32>
    tpu.vector_store %arg11[%c3_22, %c0_23], %22 {strides = array<i32>} : memref<16x32xf32, #tpu.memory_space<vmem>>, vector<1x32xf32>,
    %c0_24 = arith.constant 0 : index
    %c4 = arith.constant 4 : index
    %24 = memref.load %arg0[%c0_24, %c4] : memref<2x8xi32, #tpu.memory_space<smem>>
    %25 = arith.index_cast %24 : i32 to index
    %c0_25 = arith.constant 0 : index
    %26 = vector.load %arg2[%25, %c0_25] : memref<100x32xf32, #tpu.memory_space<vmem>>, vector<1x32xf32>
    %c4_26 = arith.constant 4 : index
    %c0_27 = arith.constant 0 : index
    %27 = vector.load %arg3[%c4_26, %c0_27] : memref<8x32xf32, #tpu.memory_space<vmem>>, vector<1x32xf32>
    %28 = arith.addf %26, %27 : vector<1x32xf32>
    %c4_28 = arith.constant 4 : index
    %c0_29 = arith.constant 0 : index
    %29 = vector.load %arg11[%c4_28, %c0_29] : memref<16x32xf32, #tpu.memory_space<vmem>>, vector<1x32xf32>
    tpu.vector_store %arg11[%c4_28, %c0_29], %28 {strides = array<i32>} : memref<16x32xf32, #tpu.memory_space<vmem>>, vector<1x32xf32>,
    %c0_30 = arith.constant 0 : index
    %c5 = arith.constant 5 : index
    %30 = memref.load %arg0[%c0_30, %c5] : memref<2x8xi32, #tpu.memory_space<smem>>
    %31 = arith.index_cast %30 : i32 to index
    %c0_31 = arith.constant 0 : index
    %32 = vector.load %arg2[%31, %c0_31] : memref<100x32xf32, #tpu.memory_space<vmem>>, vector<1x32xf32>
    %c5_32 = arith.constant 5 : index
    %c0_33 = arith.constant 0 : index
    %33 = vector.load %arg3[%c5_32, %c0_33] : memref<8x32xf32, #tpu.memory_space<vmem>>, vector<1x32xf32>
    %34 = arith.addf %32, %33 : vector<1x32xf32>
    %c5_34 = arith.constant 5 : index
    %c0_35 = arith.constant 0 : index
    %35 = vector.load %arg11[%c5_34, %c0_35] : memref<16x32xf32, #tpu.memory_space<vmem>>, vector<1x32xf32>
    tpu.vector_store %arg11[%c5_34, %c0_35], %34 {strides = array<i32>} : memref<16x32xf32, #tpu.memory_space<vmem>>, vector<1x32xf32>,
    %c0_36 = arith.constant 0 : index
    %c6 = arith.constant 6 : index
    %36 = memref.load %arg0[%c0_36, %c6] : memref<2x8xi32, #tpu.memory_space<smem>>
    %37 = arith.index_cast %36 : i32 to index
    %c0_37 = arith.constant 0 : index
    %38 = vector.load %arg2[%37, %c0_37] : memref<100x32xf32, #tpu.memory_space<vmem>>, vector<1x32xf32>
    %c6_38 = arith.constant 6 : index
    %c0_39 = arith.constant 0 : index
    %39 = vector.load %arg3[%c6_38, %c0_39] : memref<8x32xf32, #tpu.memory_space<vmem>>, vector<1x32xf32>
    %40 = arith.addf %38, %39 : vector<1x32xf32>
    %c6_40 = arith.constant 6 : index
    %c0_41 = arith.constant 0 : index
    %41 = vector.load %arg11[%c6_40, %c0_41] : memref<16x32xf32, #tpu.memory_space<vmem>>, vector<1x32xf32>
    tpu.vector_store %arg11[%c6_40, %c0_41], %40 {strides = array<i32>} : memref<16x32xf32, #tpu.memory_space<vmem>>, vector<1x32xf32>,
    %c0_42 = arith.constant 0 : index
    %c7 = arith.constant 7 : index
    %42 = memref.load %arg0[%c0_42, %c7] : memref<2x8xi32, #tpu.memory_space<smem>>
    %43 = arith.index_cast %42 : i32 to index
    %c0_43 = arith.constant 0 : index
    %44 = vector.load %arg2[%43, %c0_43] : memref<100x32xf32, #tpu.memory_space<vmem>>, vector<1x32xf32>
    %c7_44 = arith.constant 7 : index
    %c0_45 = arith.constant 0 : index
    %45 = vector.load %arg3[%c7_44, %c0_45] : memref<8x32xf32, #tpu.memory_space<vmem>>, vector<1x32xf32>
    %46 = arith.addf %44, %45 : vector<1x32xf32>
    %c7_46 = arith.constant 7 : index
    %c0_47 = arith.constant 0 : index
    %47 = vector.load %arg11[%c7_46, %c0_47] : memref<16x32xf32, #tpu.memory_space<vmem>>, vector<1x32xf32>
    tpu.vector_store %arg11[%c7_46, %c0_47], %46 {strides = array<i32>} : memref<16x32xf32, #tpu.memory_space<vmem>>, vector<1x32xf32>,
    %c1_48 = arith.constant 1 : index
    %c0_49 = arith.constant 0 : index
    %48 = memref.load %arg0[%c1_48, %c0_49] : memref<2x8xi32, #tpu.memory_space<smem>>
    %49 = arith.index_cast %48 : i32 to index
    %c0_50 = arith.constant 0 : index
    %50 = vector.load %arg2[%49, %c0_50] : memref<100x32xf32, #tpu.memory_space<vmem>>, vector<1x32xf32>
    %c0_51 = arith.constant 0 : index
    %c0_52 = arith.constant 0 : index
    %51 = vector.load %arg3[%c0_51, %c0_52] : memref<8x32xf32, #tpu.memory_space<vmem>>, vector<1x32xf32>
    %52 = arith.addf %50, %51 : vector<1x32xf32>
    %c8 = arith.constant 8 : index
    %c0_53 = arith.constant 0 : index
    %53 = vector.load %arg11[%c8, %c0_53] : memref<16x32xf32, #tpu.memory_space<vmem>>, vector<1x32xf32>
    tpu.vector_store %arg11[%c8, %c0_53], %52 {strides = array<i32>} : memref<16x32xf32, #tpu.memory_space<vmem>>, vector<1x32xf32>,
    %c1_54 = arith.constant 1 : index
    %c1_55 = arith.constant 1 : index
    %54 = memref.load %arg0[%c1_54, %c1_55] : memref<2x8xi32, #tpu.memory_space<smem>>
    %55 = arith.index_cast %54 : i32 to index
    %c0_56 = arith.constant 0 : index
    %56 = vector.load %arg2[%55, %c0_56] : memref<100x32xf32, #tpu.memory_space<vmem>>, vector<1x32xf32>
    %c1_57 = arith.constant 1 : index
    %c0_58 = arith.constant 0 : index
    %57 = vector.load %arg3[%c1_57, %c0_58] : memref<8x32xf32, #tpu.memory_space<vmem>>, vector<1x32xf32>
    %58 = arith.addf %56, %57 : vector<1x32xf32>
    %c9 = arith.constant 9 : index
    %c0_59 = arith.constant 0 : index
    %59 = vector.load %arg11[%c9, %c0_59] : memref<16x32xf32, #tpu.memory_space<vmem>>, vector<1x32xf32>
    tpu.vector_store %arg11[%c9, %c0_59], %58 {strides = array<i32>} : memref<16x32xf32, #tpu.memory_space<vmem>>, vector<1x32xf32>,
    %c1_60 = arith.constant 1 : index
    %c2_61 = arith.constant 2 : index
    %60 = memref.load %arg0[%c1_60, %c2_61] : memref<2x8xi32, #tpu.memory_space<smem>>
    %61 = arith.index_cast %60 : i32 to index
    %c0_62 = arith.constant 0 : index
    %62 = vector.load %arg2[%61, %c0_62] : memref<100x32xf32, #tpu.memory_space<vmem>>, vector<1x32xf32>
    %c2_63 = arith.constant 2 : index
    %c0_64 = arith.constant 0 : index
    %63 = vector.load %arg3[%c2_63, %c0_64] : memref<8x32xf32, #tpu.memory_space<vmem>>, vector<1x32xf32>
    %64 = arith.addf %62, %63 : vector<1x32xf32>
    %c10 = arith.constant 10 : index
    %c0_65 = arith.constant 0 : index
    %65 = vector.load %arg11[%c10, %c0_65] : memref<16x32xf32, #tpu.memory_space<vmem>>, vector<1x32xf32>
    tpu.vector_store %arg11[%c10, %c0_65], %64 {strides = array<i32>} : memref<16x32xf32, #tpu.memory_space<vmem>>, vector<1x32xf32>,
    %c1_66 = arith.constant 1 : index
    %c3_67 = arith.constant 3 : index
    %66 = memref.load %arg0[%c1_66, %c3_67] : memref<2x8xi32, #tpu.memory_space<smem>>
    %67 = arith.index_cast %66 : i32 to index
    %c0_68 = arith.constant 0 : index
    %68 = vector.load %arg2[%67, %c0_68] : memref<100x32xf32, #tpu.memory_space<vmem>>, vector<1x32xf32>
    %c3_69 = arith.constant 3 : index
    %c0_70 = arith.constant 0 : index
    %69 = vector.load %arg3[%c3_69, %c0_70] : memref<8x32xf32, #tpu.memory_space<vmem>>, vector<1x32xf32>
    %70 = arith.addf %68, %69 : vector<1x32xf32>
    %c11 = arith.constant 11 : index
    %c0_71 = arith.constant 0 : index
    %71 = vector.load %arg11[%c11, %c0_71] : memref<16x32xf32, #tpu.memory_space<vmem>>, vector<1x32xf32>
    tpu.vector_store %arg11[%c11, %c0_71], %70 {strides = array<i32>} : memref<16x32xf32, #tpu.memory_space<vmem>>, vector<1x32xf32>,
    %c1_72 = arith.constant 1 : index
    %c4_73 = arith.constant 4 : index
    %72 = memref.load %arg0[%c1_72, %c4_73] : memref<2x8xi32, #tpu.memory_space<smem>>
    %73 = arith.index_cast %72 : i32 to index
    %c0_74 = arith.constant 0 : index
    %74 = vector.load %arg2[%73, %c0_74] : memref<100x32xf32, #tpu.memory_space<vmem>>, vector<1x32xf32>
    %c4_75 = arith.constant 4 : index
    %c0_76 = arith.constant 0 : index
    %75 = vector.load %arg3[%c4_75, %c0_76] : memref<8x32xf32, #tpu.memory_space<vmem>>, vector<1x32xf32>
    %76 = arith.addf %74, %75 : vector<1x32xf32>
    %c12 = arith.constant 12 : index
    %c0_77 = arith.constant 0 : index
    %77 = vector.load %arg11[%c12, %c0_77] : memref<16x32xf32, #tpu.memory_space<vmem>>, vector<1x32xf32>
    tpu.vector_store %arg11[%c12, %c0_77], %76 {strides = array<i32>} : memref<16x32xf32, #tpu.memory_space<vmem>>, vector<1x32xf32>,
    %c1_78 = arith.constant 1 : index
    %c5_79 = arith.constant 5 : index
    %78 = memref.load %arg0[%c1_78, %c5_79] : memref<2x8xi32, #tpu.memory_space<smem>>
    %79 = arith.index_cast %78 : i32 to index
    %c0_80 = arith.constant 0 : index
    %80 = vector.load %arg2[%79, %c0_80] : memref<100x32xf32, #tpu.memory_space<vmem>>, vector<1x32xf32>
    %c5_81 = arith.constant 5 : index
    %c0_82 = arith.constant 0 : index
    %81 = vector.load %arg3[%c5_81, %c0_82] : memref<8x32xf32, #tpu.memory_space<vmem>>, vector<1x32xf32>
    %82 = arith.addf %80, %81 : vector<1x32xf32>
    %c13 = arith.constant 13 : index
    %c0_83 = arith.constant 0 : index
    %83 = vector.load %arg11[%c13, %c0_83] : memref<16x32xf32, #tpu.memory_space<vmem>>, vector<1x32xf32>
    tpu.vector_store %arg11[%c13, %c0_83], %82 {strides = array<i32>} : memref<16x32xf32, #tpu.memory_space<vmem>>, vector<1x32xf32>,
    %c1_84 = arith.constant 1 : index
    %c6_85 = arith.constant 6 : index
    %84 = memref.load %arg0[%c1_84, %c6_85] : memref<2x8xi32, #tpu.memory_space<smem>>
    %85 = arith.index_cast %84 : i32 to index
    %c0_86 = arith.constant 0 : index
    %86 = vector.load %arg2[%85, %c0_86] : memref<100x32xf32, #tpu.memory_space<vmem>>, vector<1x32xf32>
    %c6_87 = arith.constant 6 : index
    %c0_88 = arith.constant 0 : index
    %87 = vector.load %arg3[%c6_87, %c0_88] : memref<8x32xf32, #tpu.memory_space<vmem>>, vector<1x32xf32>
    %88 = arith.addf %86, %87 : vector<1x32xf32>
    %c14 = arith.constant 14 : index
    %c0_89 = arith.constant 0 : index
    %89 = vector.load %arg11[%c14, %c0_89] : memref<16x32xf32, #tpu.memory_space<vmem>>, vector<1x32xf32>
    tpu.vector_store %arg11[%c14, %c0_89], %88 {strides = array<i32>} : memref<16x32xf32, #tpu.memory_space<vmem>>, vector<1x32xf32>,
    %c1_90 = arith.constant 1 : index
    %c7_91 = arith.constant 7 : index
    %90 = memref.load %arg0[%c1_90, %c7_91] : memref<2x8xi32, #tpu.memory_space<smem>>
    %91 = arith.index_cast %90 : i32 to index
    %c0_92 = arith.constant 0 : index
    %92 = vector.load %arg2[%91, %c0_92] : memref<100x32xf32, #tpu.memory_space<vmem>>, vector<1x32xf32>
    %c7_93 = arith.constant 7 : index
    %c0_94 = arith.constant 0 : index
    %93 = vector.load %arg3[%c7_93, %c0_94] : memref<8x32xf32, #tpu.memory_space<vmem>>, vector<1x32xf32>
    %94 = arith.addf %92, %93 : vector<1x32xf32>
    %c15 = arith.constant 15 : index
    %c0_95 = arith.constant 0 : index
    %95 = vector.load %arg11[%c15, %c0_95] : memref<16x32xf32, #tpu.memory_space<vmem>>, vector<1x32xf32>
    tpu.vector_store %arg11[%c15, %c0_95], %94 {strides = array<i32>} : memref<16x32xf32, #tpu.memory_space<vmem>>, vector<1x32xf32>,
    %c0_96 = arith.constant 0 : index
    %c0_97 = arith.constant 0 : index
    %96 = vector.load %arg11[%c0_96, %c0_97] : memref<16x32xf32, #tpu.memory_space<vmem>>, vector<16x32xf32>
    %c0_98 = arith.constant 0 : index
    %c0_99 = arith.constant 0 : index
    %97 = vector.load %arg9[%c0_98, %c0_99] : memref<21x96xf32, #tpu.memory_space<vmem>>, vector<1x32xf32>
    %c1_100 = arith.constant 1 : index
    %c0_101 = arith.constant 0 : index
    %98 = vector.load %arg9[%c1_100, %c0_101] : memref<21x96xf32, #tpu.memory_space<vmem>>, vector<1x32xf32>
    %cst = arith.constant dense<0.000000e+00> : vector<16xf32>
    %99 = vector.multi_reduction <add>, %96, %cst [1] : vector<16x32xf32> to vector<16xf32>
    %100 = vector.shape_cast %99 : vector<16xf32> to vector<16x1xf32>
    %cst_102 = arith.constant 3.200000e+01 : f32
    %101 = vector.broadcast %cst_102 : f32 to vector<16x1xf32>
    %102 = arith.divf %100, %101 : vector<16x1xf32>
    %103 = vector.broadcast %102 : vector<16x1xf32> to vector<16x32xf32>
    %104 = arith.subf %96, %103 : vector<16x32xf32>
    %105 = vector.broadcast %102 : vector<16x1xf32> to vector<16x32xf32>
    %106 = arith.subf %96, %105 : vector<16x32xf32>
    %107 = arith.mulf %104, %106 : vector<16x32xf32>
    %cst_103 = arith.constant dense<0.000000e+00> : vector<16xf32>
    %108 = vector.multi_reduction <add>, %107, %cst_103 [1] : vector<16x32xf32> to vector<16xf32>
    %109 = vector.shape_cast %108 : vector<16xf32> to vector<16x1xf32>
    %cst_104 = arith.constant 3.200000e+01 : f32
    %110 = vector.broadcast %cst_104 : f32 to vector<16x1xf32>
    %111 = arith.divf %109, %110 : vector<16x1xf32>
    %112 = vector.broadcast %102 : vector<16x1xf32> to vector<16x32xf32>
    %113 = arith.subf %96, %112 : vector<16x32xf32>
    %cst_105 = arith.constant 9.99999996E-13 : f32
    %114 = vector.broadcast %cst_105 : f32 to vector<16x1xf32>
    %115 = arith.addf %111, %114 : vector<16x1xf32>
    %116 = math.rsqrt %115 : vector<16x1xf32>
    %117 = vector.broadcast %116 : vector<16x1xf32> to vector<16x32xf32>
    %118 = arith.mulf %113, %117 : vector<16x32xf32>
    %119 = vector.broadcast %97 : vector<1x32xf32> to vector<16x32xf32>
    %120 = arith.mulf %118, %119 : vector<16x32xf32>
    %121 = vector.broadcast %98 : vector<1x32xf32> to vector<16x32xf32>
    %122 = arith.addf %120, %121 : vector<16x32xf32>
    %c0_106 = arith.constant 0 : index
    %c0_107 = arith.constant 0 : index
    %c0_108 = arith.constant 0 : index
    %123 = vector.load %arg4[%c0_106, %c0_107, %c0_108] : memref<2x32x96xbf16, #tpu.memory_space<vmem>>, vector<1x32x96xbf16>
    %124 = vector.shape_cast %123 : vector<1x32x96xbf16> to vector<32x96xbf16>
    %125 = arith.truncf %122 : vector<16x32xf32> to vector<16x32xbf16>
    %cst_109 = arith.constant dense<0.000000e+00> : vector<16x96xf32>
    %126 = tpu.matmul %125, %124, %cst_109 {dimension_numbers = #tpu.dot_dimension_numbers<[1], [0], [0], [1], [0, 0, 1, 1], [], []>} : vector<16x32xbf16>, vector<32x96xbf16>, vector<16x96xf32> -> vector<16x96xf32>
    %c2_110 = arith.constant 2 : index
    %c0_111 = arith.constant 0 : index
    %127 = vector.load %arg9[%c2_110, %c0_111] : memref<21x96xf32, #tpu.memory_space<vmem>>, vector<1x96xf32>
    %128 = vector.broadcast %127 : vector<1x96xf32> to vector<16x96xf32>
    %129 = arith.addf %126, %128 : vector<16x96xf32>
    %c0_112 = arith.constant 0 : index
    %c0_113 = arith.constant 0 : index
    %130 = vector.load %arg1[%c0_112, %c0_113] : memref<2x8xf32, #tpu.memory_space<vmem>>, vector<1x8xf32>
    %cst_114 = arith.constant 1.000000e+00 : f32
    %131 = vector.broadcast %cst_114 : f32 to vector<1x8xf32>
    %132 = arith.subf %131, %130 : vector<1x8xf32>
    %cst_115 = arith.constant -1.000000e+04 : f32
    %133 = vector.broadcast %cst_115 : f32 to vector<1x8xf32>
    %134 = arith.mulf %132, %133 : vector<1x8xf32>
    %135 = vector.extract_strided_slice %129 {offsets = [0, 0], sizes = [8, 8], strides = [1, 1]} : vector<16x96xf32> to vector<8x8xf32>
    %136 = vector.extract_strided_slice %129 {offsets = [0, 32], sizes = [8, 8], strides = [1, 1]} : vector<16x96xf32> to vector<8x8xf32>
    %137 = vector.extract_strided_slice %129 {offsets = [0, 64], sizes = [8, 8], strides = [1, 1]} : vector<16x96xf32> to vector<8x8xf32>
    %cst_116 = arith.constant dense<0.000000e+00> : vector<8x8xf32>
    %138 = tpu.matmul %135, %136, %cst_116 {dimension_numbers = #tpu.dot_dimension_numbers<[1], [1], [0], [0], [0, 0, 1, 0], [], []>} : vector<8x8xf32>, vector<8x8xf32>, vector<8x8xf32> -> vector<8x8xf32>
    %cst_117 = arith.constant 0.353553385 : f32
    %139 = vector.broadcast %cst_117 : f32 to vector<8x8xf32>
    %140 = arith.mulf %138, %139 : vector<8x8xf32>
    %141 = vector.broadcast %134 : vector<1x8xf32> to vector<8x8xf32>
    %142 = arith.addf %140, %141 : vector<8x8xf32>
    %cst_118 = arith.constant dense<0xFF800000> : vector<8xf32>
    %143 = vector.multi_reduction <maximumf>, %142, %cst_118 [1] : vector<8x8xf32> to vector<8xf32>
    %144 = vector.shape_cast %143 : vector<8xf32> to vector<8x1xf32>
    %145 = vector.broadcast %144 : vector<8x1xf32> to vector<8x8xf32>
    %146 = arith.subf %142, %145 : vector<8x8xf32>
    %147 = math.exp %146 : vector<8x8xf32>
    %cst_119 = arith.constant dense<0.000000e+00> : vector<8xf32>
    %148 = vector.multi_reduction <add>, %147, %cst_119 [1] : vector<8x8xf32> to vector<8xf32>
    %149 = vector.shape_cast %148 : vector<8xf32> to vector<8x1xf32>
    %150 = tpu.reciprocal %149 {approx = true} : vector<8x1xf32> -> vector<8x1xf32>
    %151 = vector.broadcast %150 : vector<8x1xf32> to vector<8x8xf32>
    %152 = arith.mulf %147, %151 : vector<8x8xf32>
    %cst_120 = arith.constant dense<0.000000e+00> : vector<8x8xf32>
    %153 = tpu.matmul %152, %137, %cst_120 {dimension_numbers = #tpu.dot_dimension_numbers<[1], [0], [0], [1], [0, 0, 1, 1], [], []>} : vector<8x8xf32>, vector<8x8xf32>, vector<8x8xf32> -> vector<8x8xf32>
    %c0_121 = arith.constant 0 : index
    %c0_122 = arith.constant 0 : index
    %154 = vector.load %arg12[%c0_121, %c0_122] : memref<16x32xf32, #tpu.memory_space<vmem>>, vector<8x8xf32>
    tpu.vector_store %arg12[%c0_121, %c0_122], %153 {strides = array<i32>} : memref<16x32xf32, #tpu.memory_space<vmem>>, vector<8x8xf32>,
    %155 = vector.extract_strided_slice %129 {offsets = [0, 8], sizes = [8, 8], strides = [1, 1]} : vector<16x96xf32> to vector<8x8xf32>
    %156 = vector.extract_strided_slice %129 {offsets = [0, 40], sizes = [8, 8], strides = [1, 1]} : vector<16x96xf32> to vector<8x8xf32>
    %157 = vector.extract_strided_slice %129 {offsets = [0, 72], sizes = [8, 8], strides = [1, 1]} : vector<16x96xf32> to vector<8x8xf32>
    %cst_123 = arith.constant dense<0.000000e+00> : vector<8x8xf32>
    %158 = tpu.matmul %155, %156, %cst_123 {dimension_numbers = #tpu.dot_dimension_numbers<[1], [1], [0], [0], [0, 0, 1, 0], [], []>} : vector<8x8xf32>, vector<8x8xf32>, vector<8x8xf32> -> vector<8x8xf32>
    %cst_124 = arith.constant 0.353553385 : f32
    %159 = vector.broadcast %cst_124 : f32 to vector<8x8xf32>
    %160 = arith.mulf %158, %159 : vector<8x8xf32>
    %161 = vector.broadcast %134 : vector<1x8xf32> to vector<8x8xf32>
    %162 = arith.addf %160, %161 : vector<8x8xf32>
    %cst_125 = arith.constant dense<0xFF800000> : vector<8xf32>
    %163 = vector.multi_reduction <maximumf>, %162, %cst_125 [1] : vector<8x8xf32> to vector<8xf32>
    %164 = vector.shape_cast %163 : vector<8xf32> to vector<8x1xf32>
    %165 = vector.broadcast %164 : vector<8x1xf32> to vector<8x8xf32>
    %166 = arith.subf %162, %165 : vector<8x8xf32>
    %167 = math.exp %166 : vector<8x8xf32>
    %cst_126 = arith.constant dense<0.000000e+00> : vector<8xf32>
    %168 = vector.multi_reduction <add>, %167, %cst_126 [1] : vector<8x8xf32> to vector<8xf32>
    %169 = vector.shape_cast %168 : vector<8xf32> to vector<8x1xf32>
    %170 = tpu.reciprocal %169 {approx = true} : vector<8x1xf32> -> vector<8x1xf32>
    %171 = vector.broadcast %170 : vector<8x1xf32> to vector<8x8xf32>
    %172 = arith.mulf %167, %171 : vector<8x8xf32>
    %cst_127 = arith.constant dense<0.000000e+00> : vector<8x8xf32>
    %173 = tpu.matmul %172, %157, %cst_127 {dimension_numbers = #tpu.dot_dimension_numbers<[1], [0], [0], [1], [0, 0, 1, 1], [], []>} : vector<8x8xf32>, vector<8x8xf32>, vector<8x8xf32> -> vector<8x8xf32>
    %c0_128 = arith.constant 0 : index
    %c8_129 = arith.constant 8 : index
    %174 = vector.load %arg12[%c0_128, %c8_129] : memref<16x32xf32, #tpu.memory_space<vmem>>, vector<8x8xf32>
    tpu.vector_store %arg12[%c0_128, %c8_129], %173 {strides = array<i32>} : memref<16x32xf32, #tpu.memory_space<vmem>>, vector<8x8xf32>,
    %175 = vector.extract_strided_slice %129 {offsets = [0, 16], sizes = [8, 8], strides = [1, 1]} : vector<16x96xf32> to vector<8x8xf32>
    %176 = vector.extract_strided_slice %129 {offsets = [0, 48], sizes = [8, 8], strides = [1, 1]} : vector<16x96xf32> to vector<8x8xf32>
    %177 = vector.extract_strided_slice %129 {offsets = [0, 80], sizes = [8, 8], strides = [1, 1]} : vector<16x96xf32> to vector<8x8xf32>
    %cst_130 = arith.constant dense<0.000000e+00> : vector<8x8xf32>
    %178 = tpu.matmul %175, %176, %cst_130 {dimension_numbers = #tpu.dot_dimension_numbers<[1], [1], [0], [0], [0, 0, 1, 0], [], []>} : vector<8x8xf32>, vector<8x8xf32>, vector<8x8xf32> -> vector<8x8xf32>
    %cst_131 = arith.constant 0.353553385 : f32
    %179 = vector.broadcast %cst_131 : f32 to vector<8x8xf32>
    %180 = arith.mulf %178, %179 : vector<8x8xf32>
    %181 = vector.broadcast %134 : vector<1x8xf32> to vector<8x8xf32>
    %182 = arith.addf %180, %181 : vector<8x8xf32>
    %cst_132 = arith.constant dense<0xFF800000> : vector<8xf32>
    %183 = vector.multi_reduction <maximumf>, %182, %cst_132 [1] : vector<8x8xf32> to vector<8xf32>
    %184 = vector.shape_cast %183 : vector<8xf32> to vector<8x1xf32>
    %185 = vector.broadcast %184 : vector<8x1xf32> to vector<8x8xf32>
    %186 = arith.subf %182, %185 : vector<8x8xf32>
    %187 = math.exp %186 : vector<8x8xf32>
    %cst_133 = arith.constant dense<0.000000e+00> : vector<8xf32>
    %188 = vector.multi_reduction <add>, %187, %cst_133 [1] : vector<8x8xf32> to vector<8xf32>
    %189 = vector.shape_cast %188 : vector<8xf32> to vector<8x1xf32>
    %190 = tpu.reciprocal %189 {approx = true} : vector<8x1xf32> -> vector<8x1xf32>
    %191 = vector.broadcast %190 : vector<8x1xf32> to vector<8x8xf32>
    %192 = arith.mulf %187, %191 : vector<8x8xf32>
    %cst_134 = arith.constant dense<0.000000e+00> : vector<8x8xf32>
    %193 = tpu.matmul %192, %177, %cst_134 {dimension_numbers = #tpu.dot_dimension_numbers<[1], [0], [0], [1], [0, 0, 1, 1], [], []>} : vector<8x8xf32>, vector<8x8xf32>, vector<8x8xf32> -> vector<8x8xf32>
    %c0_135 = arith.constant 0 : index
    %c16 = arith.constant 16 : index
    %194 = vector.load %arg12[%c0_135, %c16] : memref<16x32xf32, #tpu.memory_space<vmem>>, vector<8x8xf32>
    tpu.vector_store %arg12[%c0_135, %c16], %193 {strides = array<i32>} : memref<16x32xf32, #tpu.memory_space<vmem>>, vector<8x8xf32>,
    %195 = vector.extract_strided_slice %129 {offsets = [0, 24], sizes = [8, 8], strides = [1, 1]} : vector<16x96xf32> to vector<8x8xf32>
    %196 = vector.extract_strided_slice %129 {offsets = [0, 56], sizes = [8, 8], strides = [1, 1]} : vector<16x96xf32> to vector<8x8xf32>
    %197 = vector.extract_strided_slice %129 {offsets = [0, 88], sizes = [8, 8], strides = [1, 1]} : vector<16x96xf32> to vector<8x8xf32>
    %cst_136 = arith.constant dense<0.000000e+00> : vector<8x8xf32>
    %198 = tpu.matmul %195, %196, %cst_136 {dimension_numbers = #tpu.dot_dimension_numbers<[1], [1], [0], [0], [0, 0, 1, 0], [], []>} : vector<8x8xf32>, vector<8x8xf32>, vector<8x8xf32> -> vector<8x8xf32>
    %cst_137 = arith.constant 0.353553385 : f32
    %199 = vector.broadcast %cst_137 : f32 to vector<8x8xf32>
    %200 = arith.mulf %198, %199 : vector<8x8xf32>
    %201 = vector.broadcast %134 : vector<1x8xf32> to vector<8x8xf32>
    %202 = arith.addf %200, %201 : vector<8x8xf32>
    %cst_138 = arith.constant dense<0xFF800000> : vector<8xf32>
    %203 = vector.multi_reduction <maximumf>, %202, %cst_138 [1] : vector<8x8xf32> to vector<8xf32>
    %204 = vector.shape_cast %203 : vector<8xf32> to vector<8x1xf32>
    %205 = vector.broadcast %204 : vector<8x1xf32> to vector<8x8xf32>
    %206 = arith.subf %202, %205 : vector<8x8xf32>
    %207 = math.exp %206 : vector<8x8xf32>
    %cst_139 = arith.constant dense<0.000000e+00> : vector<8xf32>
    %208 = vector.multi_reduction <add>, %207, %cst_139 [1] : vector<8x8xf32> to vector<8xf32>
    %209 = vector.shape_cast %208 : vector<8xf32> to vector<8x1xf32>
    %210 = tpu.reciprocal %209 {approx = true} : vector<8x1xf32> -> vector<8x1xf32>
    %211 = vector.broadcast %210 : vector<8x1xf32> to vector<8x8xf32>
    %212 = arith.mulf %207, %211 : vector<8x8xf32>
    %cst_140 = arith.constant dense<0.000000e+00> : vector<8x8xf32>
    %213 = tpu.matmul %212, %197, %cst_140 {dimension_numbers = #tpu.dot_dimension_numbers<[1], [0], [0], [1], [0, 0, 1, 1], [], []>} : vector<8x8xf32>, vector<8x8xf32>, vector<8x8xf32> -> vector<8x8xf32>
    %c0_141 = arith.constant 0 : index
    %c24 = arith.constant 24 : index
    %214 = vector.load %arg12[%c0_141, %c24] : memref<16x32xf32, #tpu.memory_space<vmem>>, vector<8x8xf32>
    tpu.vector_store %arg12[%c0_141, %c24], %213 {strides = array<i32>} : memref<16x32xf32, #tpu.memory_space<vmem>>, vector<8x8xf32>,
    %c1_142 = arith.constant 1 : index
    %c0_143 = arith.constant 0 : index
    %215 = vector.load %arg1[%c1_142, %c0_143] : memref<2x8xf32, #tpu.memory_space<vmem>>, vector<1x8xf32>
    %cst_144 = arith.constant 1.000000e+00 : f32
    %216 = vector.broadcast %cst_144 : f32 to vector<1x8xf32>
    %217 = arith.subf %216, %215 : vector<1x8xf32>
    %cst_145 = arith.constant -1.000000e+04 : f32
    %218 = vector.broadcast %cst_145 : f32 to vector<1x8xf32>
    %219 = arith.mulf %217, %218 : vector<1x8xf32>
    %220 = vector.extract_strided_slice %129 {offsets = [8, 0], sizes = [8, 8], strides = [1, 1]} : vector<16x96xf32> to vector<8x8xf32>
    %221 = vector.extract_strided_slice %129 {offsets = [8, 32], sizes = [8, 8], strides = [1, 1]} : vector<16x96xf32> to vector<8x8xf32>
    %222 = vector.extract_strided_slice %129 {offsets = [8, 64], sizes = [8, 8], strides = [1, 1]} : vector<16x96xf32> to vector<8x8xf32>
    %cst_146 = arith.constant dense<0.000000e+00> : vector<8x8xf32>
    %223 = tpu.matmul %220, %221, %cst_146 {dimension_numbers = #tpu.dot_dimension_numbers<[1], [1], [0], [0], [0, 0, 1, 0], [], []>} : vector<8x8xf32>, vector<8x8xf32>, vector<8x8xf32> -> vector<8x8xf32>
    %cst_147 = arith.constant 0.353553385 : f32
    %224 = vector.broadcast %cst_147 : f32 to vector<8x8xf32>
    %225 = arith.mulf %223, %224 : vector<8x8xf32>
    %226 = vector.broadcast %219 : vector<1x8xf32> to vector<8x8xf32>
    %227 = arith.addf %225, %226 : vector<8x8xf32>
    %cst_148 = arith.constant dense<0xFF800000> : vector<8xf32>
    %228 = vector.multi_reduction <maximumf>, %227, %cst_148 [1] : vector<8x8xf32> to vector<8xf32>
    %229 = vector.shape_cast %228 : vector<8xf32> to vector<8x1xf32>
    %230 = vector.broadcast %229 : vector<8x1xf32> to vector<8x8xf32>
    %231 = arith.subf %227, %230 : vector<8x8xf32>
    %232 = math.exp %231 : vector<8x8xf32>
    %cst_149 = arith.constant dense<0.000000e+00> : vector<8xf32>
    %233 = vector.multi_reduction <add>, %232, %cst_149 [1] : vector<8x8xf32> to vector<8xf32>
    %234 = vector.shape_cast %233 : vector<8xf32> to vector<8x1xf32>
    %235 = tpu.reciprocal %234 {approx = true} : vector<8x1xf32> -> vector<8x1xf32>
    %236 = vector.broadcast %235 : vector<8x1xf32> to vector<8x8xf32>
    %237 = arith.mulf %232, %236 : vector<8x8xf32>
    %cst_150 = arith.constant dense<0.000000e+00> : vector<8x8xf32>
    %238 = tpu.matmul %237, %222, %cst_150 {dimension_numbers = #tpu.dot_dimension_numbers<[1], [0], [0], [1], [0, 0, 1, 1], [], []>} : vector<8x8xf32>, vector<8x8xf32>, vector<8x8xf32> -> vector<8x8xf32>
    %c8_151 = arith.constant 8 : index
    %c0_152 = arith.constant 0 : index
    %239 = vector.load %arg12[%c8_151, %c0_152] : memref<16x32xf32, #tpu.memory_space<vmem>>, vector<8x8xf32>
    tpu.vector_store %arg12[%c8_151, %c0_152], %238 {strides = array<i32>} : memref<16x32xf32, #tpu.memory_space<vmem>>, vector<8x8xf32>,
    %240 = vector.extract_strided_slice %129 {offsets = [8, 8], sizes = [8, 8], strides = [1, 1]} : vector<16x96xf32> to vector<8x8xf32>
    %241 = vector.extract_strided_slice %129 {offsets = [8, 40], sizes = [8, 8], strides = [1, 1]} : vector<16x96xf32> to vector<8x8xf32>
    %242 = vector.extract_strided_slice %129 {offsets = [8, 72], sizes = [8, 8], strides = [1, 1]} : vector<16x96xf32> to vector<8x8xf32>
    %cst_153 = arith.constant dense<0.000000e+00> : vector<8x8xf32>
    %243 = tpu.matmul %240, %241, %cst_153 {dimension_numbers = #tpu.dot_dimension_numbers<[1], [1], [0], [0], [0, 0, 1, 0], [], []>} : vector<8x8xf32>, vector<8x8xf32>, vector<8x8xf32> -> vector<8x8xf32>
    %cst_154 = arith.constant 0.353553385 : f32
    %244 = vector.broadcast %cst_154 : f32 to vector<8x8xf32>
    %245 = arith.mulf %243, %244 : vector<8x8xf32>
    %246 = vector.broadcast %219 : vector<1x8xf32> to vector<8x8xf32>
    %247 = arith.addf %245, %246 : vector<8x8xf32>
    %cst_155 = arith.constant dense<0xFF800000> : vector<8xf32>
    %248 = vector.multi_reduction <maximumf>, %247, %cst_155 [1] : vector<8x8xf32> to vector<8xf32>
    %249 = vector.shape_cast %248 : vector<8xf32> to vector<8x1xf32>
    %250 = vector.broadcast %249 : vector<8x1xf32> to vector<8x8xf32>
    %251 = arith.subf %247, %250 : vector<8x8xf32>
    %252 = math.exp %251 : vector<8x8xf32>
    %cst_156 = arith.constant dense<0.000000e+00> : vector<8xf32>
    %253 = vector.multi_reduction <add>, %252, %cst_156 [1] : vector<8x8xf32> to vector<8xf32>
    %254 = vector.shape_cast %253 : vector<8xf32> to vector<8x1xf32>
    %255 = tpu.reciprocal %254 {approx = true} : vector<8x1xf32> -> vector<8x1xf32>
    %256 = vector.broadcast %255 : vector<8x1xf32> to vector<8x8xf32>
    %257 = arith.mulf %252, %256 : vector<8x8xf32>
    %cst_157 = arith.constant dense<0.000000e+00> : vector<8x8xf32>
    %258 = tpu.matmul %257, %242, %cst_157 {dimension_numbers = #tpu.dot_dimension_numbers<[1], [0], [0], [1], [0, 0, 1, 1], [], []>} : vector<8x8xf32>, vector<8x8xf32>, vector<8x8xf32> -> vector<8x8xf32>
    %c8_158 = arith.constant 8 : index
    %c8_159 = arith.constant 8 : index
    %259 = vector.load %arg12[%c8_158, %c8_159] : memref<16x32xf32, #tpu.memory_space<vmem>>, vector<8x8xf32>
    tpu.vector_store %arg12[%c8_158, %c8_159], %258 {strides = array<i32>} : memref<16x32xf32, #tpu.memory_space<vmem>>, vector<8x8xf32>,
    %260 = vector.extract_strided_slice %129 {offsets = [8, 16], sizes = [8, 8], strides = [1, 1]} : vector<16x96xf32> to vector<8x8xf32>
    %261 = vector.extract_strided_slice %129 {offsets = [8, 48], sizes = [8, 8], strides = [1, 1]} : vector<16x96xf32> to vector<8x8xf32>
    %262 = vector.extract_strided_slice %129 {offsets = [8, 80], sizes = [8, 8], strides = [1, 1]} : vector<16x96xf32> to vector<8x8xf32>
    %cst_160 = arith.constant dense<0.000000e+00> : vector<8x8xf32>
    %263 = tpu.matmul %260, %261, %cst_160 {dimension_numbers = #tpu.dot_dimension_numbers<[1], [1], [0], [0], [0, 0, 1, 0], [], []>} : vector<8x8xf32>, vector<8x8xf32>, vector<8x8xf32> -> vector<8x8xf32>
    %cst_161 = arith.constant 0.353553385 : f32
    %264 = vector.broadcast %cst_161 : f32 to vector<8x8xf32>
    %265 = arith.mulf %263, %264 : vector<8x8xf32>
    %266 = vector.broadcast %219 : vector<1x8xf32> to vector<8x8xf32>
    %267 = arith.addf %265, %266 : vector<8x8xf32>
    %cst_162 = arith.constant dense<0xFF800000> : vector<8xf32>
    %268 = vector.multi_reduction <maximumf>, %267, %cst_162 [1] : vector<8x8xf32> to vector<8xf32>
    %269 = vector.shape_cast %268 : vector<8xf32> to vector<8x1xf32>
    %270 = vector.broadcast %269 : vector<8x1xf32> to vector<8x8xf32>
    %271 = arith.subf %267, %270 : vector<8x8xf32>
    %272 = math.exp %271 : vector<8x8xf32>
    %cst_163 = arith.constant dense<0.000000e+00> : vector<8xf32>
    %273 = vector.multi_reduction <add>, %272, %cst_163 [1] : vector<8x8xf32> to vector<8xf32>
    %274 = vector.shape_cast %273 : vector<8xf32> to vector<8x1xf32>
    %275 = tpu.reciprocal %274 {approx = true} : vector<8x1xf32> -> vector<8x1xf32>
    %276 = vector.broadcast %275 : vector<8x1xf32> to vector<8x8xf32>
    %277 = arith.mulf %272, %276 : vector<8x8xf32>
    %cst_164 = arith.constant dense<0.000000e+00> : vector<8x8xf32>
    %278 = tpu.matmul %277, %262, %cst_164 {dimension_numbers = #tpu.dot_dimension_numbers<[1], [0], [0], [1], [0, 0, 1, 1], [], []>} : vector<8x8xf32>, vector<8x8xf32>, vector<8x8xf32> -> vector<8x8xf32>
    %c8_165 = arith.constant 8 : index
    %c16_166 = arith.constant 16 : index
    %279 = vector.load %arg12[%c8_165, %c16_166] : memref<16x32xf32, #tpu.memory_space<vmem>>, vector<8x8xf32>
    tpu.vector_store %arg12[%c8_165, %c16_166], %278 {strides = array<i32>} : memref<16x32xf32, #tpu.memory_space<vmem>>, vector<8x8xf32>,
    %280 = vector.extract_strided_slice %129 {offsets = [8, 24], sizes = [8, 8], strides = [1, 1]} : vector<16x96xf32> to vector<8x8xf32>
    %281 = vector.extract_strided_slice %129 {offsets = [8, 56], sizes = [8, 8], strides = [1, 1]} : vector<16x96xf32> to vector<8x8xf32>
    %282 = vector.extract_strided_slice %129 {offsets = [8, 88], sizes = [8, 8], strides = [1, 1]} : vector<16x96xf32> to vector<8x8xf32>
    %cst_167 = arith.constant dense<0.000000e+00> : vector<8x8xf32>
    %283 = tpu.matmul %280, %281, %cst_167 {dimension_numbers = #tpu.dot_dimension_numbers<[1], [1], [0], [0], [0, 0, 1, 0], [], []>} : vector<8x8xf32>, vector<8x8xf32>, vector<8x8xf32> -> vector<8x8xf32>
    %cst_168 = arith.constant 0.353553385 : f32
    %284 = vector.broadcast %cst_168 : f32 to vector<8x8xf32>
    %285 = arith.mulf %283, %284 : vector<8x8xf32>
    %286 = vector.broadcast %219 : vector<1x8xf32> to vector<8x8xf32>
    %287 = arith.addf %285, %286 : vector<8x8xf32>
    %cst_169 = arith.constant dense<0xFF800000> : vector<8xf32>
    %288 = vector.multi_reduction <maximumf>, %287, %cst_169 [1] : vector<8x8xf32> to vector<8xf32>
    %289 = vector.shape_cast %288 : vector<8xf32> to vector<8x1xf32>
    %290 = vector.broadcast %289 : vector<8x1xf32> to vector<8x8xf32>
    %291 = arith.subf %287, %290 : vector<8x8xf32>
    %292 = math.exp %291 : vector<8x8xf32>
    %cst_170 = arith.constant dense<0.000000e+00> : vector<8xf32>
    %293 = vector.multi_reduction <add>, %292, %cst_170 [1] : vector<8x8xf32> to vector<8xf32>
    %294 = vector.shape_cast %293 : vector<8xf32> to vector<8x1xf32>
    %295 = tpu.reciprocal %294 {approx = true} : vector<8x1xf32> -> vector<8x1xf32>
    %296 = vector.broadcast %295 : vector<8x1xf32> to vector<8x8xf32>
    %297 = arith.mulf %292, %296 : vector<8x8xf32>
    %cst_171 = arith.constant dense<0.000000e+00> : vector<8x8xf32>
    %298 = tpu.matmul %297, %282, %cst_171 {dimension_numbers = #tpu.dot_dimension_numbers<[1], [0], [0], [1], [0, 0, 1, 1], [], []>} : vector<8x8xf32>, vector<8x8xf32>, vector<8x8xf32> -> vector<8x8xf32>
    %c8_172 = arith.constant 8 : index
    %c24_173 = arith.constant 24 : index
    %299 = vector.load %arg12[%c8_172, %c24_173] : memref<16x32xf32, #tpu.memory_space<vmem>>, vector<8x8xf32>
    tpu.vector_store %arg12[%c8_172, %c24_173], %298 {strides = array<i32>} : memref<16x32xf32, #tpu.memory_space<vmem>>, vector<8x8xf32>,
    %c0_174 = arith.constant 0 : index
    %c0_175 = arith.constant 0 : index
    %300 = vector.load %arg12[%c0_174, %c0_175] : memref<16x32xf32, #tpu.memory_space<vmem>>, vector<16x32xf32>
    %c0_176 = arith.constant 0 : index
    %c0_177 = arith.constant 0 : index
    %c0_178 = arith.constant 0 : index
    %301 = vector.load %arg5[%c0_176, %c0_177, %c0_178] : memref<2x32x32xbf16, #tpu.memory_space<vmem>>, vector<1x32x32xbf16>
    %302 = vector.shape_cast %301 : vector<1x32x32xbf16> to vector<32x32xbf16>
    %303 = arith.truncf %300 : vector<16x32xf32> to vector<16x32xbf16>
    %cst_179 = arith.constant dense<0.000000e+00> : vector<16x32xf32>
    %304 = tpu.matmul %303, %302, %cst_179 {dimension_numbers = #tpu.dot_dimension_numbers<[1], [0], [0], [1], [0, 0, 1, 1], [], []>} : vector<16x32xbf16>, vector<32x32xbf16>, vector<16x32xf32> -> vector<16x32xf32>
    %c3_180 = arith.constant 3 : index
    %c0_181 = arith.constant 0 : index
    %305 = vector.load %arg9[%c3_180, %c0_181] : memref<21x96xf32, #tpu.memory_space<vmem>>, vector<1x32xf32>
    %306 = vector.broadcast %305 : vector<1x32xf32> to vector<16x32xf32>
    %307 = arith.addf %304, %306 : vector<16x32xf32>
    %308 = arith.addf %122, %307 : vector<16x32xf32>
    %c4_182 = arith.constant 4 : index
    %c0_183 = arith.constant 0 : index
    %309 = vector.load %arg9[%c4_182, %c0_183] : memref<21x96xf32, #tpu.memory_space<vmem>>, vector<1x32xf32>
    %c5_184 = arith.constant 5 : index
    %c0_185 = arith.constant 0 : index
    %310 = vector.load %arg9[%c5_184, %c0_185] : memref<21x96xf32, #tpu.memory_space<vmem>>, vector<1x32xf32>
    %cst_186 = arith.constant dense<0.000000e+00> : vector<16xf32>
    %311 = vector.multi_reduction <add>, %308, %cst_186 [1] : vector<16x32xf32> to vector<16xf32>
    %312 = vector.shape_cast %311 : vector<16xf32> to vector<16x1xf32>
    %cst_187 = arith.constant 3.200000e+01 : f32
    %313 = vector.broadcast %cst_187 : f32 to vector<16x1xf32>
    %314 = arith.divf %312, %313 : vector<16x1xf32>
    %315 = vector.broadcast %314 : vector<16x1xf32> to vector<16x32xf32>
    %316 = arith.subf %308, %315 : vector<16x32xf32>
    %317 = vector.broadcast %314 : vector<16x1xf32> to vector<16x32xf32>
    %318 = arith.subf %308, %317 : vector<16x32xf32>
    %319 = arith.mulf %316, %318 : vector<16x32xf32>
    %cst_188 = arith.constant dense<0.000000e+00> : vector<16xf32>
    %320 = vector.multi_reduction <add>, %319, %cst_188 [1] : vector<16x32xf32> to vector<16xf32>
    %321 = vector.shape_cast %320 : vector<16xf32> to vector<16x1xf32>
    %cst_189 = arith.constant 3.200000e+01 : f32
    %322 = vector.broadcast %cst_189 : f32 to vector<16x1xf32>
    %323 = arith.divf %321, %322 : vector<16x1xf32>
    %324 = vector.broadcast %314 : vector<16x1xf32> to vector<16x32xf32>
    %325 = arith.subf %308, %324 : vector<16x32xf32>
    %cst_190 = arith.constant 9.99999996E-13 : f32
    %326 = vector.broadcast %cst_190 : f32 to vector<16x1xf32>
    %327 = arith.addf %323, %326 : vector<16x1xf32>
    %328 = math.rsqrt %327 : vector<16x1xf32>
    %329 = vector.broadcast %328 : vector<16x1xf32> to vector<16x32xf32>
    %330 = arith.mulf %325, %329 : vector<16x32xf32>
    %331 = vector.broadcast %309 : vector<1x32xf32> to vector<16x32xf32>
    %332 = arith.mulf %330, %331 : vector<16x32xf32>
    %333 = vector.broadcast %310 : vector<1x32xf32> to vector<16x32xf32>
    %334 = arith.addf %332, %333 : vector<16x32xf32>
    %c0_191 = arith.constant 0 : index
    %c0_192 = arith.constant 0 : index
    %c0_193 = arith.constant 0 : index
    %335 = vector.load %arg6[%c0_191, %c0_192, %c0_193] : memref<2x32x64xbf16, #tpu.memory_space<vmem>>, vector<1x32x64xbf16>
    %336 = vector.shape_cast %335 : vector<1x32x64xbf16> to vector<32x64xbf16>
    %337 = arith.truncf %334 : vector<16x32xf32> to vector<16x32xbf16>
    %cst_194 = arith.constant dense<0.000000e+00> : vector<16x64xf32>
    %338 = tpu.matmul %337, %336, %cst_194 {dimension_numbers = #tpu.dot_dimension_numbers<[1], [0], [0], [1], [0, 0, 1, 1], [], []>} : vector<16x32xbf16>, vector<32x64xbf16>, vector<16x64xf32> -> vector<16x64xf32>
    %c6_195 = arith.constant 6 : index
    %c0_196 = arith.constant 0 : index
    %339 = vector.load %arg9[%c6_195, %c0_196] : memref<21x96xf32, #tpu.memory_space<vmem>>, vector<1x64xf32>
    %340 = vector.broadcast %339 : vector<1x64xf32> to vector<16x64xf32>
    %341 = arith.addf %338, %340 : vector<16x64xf32>
    %cst_197 = arith.constant 5.000000e-01 : f32
    %342 = vector.broadcast %cst_197 : f32 to vector<16x64xf32>
    %343 = arith.mulf %342, %341 : vector<16x64xf32>
    %cst_198 = arith.constant 0.707106769 : f32
    %344 = vector.broadcast %cst_198 : f32 to vector<16x64xf32>
    %345 = arith.mulf %341, %344 : vector<16x64xf32>
    %cst_199 = arith.constant 0.000000e+00 : f32
    %346 = vector.broadcast %cst_199 : f32 to vector<16x64xf32>
    %347 = arith.cmpf oge, %345, %346 : vector<16x64xf32>
    %cst_200 = arith.constant 1.000000e+00 : f32
    %cst_201 = arith.constant -1.000000e+00 : f32
    %348 = vector.broadcast %cst_200 : f32 to vector<16x64xf32>
    %349 = vector.broadcast %cst_201 : f32 to vector<16x64xf32>
    %350 = arith.select %347, %348, %349 : vector<16x64xi1>, vector<16x64xf32>
    %351 = math.absf %345 : vector<16x64xf32>
    %cst_202 = arith.constant 0.327591091 : f32
    %352 = vector.broadcast %cst_202 : f32 to vector<16x64xf32>
    %353 = arith.mulf %352, %351 : vector<16x64xf32>
    %cst_203 = arith.constant 1.000000e+00 : f32
    %354 = vector.broadcast %cst_203 : f32 to vector<16x64xf32>
    %355 = arith.addf %354, %353 : vector<16x64xf32>
    %cst_204 = arith.constant 1.000000e+00 : f32
    %356 = vector.broadcast %cst_204 : f32 to vector<16x64xf32>
    %357 = arith.divf %356, %355 : vector<16x64xf32>
    %cst_205 = arith.constant 1.06140542 : f32
    %358 = vector.broadcast %cst_205 : f32 to vector<16x64xf32>
    %359 = arith.mulf %358, %357 : vector<16x64xf32>
    %cst_206 = arith.constant -1.45315206 : f32
    %360 = vector.broadcast %cst_206 : f32 to vector<16x64xf32>
    %361 = arith.addf %359, %360 : vector<16x64xf32>
    %362 = arith.mulf %361, %357 : vector<16x64xf32>
    %cst_207 = arith.constant 1.42141378 : f32
    %363 = vector.broadcast %cst_207 : f32 to vector<16x64xf32>
    %364 = arith.addf %362, %363 : vector<16x64xf32>
    %365 = arith.mulf %364, %357 : vector<16x64xf32>
    %cst_208 = arith.constant -0.284496725 : f32
    %366 = vector.broadcast %cst_208 : f32 to vector<16x64xf32>
    %367 = arith.addf %365, %366 : vector<16x64xf32>
    %368 = arith.mulf %367, %357 : vector<16x64xf32>
    %cst_209 = arith.constant 0.254829586 : f32
    %369 = vector.broadcast %cst_209 : f32 to vector<16x64xf32>
    %370 = arith.addf %368, %369 : vector<16x64xf32>
    %371 = arith.mulf %370, %357 : vector<16x64xf32>
    %cst_210 = arith.constant 0.000000e+00 : f32
    %372 = vector.broadcast %cst_210 : f32 to vector<16x64xf32>
    %373 = arith.subf %372, %351 : vector<16x64xf32>
    %374 = arith.mulf %373, %351 : vector<16x64xf32>
    %375 = math.exp %374 : vector<16x64xf32>
    %376 = arith.mulf %371, %375 : vector<16x64xf32>
    %cst_211 = arith.constant 1.000000e+00 : f32
    %377 = vector.broadcast %cst_211 : f32 to vector<16x64xf32>
    %378 = arith.subf %377, %376 : vector<16x64xf32>
    %379 = arith.mulf %350, %378 : vector<16x64xf32>
    %cst_212 = arith.constant 1.000000e+00 : f32
    %380 = vector.broadcast %cst_212 : f32 to vector<16x64xf32>
    %381 = arith.addf %380, %379 : vector<16x64xf32>
    %382 = arith.mulf %343, %381 : vector<16x64xf32>
    %c0_213 = arith.constant 0 : index
    %c0_214 = arith.constant 0 : index
    %c0_215 = arith.constant 0 : index
    %383 = vector.load %arg7[%c0_213, %c0_214, %c0_215] : memref<2x64x32xbf16, #tpu.memory_space<vmem>>, vector<1x64x32xbf16>
    %384 = vector.shape_cast %383 : vector<1x64x32xbf16> to vector<64x32xbf16>
    %385 = arith.truncf %382 : vector<16x64xf32> to vector<16x64xbf16>
    %cst_216 = arith.constant dense<0.000000e+00> : vector<16x32xf32>
    %386 = tpu.matmul %385, %384, %cst_216 {dimension_numbers = #tpu.dot_dimension_numbers<[1], [0], [0], [1], [0, 0, 1, 1], [], []>} : vector<16x64xbf16>, vector<64x32xbf16>, vector<16x32xf32> -> vector<16x32xf32>
    %c7_217 = arith.constant 7 : index
    %c0_218 = arith.constant 0 : index
    %387 = vector.load %arg9[%c7_217, %c0_218] : memref<21x96xf32, #tpu.memory_space<vmem>>, vector<1x32xf32>
    %388 = vector.broadcast %387 : vector<1x32xf32> to vector<16x32xf32>
    %389 = arith.addf %386, %388 : vector<16x32xf32>
    %390 = arith.addf %334, %389 : vector<16x32xf32>
    %c8_219 = arith.constant 8 : index
    %c0_220 = arith.constant 0 : index
    %391 = vector.load %arg9[%c8_219, %c0_220] : memref<21x96xf32, #tpu.memory_space<vmem>>, vector<1x32xf32>
    %c9_221 = arith.constant 9 : index
    %c0_222 = arith.constant 0 : index
    %392 = vector.load %arg9[%c9_221, %c0_222] : memref<21x96xf32, #tpu.memory_space<vmem>>, vector<1x32xf32>
    %cst_223 = arith.constant dense<0.000000e+00> : vector<16xf32>
    %393 = vector.multi_reduction <add>, %390, %cst_223 [1] : vector<16x32xf32> to vector<16xf32>
    %394 = vector.shape_cast %393 : vector<16xf32> to vector<16x1xf32>
    %cst_224 = arith.constant 3.200000e+01 : f32
    %395 = vector.broadcast %cst_224 : f32 to vector<16x1xf32>
    %396 = arith.divf %394, %395 : vector<16x1xf32>
    %397 = vector.broadcast %396 : vector<16x1xf32> to vector<16x32xf32>
    %398 = arith.subf %390, %397 : vector<16x32xf32>
    %399 = vector.broadcast %396 : vector<16x1xf32> to vector<16x32xf32>
    %400 = arith.subf %390, %399 : vector<16x32xf32>
    %401 = arith.mulf %398, %400 : vector<16x32xf32>
    %cst_225 = arith.constant dense<0.000000e+00> : vector<16xf32>
    %402 = vector.multi_reduction <add>, %401, %cst_225 [1] : vector<16x32xf32> to vector<16xf32>
    %403 = vector.shape_cast %402 : vector<16xf32> to vector<16x1xf32>
    %cst_226 = arith.constant 3.200000e+01 : f32
    %404 = vector.broadcast %cst_226 : f32 to vector<16x1xf32>
    %405 = arith.divf %403, %404 : vector<16x1xf32>
    %406 = vector.broadcast %396 : vector<16x1xf32> to vector<16x32xf32>
    %407 = arith.subf %390, %406 : vector<16x32xf32>
    %cst_227 = arith.constant 9.99999996E-13 : f32
    %408 = vector.broadcast %cst_227 : f32 to vector<16x1xf32>
    %409 = arith.addf %405, %408 : vector<16x1xf32>
    %410 = math.rsqrt %409 : vector<16x1xf32>
    %411 = vector.broadcast %410 : vector<16x1xf32> to vector<16x32xf32>
    %412 = arith.mulf %407, %411 : vector<16x32xf32>
    %413 = vector.broadcast %391 : vector<1x32xf32> to vector<16x32xf32>
    %414 = arith.mulf %412, %413 : vector<16x32xf32>
    %415 = vector.broadcast %392 : vector<1x32xf32> to vector<16x32xf32>
    %416 = arith.addf %414, %415 : vector<16x32xf32>
    %c1_228 = arith.constant 1 : index
    %c0_229 = arith.constant 0 : index
    %c0_230 = arith.constant 0 : index
    %417 = vector.load %arg4[%c1_228, %c0_229, %c0_230] : memref<2x32x96xbf16, #tpu.memory_space<vmem>>, vector<1x32x96xbf16>
    %418 = vector.shape_cast %417 : vector<1x32x96xbf16> to vector<32x96xbf16>
    %419 = arith.truncf %416 : vector<16x32xf32> to vector<16x32xbf16>
    %cst_231 = arith.constant dense<0.000000e+00> : vector<16x96xf32>
    %420 = tpu.matmul %419, %418, %cst_231 {dimension_numbers = #tpu.dot_dimension_numbers<[1], [0], [0], [1], [0, 0, 1, 1], [], []>} : vector<16x32xbf16>, vector<32x96xbf16>, vector<16x96xf32> -> vector<16x96xf32>
    %c10_232 = arith.constant 10 : index
    %c0_233 = arith.constant 0 : index
    %421 = vector.load %arg9[%c10_232, %c0_233] : memref<21x96xf32, #tpu.memory_space<vmem>>, vector<1x96xf32>
    %422 = vector.broadcast %421 : vector<1x96xf32> to vector<16x96xf32>
    %423 = arith.addf %420, %422 : vector<16x96xf32>
    %c0_234 = arith.constant 0 : index
    %c0_235 = arith.constant 0 : index
    %424 = vector.load %arg1[%c0_234, %c0_235] : memref<2x8xf32, #tpu.memory_space<vmem>>, vector<1x8xf32>
    %cst_236 = arith.constant 1.000000e+00 : f32
    %425 = vector.broadcast %cst_236 : f32 to vector<1x8xf32>
    %426 = arith.subf %425, %424 : vector<1x8xf32>
    %cst_237 = arith.constant -1.000000e+04 : f32
    %427 = vector.broadcast %cst_237 : f32 to vector<1x8xf32>
    %428 = arith.mulf %426, %427 : vector<1x8xf32>
    %429 = vector.extract_strided_slice %423 {offsets = [0, 0], sizes = [8, 8], strides = [1, 1]} : vector<16x96xf32> to vector<8x8xf32>
    %430 = vector.extract_strided_slice %423 {offsets = [0, 32], sizes = [8, 8], strides = [1, 1]} : vector<16x96xf32> to vector<8x8xf32>
    %431 = vector.extract_strided_slice %423 {offsets = [0, 64], sizes = [8, 8], strides = [1, 1]} : vector<16x96xf32> to vector<8x8xf32>
    %cst_238 = arith.constant dense<0.000000e+00> : vector<8x8xf32>
    %432 = tpu.matmul %429, %430, %cst_238 {dimension_numbers = #tpu.dot_dimension_numbers<[1], [1], [0], [0], [0, 0, 1, 0], [], []>} : vector<8x8xf32>, vector<8x8xf32>, vector<8x8xf32> -> vector<8x8xf32>
    %cst_239 = arith.constant 0.353553385 : f32
    %433 = vector.broadcast %cst_239 : f32 to vector<8x8xf32>
    %434 = arith.mulf %432, %433 : vector<8x8xf32>
    %435 = vector.broadcast %428 : vector<1x8xf32> to vector<8x8xf32>
    %436 = arith.addf %434, %435 : vector<8x8xf32>
    %cst_240 = arith.constant dense<0xFF800000> : vector<8xf32>
    %437 = vector.multi_reduction <maximumf>, %436, %cst_240 [1] : vector<8x8xf32> to vector<8xf32>
    %438 = vector.shape_cast %437 : vector<8xf32> to vector<8x1xf32>
    %439 = vector.broadcast %438 : vector<8x1xf32> to vector<8x8xf32>
    %440 = arith.subf %436, %439 : vector<8x8xf32>
    %441 = math.exp %440 : vector<8x8xf32>
    %cst_241 = arith.constant dense<0.000000e+00> : vector<8xf32>
    %442 = vector.multi_reduction <add>, %441, %cst_241 [1] : vector<8x8xf32> to vector<8xf32>
    %443 = vector.shape_cast %442 : vector<8xf32> to vector<8x1xf32>
    %444 = tpu.reciprocal %443 {approx = true} : vector<8x1xf32> -> vector<8x1xf32>
    %445 = vector.broadcast %444 : vector<8x1xf32> to vector<8x8xf32>
    %446 = arith.mulf %441, %445 : vector<8x8xf32>
    %cst_242 = arith.constant dense<0.000000e+00> : vector<8x8xf32>
    %447 = tpu.matmul %446, %431, %cst_242 {dimension_numbers = #tpu.dot_dimension_numbers<[1], [0], [0], [1], [0, 0, 1, 1], [], []>} : vector<8x8xf32>, vector<8x8xf32>, vector<8x8xf32> -> vector<8x8xf32>
    %c0_243 = arith.constant 0 : index
    %c0_244 = arith.constant 0 : index
    %448 = vector.load %arg12[%c0_243, %c0_244] : memref<16x32xf32, #tpu.memory_space<vmem>>, vector<8x8xf32>
    tpu.vector_store %arg12[%c0_243, %c0_244], %447 {strides = array<i32>} : memref<16x32xf32, #tpu.memory_space<vmem>>, vector<8x8xf32>,
    %449 = vector.extract_strided_slice %423 {offsets = [0, 8], sizes = [8, 8], strides = [1, 1]} : vector<16x96xf32> to vector<8x8xf32>
    %450 = vector.extract_strided_slice %423 {offsets = [0, 40], sizes = [8, 8], strides = [1, 1]} : vector<16x96xf32> to vector<8x8xf32>
    %451 = vector.extract_strided_slice %423 {offsets = [0, 72], sizes = [8, 8], strides = [1, 1]} : vector<16x96xf32> to vector<8x8xf32>
    %cst_245 = arith.constant dense<0.000000e+00> : vector<8x8xf32>
    %452 = tpu.matmul %449, %450, %cst_245 {dimension_numbers = #tpu.dot_dimension_numbers<[1], [1], [0], [0], [0, 0, 1, 0], [], []>} : vector<8x8xf32>, vector<8x8xf32>, vector<8x8xf32> -> vector<8x8xf32>
    %cst_246 = arith.constant 0.353553385 : f32
    %453 = vector.broadcast %cst_246 : f32 to vector<8x8xf32>
    %454 = arith.mulf %452, %453 : vector<8x8xf32>
    %455 = vector.broadcast %428 : vector<1x8xf32> to vector<8x8xf32>
    %456 = arith.addf %454, %455 : vector<8x8xf32>
    %cst_247 = arith.constant dense<0xFF800000> : vector<8xf32>
    %457 = vector.multi_reduction <maximumf>, %456, %cst_247 [1] : vector<8x8xf32> to vector<8xf32>
    %458 = vector.shape_cast %457 : vector<8xf32> to vector<8x1xf32>
    %459 = vector.broadcast %458 : vector<8x1xf32> to vector<8x8xf32>
    %460 = arith.subf %456, %459 : vector<8x8xf32>
    %461 = math.exp %460 : vector<8x8xf32>
    %cst_248 = arith.constant dense<0.000000e+00> : vector<8xf32>
    %462 = vector.multi_reduction <add>, %461, %cst_248 [1] : vector<8x8xf32> to vector<8xf32>
    %463 = vector.shape_cast %462 : vector<8xf32> to vector<8x1xf32>
    %464 = tpu.reciprocal %463 {approx = true} : vector<8x1xf32> -> vector<8x1xf32>
    %465 = vector.broadcast %464 : vector<8x1xf32> to vector<8x8xf32>
    %466 = arith.mulf %461, %465 : vector<8x8xf32>
    %cst_249 = arith.constant dense<0.000000e+00> : vector<8x8xf32>
    %467 = tpu.matmul %466, %451, %cst_249 {dimension_numbers = #tpu.dot_dimension_numbers<[1], [0], [0], [1], [0, 0, 1, 1], [], []>} : vector<8x8xf32>, vector<8x8xf32>, vector<8x8xf32> -> vector<8x8xf32>
    %c0_250 = arith.constant 0 : index
    %c8_251 = arith.constant 8 : index
    %468 = vector.load %arg12[%c0_250, %c8_251] : memref<16x32xf32, #tpu.memory_space<vmem>>, vector<8x8xf32>
    tpu.vector_store %arg12[%c0_250, %c8_251], %467 {strides = array<i32>} : memref<16x32xf32, #tpu.memory_space<vmem>>, vector<8x8xf32>,
    %469 = vector.extract_strided_slice %423 {offsets = [0, 16], sizes = [8, 8], strides = [1, 1]} : vector<16x96xf32> to vector<8x8xf32>
    %470 = vector.extract_strided_slice %423 {offsets = [0, 48], sizes = [8, 8], strides = [1, 1]} : vector<16x96xf32> to vector<8x8xf32>
    %471 = vector.extract_strided_slice %423 {offsets = [0, 80], sizes = [8, 8], strides = [1, 1]} : vector<16x96xf32> to vector<8x8xf32>
    %cst_252 = arith.constant dense<0.000000e+00> : vector<8x8xf32>
    %472 = tpu.matmul %469, %470, %cst_252 {dimension_numbers = #tpu.dot_dimension_numbers<[1], [1], [0], [0], [0, 0, 1, 0], [], []>} : vector<8x8xf32>, vector<8x8xf32>, vector<8x8xf32> -> vector<8x8xf32>
    %cst_253 = arith.constant 0.353553385 : f32
    %473 = vector.broadcast %cst_253 : f32 to vector<8x8xf32>
    %474 = arith.mulf %472, %473 : vector<8x8xf32>
    %475 = vector.broadcast %428 : vector<1x8xf32> to vector<8x8xf32>
    %476 = arith.addf %474, %475 : vector<8x8xf32>
    %cst_254 = arith.constant dense<0xFF800000> : vector<8xf32>
    %477 = vector.multi_reduction <maximumf>, %476, %cst_254 [1] : vector<8x8xf32> to vector<8xf32>
    %478 = vector.shape_cast %477 : vector<8xf32> to vector<8x1xf32>
    %479 = vector.broadcast %478 : vector<8x1xf32> to vector<8x8xf32>
    %480 = arith.subf %476, %479 : vector<8x8xf32>
    %481 = math.exp %480 : vector<8x8xf32>
    %cst_255 = arith.constant dense<0.000000e+00> : vector<8xf32>
    %482 = vector.multi_reduction <add>, %481, %cst_255 [1] : vector<8x8xf32> to vector<8xf32>
    %483 = vector.shape_cast %482 : vector<8xf32> to vector<8x1xf32>
    %484 = tpu.reciprocal %483 {approx = true} : vector<8x1xf32> -> vector<8x1xf32>
    %485 = vector.broadcast %484 : vector<8x1xf32> to vector<8x8xf32>
    %486 = arith.mulf %481, %485 : vector<8x8xf32>
    %cst_256 = arith.constant dense<0.000000e+00> : vector<8x8xf32>
    %487 = tpu.matmul %486, %471, %cst_256 {dimension_numbers = #tpu.dot_dimension_numbers<[1], [0], [0], [1], [0, 0, 1, 1], [], []>} : vector<8x8xf32>, vector<8x8xf32>, vector<8x8xf32> -> vector<8x8xf32>
    %c0_257 = arith.constant 0 : index
    %c16_258 = arith.constant 16 : index
    %488 = vector.load %arg12[%c0_257, %c16_258] : memref<16x32xf32, #tpu.memory_space<vmem>>, vector<8x8xf32>
    tpu.vector_store %arg12[%c0_257, %c16_258], %487 {strides = array<i32>} : memref<16x32xf32, #tpu.memory_space<vmem>>, vector<8x8xf32>,
    %489 = vector.extract_strided_slice %423 {offsets = [0, 24], sizes = [8, 8], strides = [1, 1]} : vector<16x96xf32> to vector<8x8xf32>
    %490 = vector.extract_strided_slice %423 {offsets = [0, 56], sizes = [8, 8], strides = [1, 1]} : vector<16x96xf32> to vector<8x8xf32>
    %491 = vector.extract_strided_slice %423 {offsets = [0, 88], sizes = [8, 8], strides = [1, 1]} : vector<16x96xf32> to vector<8x8xf32>
    %cst_259 = arith.constant dense<0.000000e+00> : vector<8x8xf32>
    %492 = tpu.matmul %489, %490, %cst_259 {dimension_numbers = #tpu.dot_dimension_numbers<[1], [1], [0], [0], [0, 0, 1, 0], [], []>} : vector<8x8xf32>, vector<8x8xf32>, vector<8x8xf32> -> vector<8x8xf32>
    %cst_260 = arith.constant 0.353553385 : f32
    %493 = vector.broadcast %cst_260 : f32 to vector<8x8xf32>
    %494 = arith.mulf %492, %493 : vector<8x8xf32>
    %495 = vector.broadcast %428 : vector<1x8xf32> to vector<8x8xf32>
    %496 = arith.addf %494, %495 : vector<8x8xf32>
    %cst_261 = arith.constant dense<0xFF800000> : vector<8xf32>
    %497 = vector.multi_reduction <maximumf>, %496, %cst_261 [1] : vector<8x8xf32> to vector<8xf32>
    %498 = vector.shape_cast %497 : vector<8xf32> to vector<8x1xf32>
    %499 = vector.broadcast %498 : vector<8x1xf32> to vector<8x8xf32>
    %500 = arith.subf %496, %499 : vector<8x8xf32>
    %501 = math.exp %500 : vector<8x8xf32>
    %cst_262 = arith.constant dense<0.000000e+00> : vector<8xf32>
    %502 = vector.multi_reduction <add>, %501, %cst_262 [1] : vector<8x8xf32> to vector<8xf32>
    %503 = vector.shape_cast %502 : vector<8xf32> to vector<8x1xf32>
    %504 = tpu.reciprocal %503 {approx = true} : vector<8x1xf32> -> vector<8x1xf32>
    %505 = vector.broadcast %504 : vector<8x1xf32> to vector<8x8xf32>
    %506 = arith.mulf %501, %505 : vector<8x8xf32>
    %cst_263 = arith.constant dense<0.000000e+00> : vector<8x8xf32>
    %507 = tpu.matmul %506, %491, %cst_263 {dimension_numbers = #tpu.dot_dimension_numbers<[1], [0], [0], [1], [0, 0, 1, 1], [], []>} : vector<8x8xf32>, vector<8x8xf32>, vector<8x8xf32> -> vector<8x8xf32>
    %c0_264 = arith.constant 0 : index
    %c24_265 = arith.constant 24 : index
    %508 = vector.load %arg12[%c0_264, %c24_265] : memref<16x32xf32, #tpu.memory_space<vmem>>, vector<8x8xf32>
    tpu.vector_store %arg12[%c0_264, %c24_265], %507 {strides = array<i32>} : memref<16x32xf32, #tpu.memory_space<vmem>>, vector<8x8xf32>,
    %c1_266 = arith.constant 1 : index
    %c0_267 = arith.constant 0 : index
    %509 = vector.load %arg1[%c1_266, %c0_267] : memref<2x8xf32, #tpu.memory_space<vmem>>, vector<1x8xf32>
    %cst_268 = arith.constant 1.000000e+00 : f32
    %510 = vector.broadcast %cst_268 : f32 to vector<1x8xf32>
    %511 = arith.subf %510, %509 : vector<1x8xf32>
    %cst_269 = arith.constant -1.000000e+04 : f32
    %512 = vector.broadcast %cst_269 : f32 to vector<1x8xf32>
    %513 = arith.mulf %511, %512 : vector<1x8xf32>
    %514 = vector.extract_strided_slice %423 {offsets = [8, 0], sizes = [8, 8], strides = [1, 1]} : vector<16x96xf32> to vector<8x8xf32>
    %515 = vector.extract_strided_slice %423 {offsets = [8, 32], sizes = [8, 8], strides = [1, 1]} : vector<16x96xf32> to vector<8x8xf32>
    %516 = vector.extract_strided_slice %423 {offsets = [8, 64], sizes = [8, 8], strides = [1, 1]} : vector<16x96xf32> to vector<8x8xf32>
    %cst_270 = arith.constant dense<0.000000e+00> : vector<8x8xf32>
    %517 = tpu.matmul %514, %515, %cst_270 {dimension_numbers = #tpu.dot_dimension_numbers<[1], [1], [0], [0], [0, 0, 1, 0], [], []>} : vector<8x8xf32>, vector<8x8xf32>, vector<8x8xf32> -> vector<8x8xf32>
    %cst_271 = arith.constant 0.353553385 : f32
    %518 = vector.broadcast %cst_271 : f32 to vector<8x8xf32>
    %519 = arith.mulf %517, %518 : vector<8x8xf32>
    %520 = vector.broadcast %513 : vector<1x8xf32> to vector<8x8xf32>
    %521 = arith.addf %519, %520 : vector<8x8xf32>
    %cst_272 = arith.constant dense<0xFF800000> : vector<8xf32>
    %522 = vector.multi_reduction <maximumf>, %521, %cst_272 [1] : vector<8x8xf32> to vector<8xf32>
    %523 = vector.shape_cast %522 : vector<8xf32> to vector<8x1xf32>
    %524 = vector.broadcast %523 : vector<8x1xf32> to vector<8x8xf32>
    %525 = arith.subf %521, %524 : vector<8x8xf32>
    %526 = math.exp %525 : vector<8x8xf32>
    %cst_273 = arith.constant dense<0.000000e+00> : vector<8xf32>
    %527 = vector.multi_reduction <add>, %526, %cst_273 [1] : vector<8x8xf32> to vector<8xf32>
    %528 = vector.shape_cast %527 : vector<8xf32> to vector<8x1xf32>
    %529 = tpu.reciprocal %528 {approx = true} : vector<8x1xf32> -> vector<8x1xf32>
    %530 = vector.broadcast %529 : vector<8x1xf32> to vector<8x8xf32>
    %531 = arith.mulf %526, %530 : vector<8x8xf32>
    %cst_274 = arith.constant dense<0.000000e+00> : vector<8x8xf32>
    %532 = tpu.matmul %531, %516, %cst_274 {dimension_numbers = #tpu.dot_dimension_numbers<[1], [0], [0], [1], [0, 0, 1, 1], [], []>} : vector<8x8xf32>, vector<8x8xf32>, vector<8x8xf32> -> vector<8x8xf32>
    %c8_275 = arith.constant 8 : index
    %c0_276 = arith.constant 0 : index
    %533 = vector.load %arg12[%c8_275, %c0_276] : memref<16x32xf32, #tpu.memory_space<vmem>>, vector<8x8xf32>
    tpu.vector_store %arg12[%c8_275, %c0_276], %532 {strides = array<i32>} : memref<16x32xf32, #tpu.memory_space<vmem>>, vector<8x8xf32>,
    %534 = vector.extract_strided_slice %423 {offsets = [8, 8], sizes = [8, 8], strides = [1, 1]} : vector<16x96xf32> to vector<8x8xf32>
    %535 = vector.extract_strided_slice %423 {offsets = [8, 40], sizes = [8, 8], strides = [1, 1]} : vector<16x96xf32> to vector<8x8xf32>
    %536 = vector.extract_strided_slice %423 {offsets = [8, 72], sizes = [8, 8], strides = [1, 1]} : vector<16x96xf32> to vector<8x8xf32>
    %cst_277 = arith.constant dense<0.000000e+00> : vector<8x8xf32>
    %537 = tpu.matmul %534, %535, %cst_277 {dimension_numbers = #tpu.dot_dimension_numbers<[1], [1], [0], [0], [0, 0, 1, 0], [], []>} : vector<8x8xf32>, vector<8x8xf32>, vector<8x8xf32> -> vector<8x8xf32>
    %cst_278 = arith.constant 0.353553385 : f32
    %538 = vector.broadcast %cst_278 : f32 to vector<8x8xf32>
    %539 = arith.mulf %537, %538 : vector<8x8xf32>
    %540 = vector.broadcast %513 : vector<1x8xf32> to vector<8x8xf32>
    %541 = arith.addf %539, %540 : vector<8x8xf32>
    %cst_279 = arith.constant dense<0xFF800000> : vector<8xf32>
    %542 = vector.multi_reduction <maximumf>, %541, %cst_279 [1] : vector<8x8xf32> to vector<8xf32>
    %543 = vector.shape_cast %542 : vector<8xf32> to vector<8x1xf32>
    %544 = vector.broadcast %543 : vector<8x1xf32> to vector<8x8xf32>
    %545 = arith.subf %541, %544 : vector<8x8xf32>
    %546 = math.exp %545 : vector<8x8xf32>
    %cst_280 = arith.constant dense<0.000000e+00> : vector<8xf32>
    %547 = vector.multi_reduction <add>, %546, %cst_280 [1] : vector<8x8xf32> to vector<8xf32>
    %548 = vector.shape_cast %547 : vector<8xf32> to vector<8x1xf32>
    %549 = tpu.reciprocal %548 {approx = true} : vector<8x1xf32> -> vector<8x1xf32>
    %550 = vector.broadcast %549 : vector<8x1xf32> to vector<8x8xf32>
    %551 = arith.mulf %546, %550 : vector<8x8xf32>
    %cst_281 = arith.constant dense<0.000000e+00> : vector<8x8xf32>
    %552 = tpu.matmul %551, %536, %cst_281 {dimension_numbers = #tpu.dot_dimension_numbers<[1], [0], [0], [1], [0, 0, 1, 1], [], []>} : vector<8x8xf32>, vector<8x8xf32>, vector<8x8xf32> -> vector<8x8xf32>
    %c8_282 = arith.constant 8 : index
    %c8_283 = arith.constant 8 : index
    %553 = vector.load %arg12[%c8_282, %c8_283] : memref<16x32xf32, #tpu.memory_space<vmem>>, vector<8x8xf32>
    tpu.vector_store %arg12[%c8_282, %c8_283], %552 {strides = array<i32>} : memref<16x32xf32, #tpu.memory_space<vmem>>, vector<8x8xf32>,
    %554 = vector.extract_strided_slice %423 {offsets = [8, 16], sizes = [8, 8], strides = [1, 1]} : vector<16x96xf32> to vector<8x8xf32>
    %555 = vector.extract_strided_slice %423 {offsets = [8, 48], sizes = [8, 8], strides = [1, 1]} : vector<16x96xf32> to vector<8x8xf32>
    %556 = vector.extract_strided_slice %423 {offsets = [8, 80], sizes = [8, 8], strides = [1, 1]} : vector<16x96xf32> to vector<8x8xf32>
    %cst_284 = arith.constant dense<0.000000e+00> : vector<8x8xf32>
    %557 = tpu.matmul %554, %555, %cst_284 {dimension_numbers = #tpu.dot_dimension_numbers<[1], [1], [0], [0], [0, 0, 1, 0], [], []>} : vector<8x8xf32>, vector<8x8xf32>, vector<8x8xf32> -> vector<8x8xf32>
    %cst_285 = arith.constant 0.353553385 : f32
    %558 = vector.broadcast %cst_285 : f32 to vector<8x8xf32>
    %559 = arith.mulf %557, %558 : vector<8x8xf32>
    %560 = vector.broadcast %513 : vector<1x8xf32> to vector<8x8xf32>
    %561 = arith.addf %559, %560 : vector<8x8xf32>
    %cst_286 = arith.constant dense<0xFF800000> : vector<8xf32>
    %562 = vector.multi_reduction <maximumf>, %561, %cst_286 [1] : vector<8x8xf32> to vector<8xf32>
    %563 = vector.shape_cast %562 : vector<8xf32> to vector<8x1xf32>
    %564 = vector.broadcast %563 : vector<8x1xf32> to vector<8x8xf32>
    %565 = arith.subf %561, %564 : vector<8x8xf32>
    %566 = math.exp %565 : vector<8x8xf32>
    %cst_287 = arith.constant dense<0.000000e+00> : vector<8xf32>
    %567 = vector.multi_reduction <add>, %566, %cst_287 [1] : vector<8x8xf32> to vector<8xf32>
    %568 = vector.shape_cast %567 : vector<8xf32> to vector<8x1xf32>
    %569 = tpu.reciprocal %568 {approx = true} : vector<8x1xf32> -> vector<8x1xf32>
    %570 = vector.broadcast %569 : vector<8x1xf32> to vector<8x8xf32>
    %571 = arith.mulf %566, %570 : vector<8x8xf32>
    %cst_288 = arith.constant dense<0.000000e+00> : vector<8x8xf32>
    %572 = tpu.matmul %571, %556, %cst_288 {dimension_numbers = #tpu.dot_dimension_numbers<[1], [0], [0], [1], [0, 0, 1, 1], [], []>} : vector<8x8xf32>, vector<8x8xf32>, vector<8x8xf32> -> vector<8x8xf32>
    %c8_289 = arith.constant 8 : index
    %c16_290 = arith.constant 16 : index
    %573 = vector.load %arg12[%c8_289, %c16_290] : memref<16x32xf32, #tpu.memory_space<vmem>>, vector<8x8xf32>
    tpu.vector_store %arg12[%c8_289, %c16_290], %572 {strides = array<i32>} : memref<16x32xf32, #tpu.memory_space<vmem>>, vector<8x8xf32>,
    %574 = vector.extract_strided_slice %423 {offsets = [8, 24], sizes = [8, 8], strides = [1, 1]} : vector<16x96xf32> to vector<8x8xf32>
    %575 = vector.extract_strided_slice %423 {offsets = [8, 56], sizes = [8, 8], strides = [1, 1]} : vector<16x96xf32> to vector<8x8xf32>
    %576 = vector.extract_strided_slice %423 {offsets = [8, 88], sizes = [8, 8], strides = [1, 1]} : vector<16x96xf32> to vector<8x8xf32>
    %cst_291 = arith.constant dense<0.000000e+00> : vector<8x8xf32>
    %577 = tpu.matmul %574, %575, %cst_291 {dimension_numbers = #tpu.dot_dimension_numbers<[1], [1], [0], [0], [0, 0, 1, 0], [], []>} : vector<8x8xf32>, vector<8x8xf32>, vector<8x8xf32> -> vector<8x8xf32>
    %cst_292 = arith.constant 0.353553385 : f32
    %578 = vector.broadcast %cst_292 : f32 to vector<8x8xf32>
    %579 = arith.mulf %577, %578 : vector<8x8xf32>
    %580 = vector.broadcast %513 : vector<1x8xf32> to vector<8x8xf32>
    %581 = arith.addf %579, %580 : vector<8x8xf32>
    %cst_293 = arith.constant dense<0xFF800000> : vector<8xf32>
    %582 = vector.multi_reduction <maximumf>, %581, %cst_293 [1] : vector<8x8xf32> to vector<8xf32>
    %583 = vector.shape_cast %582 : vector<8xf32> to vector<8x1xf32>
    %584 = vector.broadcast %583 : vector<8x1xf32> to vector<8x8xf32>
    %585 = arith.subf %581, %584 : vector<8x8xf32>
    %586 = math.exp %585 : vector<8x8xf32>
    %cst_294 = arith.constant dense<0.000000e+00> : vector<8xf32>
    %587 = vector.multi_reduction <add>, %586, %cst_294 [1] : vector<8x8xf32> to vector<8xf32>
    %588 = vector.shape_cast %587 : vector<8xf32> to vector<8x1xf32>
    %589 = tpu.reciprocal %588 {approx = true} : vector<8x1xf32> -> vector<8x1xf32>
    %590 = vector.broadcast %589 : vector<8x1xf32> to vector<8x8xf32>
    %591 = arith.mulf %586, %590 : vector<8x8xf32>
    %cst_295 = arith.constant dense<0.000000e+00> : vector<8x8xf32>
    %592 = tpu.matmul %591, %576, %cst_295 {dimension_numbers = #tpu.dot_dimension_numbers<[1], [0], [0], [1], [0, 0, 1, 1], [], []>} : vector<8x8xf32>, vector<8x8xf32>, vector<8x8xf32> -> vector<8x8xf32>
    %c8_296 = arith.constant 8 : index
    %c24_297 = arith.constant 24 : index
    %593 = vector.load %arg12[%c8_296, %c24_297] : memref<16x32xf32, #tpu.memory_space<vmem>>, vector<8x8xf32>
    tpu.vector_store %arg12[%c8_296, %c24_297], %592 {strides = array<i32>} : memref<16x32xf32, #tpu.memory_space<vmem>>, vector<8x8xf32>,
    %c0_298 = arith.constant 0 : index
    %c0_299 = arith.constant 0 : index
    %594 = vector.load %arg12[%c0_298, %c0_299] : memref<16x32xf32, #tpu.memory_space<vmem>>, vector<16x32xf32>
    %c1_300 = arith.constant 1 : index
    %c0_301 = arith.constant 0 : index
    %c0_302 = arith.constant 0 : index
    %595 = vector.load %arg5[%c1_300, %c0_301, %c0_302] : memref<2x32x32xbf16, #tpu.memory_space<vmem>>, vector<1x32x32xbf16>
    %596 = vector.shape_cast %595 : vector<1x32x32xbf16> to vector<32x32xbf16>
    %597 = arith.truncf %594 : vector<16x32xf32> to vector<16x32xbf16>
    %cst_303 = arith.constant dense<0.000000e+00> : vector<16x32xf32>
    %598 = tpu.matmul %597, %596, %cst_303 {dimension_numbers = #tpu.dot_dimension_numbers<[1], [0], [0], [1], [0, 0, 1, 1], [], []>} : vector<16x32xbf16>, vector<32x32xbf16>, vector<16x32xf32> -> vector<16x32xf32>
    %c11_304 = arith.constant 11 : index
    %c0_305 = arith.constant 0 : index
    %599 = vector.load %arg9[%c11_304, %c0_305] : memref<21x96xf32, #tpu.memory_space<vmem>>, vector<1x32xf32>
    %600 = vector.broadcast %599 : vector<1x32xf32> to vector<16x32xf32>
    %601 = arith.addf %598, %600 : vector<16x32xf32>
    %602 = arith.addf %416, %601 : vector<16x32xf32>
    %c12_306 = arith.constant 12 : index
    %c0_307 = arith.constant 0 : index
    %603 = vector.load %arg9[%c12_306, %c0_307] : memref<21x96xf32, #tpu.memory_space<vmem>>, vector<1x32xf32>
    %c13_308 = arith.constant 13 : index
    %c0_309 = arith.constant 0 : index
    %604 = vector.load %arg9[%c13_308, %c0_309] : memref<21x96xf32, #tpu.memory_space<vmem>>, vector<1x32xf32>
    %cst_310 = arith.constant dense<0.000000e+00> : vector<16xf32>
    %605 = vector.multi_reduction <add>, %602, %cst_310 [1] : vector<16x32xf32> to vector<16xf32>
    %606 = vector.shape_cast %605 : vector<16xf32> to vector<16x1xf32>
    %cst_311 = arith.constant 3.200000e+01 : f32
    %607 = vector.broadcast %cst_311 : f32 to vector<16x1xf32>
    %608 = arith.divf %606, %607 : vector<16x1xf32>
    %609 = vector.broadcast %608 : vector<16x1xf32> to vector<16x32xf32>
    %610 = arith.subf %602, %609 : vector<16x32xf32>
    %611 = vector.broadcast %608 : vector<16x1xf32> to vector<16x32xf32>
    %612 = arith.subf %602, %611 : vector<16x32xf32>
    %613 = arith.mulf %610, %612 : vector<16x32xf32>
    %cst_312 = arith.constant dense<0.000000e+00> : vector<16xf32>
    %614 = vector.multi_reduction <add>, %613, %cst_312 [1] : vector<16x32xf32> to vector<16xf32>
    %615 = vector.shape_cast %614 : vector<16xf32> to vector<16x1xf32>
    %cst_313 = arith.constant 3.200000e+01 : f32
    %616 = vector.broadcast %cst_313 : f32 to vector<16x1xf32>
    %617 = arith.divf %615, %616 : vector<16x1xf32>
    %618 = vector.broadcast %608 : vector<16x1xf32> to vector<16x32xf32>
    %619 = arith.subf %602, %618 : vector<16x32xf32>
    %cst_314 = arith.constant 9.99999996E-13 : f32
    %620 = vector.broadcast %cst_314 : f32 to vector<16x1xf32>
    %621 = arith.addf %617, %620 : vector<16x1xf32>
    %622 = math.rsqrt %621 : vector<16x1xf32>
    %623 = vector.broadcast %622 : vector<16x1xf32> to vector<16x32xf32>
    %624 = arith.mulf %619, %623 : vector<16x32xf32>
    %625 = vector.broadcast %603 : vector<1x32xf32> to vector<16x32xf32>
    %626 = arith.mulf %624, %625 : vector<16x32xf32>
    %627 = vector.broadcast %604 : vector<1x32xf32> to vector<16x32xf32>
    %628 = arith.addf %626, %627 : vector<16x32xf32>
    %c1_315 = arith.constant 1 : index
    %c0_316 = arith.constant 0 : index
    %c0_317 = arith.constant 0 : index
    %629 = vector.load %arg6[%c1_315, %c0_316, %c0_317] : memref<2x32x64xbf16, #tpu.memory_space<vmem>>, vector<1x32x64xbf16>
    %630 = vector.shape_cast %629 : vector<1x32x64xbf16> to vector<32x64xbf16>
    %631 = arith.truncf %628 : vector<16x32xf32> to vector<16x32xbf16>
    %cst_318 = arith.constant dense<0.000000e+00> : vector<16x64xf32>
    %632 = tpu.matmul %631, %630, %cst_318 {dimension_numbers = #tpu.dot_dimension_numbers<[1], [0], [0], [1], [0, 0, 1, 1], [], []>} : vector<16x32xbf16>, vector<32x64xbf16>, vector<16x64xf32> -> vector<16x64xf32>
    %c14_319 = arith.constant 14 : index
    %c0_320 = arith.constant 0 : index
    %633 = vector.load %arg9[%c14_319, %c0_320] : memref<21x96xf32, #tpu.memory_space<vmem>>, vector<1x64xf32>
    %634 = vector.broadcast %633 : vector<1x64xf32> to vector<16x64xf32>
    %635 = arith.addf %632, %634 : vector<16x64xf32>
    %cst_321 = arith.constant 5.000000e-01 : f32
    %636 = vector.broadcast %cst_321 : f32 to vector<16x64xf32>
    %637 = arith.mulf %636, %635 : vector<16x64xf32>
    %cst_322 = arith.constant 0.707106769 : f32
    %638 = vector.broadcast %cst_322 : f32 to vector<16x64xf32>
    %639 = arith.mulf %635, %638 : vector<16x64xf32>
    %cst_323 = arith.constant 0.000000e+00 : f32
    %640 = vector.broadcast %cst_323 : f32 to vector<16x64xf32>
    %641 = arith.cmpf oge, %639, %640 : vector<16x64xf32>
    %cst_324 = arith.constant 1.000000e+00 : f32
    %cst_325 = arith.constant -1.000000e+00 : f32
    %642 = vector.broadcast %cst_324 : f32 to vector<16x64xf32>
    %643 = vector.broadcast %cst_325 : f32 to vector<16x64xf32>
    %644 = arith.select %641, %642, %643 : vector<16x64xi1>, vector<16x64xf32>
    %645 = math.absf %639 : vector<16x64xf32>
    %cst_326 = arith.constant 0.327591091 : f32
    %646 = vector.broadcast %cst_326 : f32 to vector<16x64xf32>
    %647 = arith.mulf %646, %645 : vector<16x64xf32>
    %cst_327 = arith.constant 1.000000e+00 : f32
    %648 = vector.broadcast %cst_327 : f32 to vector<16x64xf32>
    %649 = arith.addf %648, %647 : vector<16x64xf32>
    %cst_328 = arith.constant 1.000000e+00 : f32
    %650 = vector.broadcast %cst_328 : f32 to vector<16x64xf32>
    %651 = arith.divf %650, %649 : vector<16x64xf32>
    %cst_329 = arith.constant 1.06140542 : f32
    %652 = vector.broadcast %cst_329 : f32 to vector<16x64xf32>
    %653 = arith.mulf %652, %651 : vector<16x64xf32>
    %cst_330 = arith.constant -1.45315206 : f32
    %654 = vector.broadcast %cst_330 : f32 to vector<16x64xf32>
    %655 = arith.addf %653, %654 : vector<16x64xf32>
    %656 = arith.mulf %655, %651 : vector<16x64xf32>
    %cst_331 = arith.constant 1.42141378 : f32
    %657 = vector.broadcast %cst_331 : f32 to vector<16x64xf32>
    %658 = arith.addf %656, %657 : vector<16x64xf32>
    %659 = arith.mulf %658, %651 : vector<16x64xf32>
    %cst_332 = arith.constant -0.284496725 : f32
    %660 = vector.broadcast %cst_332 : f32 to vector<16x64xf32>
    %661 = arith.addf %659, %660 : vector<16x64xf32>
    %662 = arith.mulf %661, %651 : vector<16x64xf32>
    %cst_333 = arith.constant 0.254829586 : f32
    %663 = vector.broadcast %cst_333 : f32 to vector<16x64xf32>
    %664 = arith.addf %662, %663 : vector<16x64xf32>
    %665 = arith.mulf %664, %651 : vector<16x64xf32>
    %cst_334 = arith.constant 0.000000e+00 : f32
    %666 = vector.broadcast %cst_334 : f32 to vector<16x64xf32>
    %667 = arith.subf %666, %645 : vector<16x64xf32>
    %668 = arith.mulf %667, %645 : vector<16x64xf32>
    %669 = math.exp %668 : vector<16x64xf32>
    %670 = arith.mulf %665, %669 : vector<16x64xf32>
    %cst_335 = arith.constant 1.000000e+00 : f32
    %671 = vector.broadcast %cst_335 : f32 to vector<16x64xf32>
    %672 = arith.subf %671, %670 : vector<16x64xf32>
    %673 = arith.mulf %644, %672 : vector<16x64xf32>
    %cst_336 = arith.constant 1.000000e+00 : f32
    %674 = vector.broadcast %cst_336 : f32 to vector<16x64xf32>
    %675 = arith.addf %674, %673 : vector<16x64xf32>
    %676 = arith.mulf %637, %675 : vector<16x64xf32>
    %c1_337 = arith.constant 1 : index
    %c0_338 = arith.constant 0 : index
    %c0_339 = arith.constant 0 : index
    %677 = vector.load %arg7[%c1_337, %c0_338, %c0_339] : memref<2x64x32xbf16, #tpu.memory_space<vmem>>, vector<1x64x32xbf16>
    %678 = vector.shape_cast %677 : vector<1x64x32xbf16> to vector<64x32xbf16>
    %679 = arith.truncf %676 : vector<16x64xf32> to vector<16x64xbf16>
    %cst_340 = arith.constant dense<0.000000e+00> : vector<16x32xf32>
    %680 = tpu.matmul %679, %678, %cst_340 {dimension_numbers = #tpu.dot_dimension_numbers<[1], [0], [0], [1], [0, 0, 1, 1], [], []>} : vector<16x64xbf16>, vector<64x32xbf16>, vector<16x32xf32> -> vector<16x32xf32>
    %c15_341 = arith.constant 15 : index
    %c0_342 = arith.constant 0 : index
    %681 = vector.load %arg9[%c15_341, %c0_342] : memref<21x96xf32, #tpu.memory_space<vmem>>, vector<1x32xf32>
    %682 = vector.broadcast %681 : vector<1x32xf32> to vector<16x32xf32>
    %683 = arith.addf %680, %682 : vector<16x32xf32>
    %684 = arith.addf %628, %683 : vector<16x32xf32>
    %c16_343 = arith.constant 16 : index
    %c0_344 = arith.constant 0 : index
    %685 = vector.load %arg9[%c16_343, %c0_344] : memref<21x96xf32, #tpu.memory_space<vmem>>, vector<1x32xf32>
    %c17 = arith.constant 17 : index
    %c0_345 = arith.constant 0 : index
    %686 = vector.load %arg9[%c17, %c0_345] : memref<21x96xf32, #tpu.memory_space<vmem>>, vector<1x32xf32>
    %cst_346 = arith.constant dense<0.000000e+00> : vector<16xf32>
    %687 = vector.multi_reduction <add>, %684, %cst_346 [1] : vector<16x32xf32> to vector<16xf32>
    %688 = vector.shape_cast %687 : vector<16xf32> to vector<16x1xf32>
    %cst_347 = arith.constant 3.200000e+01 : f32
    %689 = vector.broadcast %cst_347 : f32 to vector<16x1xf32>
    %690 = arith.divf %688, %689 : vector<16x1xf32>
    %691 = vector.broadcast %690 : vector<16x1xf32> to vector<16x32xf32>
    %692 = arith.subf %684, %691 : vector<16x32xf32>
    %693 = vector.broadcast %690 : vector<16x1xf32> to vector<16x32xf32>
    %694 = arith.subf %684, %693 : vector<16x32xf32>
    %695 = arith.mulf %692, %694 : vector<16x32xf32>
    %cst_348 = arith.constant dense<0.000000e+00> : vector<16xf32>
    %696 = vector.multi_reduction <add>, %695, %cst_348 [1] : vector<16x32xf32> to vector<16xf32>
    %697 = vector.shape_cast %696 : vector<16xf32> to vector<16x1xf32>
    %cst_349 = arith.constant 3.200000e+01 : f32
    %698 = vector.broadcast %cst_349 : f32 to vector<16x1xf32>
    %699 = arith.divf %697, %698 : vector<16x1xf32>
    %700 = vector.broadcast %690 : vector<16x1xf32> to vector<16x32xf32>
    %701 = arith.subf %684, %700 : vector<16x32xf32>
    %cst_350 = arith.constant 9.99999996E-13 : f32
    %702 = vector.broadcast %cst_350 : f32 to vector<16x1xf32>
    %703 = arith.addf %699, %702 : vector<16x1xf32>
    %704 = math.rsqrt %703 : vector<16x1xf32>
    %705 = vector.broadcast %704 : vector<16x1xf32> to vector<16x32xf32>
    %706 = arith.mulf %701, %705 : vector<16x32xf32>
    %707 = vector.broadcast %685 : vector<1x32xf32> to vector<16x32xf32>
    %708 = arith.mulf %706, %707 : vector<16x32xf32>
    %709 = vector.broadcast %686 : vector<1x32xf32> to vector<16x32xf32>
    %710 = arith.addf %708, %709 : vector<16x32xf32>
    %711 = vector.extract_strided_slice %710 {offsets = [0, 0], sizes = [1, 32], strides = [1, 1]} : vector<16x32xf32> to vector<1x32xf32>
    %712 = vector.extract_strided_slice %710 {offsets = [8, 0], sizes = [1, 32], strides = [1, 1]} : vector<16x32xf32> to vector<1x32xf32>
    %713 = tpu.concatenate %711, %712 in 0 : vector<1x32xf32>, vector<1x32xf32> -> vector<2x32xf32>
    %c0_351 = arith.constant 0 : index
    %c0_352 = arith.constant 0 : index
    %714 = vector.load %arg8[%c0_351, %c0_352] : memref<32x68xbf16, #tpu.memory_space<vmem>>, vector<32x32xbf16>
    %715 = arith.truncf %713 : vector<2x32xf32> to vector<2x32xbf16>
    %cst_353 = arith.constant dense<0.000000e+00> : vector<2x32xf32>
    %716 = tpu.matmul %715, %714, %cst_353 {dimension_numbers = #tpu.dot_dimension_numbers<[1], [0], [0], [1], [0, 0, 1, 1], [], []>} : vector<2x32xbf16>, vector<32x32xbf16>, vector<2x32xf32> -> vector<2x32xf32>
    %c18 = arith.constant 18 : index
    %c0_354 = arith.constant 0 : index
    %717 = vector.load %arg9[%c18, %c0_354] : memref<21x96xf32, #tpu.memory_space<vmem>>, vector<1x32xf32>
    %718 = vector.broadcast %717 : vector<1x32xf32> to vector<2x32xf32>
    %719 = arith.addf %716, %718 : vector<2x32xf32>
    %cst_355 = arith.constant 0.000000e+00 : f32
    %720 = vector.broadcast %cst_355 : f32 to vector<2x32xf32>
    %721 = arith.maximumf %719, %720 : vector<2x32xf32>
    %c0_356 = arith.constant 0 : index
    %c32 = arith.constant 32 : index
    %722 = vector.load %arg8[%c0_356, %c32] : memref<32x68xbf16, #tpu.memory_space<vmem>>, vector<32x32xbf16>
    %723 = arith.truncf %721 : vector<2x32xf32> to vector<2x32xbf16>
    %cst_357 = arith.constant dense<0.000000e+00> : vector<2x32xf32>
    %724 = tpu.matmul %723, %722, %cst_357 {dimension_numbers = #tpu.dot_dimension_numbers<[1], [0], [0], [1], [0, 0, 1, 1], [], []>} : vector<2x32xbf16>, vector<32x32xbf16>, vector<2x32xf32> -> vector<2x32xf32>
    %c19 = arith.constant 19 : index
    %c0_358 = arith.constant 0 : index
    %725 = vector.load %arg9[%c19, %c0_358] : memref<21x96xf32, #tpu.memory_space<vmem>>, vector<1x32xf32>
    %726 = vector.broadcast %725 : vector<1x32xf32> to vector<2x32xf32>
    %727 = arith.addf %724, %726 : vector<2x32xf32>
    %cst_359 = arith.constant 0.000000e+00 : f32
    %728 = vector.broadcast %cst_359 : f32 to vector<2x32xf32>
    %729 = arith.maximumf %727, %728 : vector<2x32xf32>
    %c0_360 = arith.constant 0 : index
    %c64 = arith.constant 64 : index
    %730 = vector.load %arg8[%c0_360, %c64] : memref<32x68xbf16, #tpu.memory_space<vmem>>, vector<32x4xbf16>
    %731 = arith.truncf %729 : vector<2x32xf32> to vector<2x32xbf16>
    %cst_361 = arith.constant dense<0.000000e+00> : vector<2x4xf32>
    %732 = tpu.matmul %731, %730, %cst_361 {dimension_numbers = #tpu.dot_dimension_numbers<[1], [0], [0], [1], [0, 0, 1, 1], [], []>} : vector<2x32xbf16>, vector<32x4xbf16>, vector<2x4xf32> -> vector<2x4xf32>
    %c20 = arith.constant 20 : index
    %c0_362 = arith.constant 0 : index
    %733 = vector.load %arg9[%c20, %c0_362] : memref<21x96xf32, #tpu.memory_space<vmem>>, vector<1x4xf32>
    %734 = vector.broadcast %733 : vector<1x4xf32> to vector<2x4xf32>
    %735 = arith.addf %732, %734 : vector<2x4xf32>
    %cst_363 = arith.constant dense<0xFF800000> : vector<2xf32>
    %736 = vector.multi_reduction <maximumf>, %735, %cst_363 [1] : vector<2x4xf32> to vector<2xf32>
    %737 = vector.shape_cast %736 : vector<2xf32> to vector<2x1xf32>
    %738 = vector.broadcast %737 : vector<2x1xf32> to vector<2x4xf32>
    %739 = arith.subf %735, %738 : vector<2x4xf32>
    %740 = math.exp %739 : vector<2x4xf32>
    %cst_364 = arith.constant dense<0.000000e+00> : vector<2xf32>
    %741 = vector.multi_reduction <add>, %740, %cst_364 [1] : vector<2x4xf32> to vector<2xf32>
    %742 = vector.shape_cast %741 : vector<2xf32> to vector<2x1xf32>
    %743 = math.log %742 : vector<2x1xf32>
    %744 = arith.addf %743, %737 : vector<2x1xf32>
    %745 = vector.broadcast %744 : vector<2x1xf32> to vector<2x4xf32>
    %746 = arith.subf %735, %745 : vector<2x4xf32>
    %c0_365 = arith.constant 0 : index
    %c0_366 = arith.constant 0 : index
    %747 = vector.load %arg10[%c0_365, %c0_366] : memref<2x4xf32, #tpu.memory_space<vmem>>, vector<2x4xf32>
    tpu.vector_store %arg10[%c0_365, %c0_366], %746 {strides = array<i32>} : memref<2x4xf32, #tpu.memory_space<vmem>>, vector<2x4xf32>,
    return
  }
}

</mosaic_0001>

<llo_original>
// kernel: bert_classification_forward.1
$region0: #{bert_classification_forward.1}
  #allocation0 [shape = 'u32[]', space=smem, size = 0x4, offset = 0x4, fixed_abs, tag = 'smem constant byte address 0x4 - core index']
  #allocation1 [shape = 'u32[144,128]{1,0:T(1,128)}', space=vmem, size = 0x12000, scoped, tag = 'internal scratch']
  #allocation2 [shape = 'f32[16,32]{1,0:T(8,128)}', space=vmem, size = 0x2000, scoped, tag = 'scratch operand']
  #allocation3 [shape = 'f32[16,32]{1,0:T(8,128)}', space=vmem, size = 0x2000, scoped, tag = 'scratch operand']
  %s0 = inlined_call_operand.vmem [shape: s32[2,8], index: 0, kind: input, shape index: {}]
  %s1 = inlined_call_operand.vmem [shape: f32[2,8], index: 1, kind: input, shape index: {}]
  %s2 = inlined_call_operand.vmem [shape: f32[100,32], index: 2, kind: input, shape index: {}]
  %s3 = inlined_call_operand.vmem [shape: f32[8,32], index: 3, kind: input, shape index: {}]
  %s4 = inlined_call_operand.vmem [shape: bf16[2,32,96], index: 4, kind: input, shape index: {}]
  %s5 = inlined_call_operand.vmem [shape: bf16[2,32,32], index: 5, kind: input, shape index: {}]
  %s6 = inlined_call_operand.vmem [shape: bf16[2,32,64], index: 6, kind: input, shape index: {}]
  %s7 = inlined_call_operand.vmem [shape: bf16[2,64,32], index: 7, kind: input, shape index: {}]
  %s8 = inlined_call_operand.vmem [shape: bf16[32,68], index: 8, kind: input, shape index: {}]
  %s9 = inlined_call_operand.vmem [shape: f32[21,96], index: 9, kind: input, shape index: {}]
  %s10 = inlined_call_operand.hbm [shape: f32[2,4], index: 10, kind: output, shape index: {}]
  %s11 = sld [smem:[#allocation0]]
  $region54: #{bert_classification_forward.1} parent=0
    _
  %s13 = ssub.s32 1, %s11
  %s14 = scalar_select 0, %s13, %s11
  $region1: #{bert_classification_forward.1} parent=0
    #allocation4 [shape = 'u8[1024]{0}', space=smem, size = 0x400, scoped, tag = 'input window, operand 0, single buffered']
    #allocation5 [shape = 's32[1]{0}', space=sflag, size = 0x4, scoped, tag = 'scoped memory for bert_classification_forward.1']
    #allocation6 [shape = 's32[1]{0}', space=sflag, size = 0x4, scoped, tag = 'scoped memory for bert_classification_forward.1']
    #allocation7 [shape = 'u8[1024]{0}', space=vmem, size = 0x400, scoped, tag = 'output window, operand 0, single buffered']
    %15 = vsyncpa [#allocation6], 0
    %16 = vsyncpa [#allocation5], 0
    // Predicated region
    $region2: #{bert_classification_forward.1} parent=1 // pred_check
      _
    $region3: #{bert_classification_forward.1} parent=1 // pred_check_branch
      %18 = sbr.rel (0) target = $region5
    $region4: #{bert_classification_forward.1} parent=1 // pred_region
      %s20 = ssub.s32 32, 32
      %21 = vsyncadd [#allocation6], %s20
      %s23 = sshll.u32 %s0, 4
      %s24 = int_to_ptr.vmem [resolvable:$true] %s23
      %26 = dma.vmem_to_smem %s24, 32, [#allocation4], [#allocation6]
    $region5: #{bert_classification_forward.1} parent=1 // pred_fallthru
      _
    // Predicated region
    $region6: #{bert_classification_forward.1} parent=1 // pred_check
      _
    $region7: #{bert_classification_forward.1} parent=1 // pred_check_branch
      %28 = sbr.rel (0) target = $region9
    $region8: #{bert_classification_forward.1} parent=1 // pred_region
      _
    $region9: #{bert_classification_forward.1} parent=1 // pred_fallthru
      _
    // Predicated region
    $region10: #{bert_classification_forward.1} parent=1 // pred_check
      _
    $region11: #{bert_classification_forward.1} parent=1 // pred_check_branch
      %30 = sbr.rel (0) target = $region13
    $region12: #{bert_classification_forward.1} parent=1 // pred_region
      _
    $region13: #{bert_classification_forward.1} parent=1 // pred_fallthru
      _
    // Predicated region
    $region14: #{bert_classification_forward.1} parent=1 // pred_check
      _
    $region15: #{bert_classification_forward.1} parent=1 // pred_check_branch
      %32 = sbr.rel (0) target = $region17
    $region16: #{bert_classification_forward.1} parent=1 // pred_region
      _
    $region17: #{bert_classification_forward.1} parent=1 // pred_fallthru
      _
    // Predicated region
    $region18: #{bert_classification_forward.1} parent=1 // pred_check
      _
    $region19: #{bert_classification_forward.1} parent=1 // pred_check_branch
      %34 = sbr.rel (0) target = $region21
    $region20: #{bert_classification_forward.1} parent=1 // pred_region
      _
    $region21: #{bert_classification_forward.1} parent=1 // pred_fallthru
      _
    // Predicated region
    $region22: #{bert_classification_forward.1} parent=1 // pred_check
      _
    $region23: #{bert_classification_forward.1} parent=1 // pred_check_branch
      %36 = sbr.rel (0) target = $region25
    $region24: #{bert_classification_forward.1} parent=1 // pred_region
      _
    $region25: #{bert_classification_forward.1} parent=1 // pred_fallthru
      _
    // Predicated region
    $region26: #{bert_classification_forward.1} parent=1 // pred_check
      _
    $region27: #{bert_classification_forward.1} parent=1 // pred_check_branch
      %38 = sbr.rel (0) target = $region29
    $region28: #{bert_classification_forward.1} parent=1 // pred_region
      _
    $region29: #{bert_classification_forward.1} parent=1 // pred_fallthru
      _
    // Predicated region
    $region30: #{bert_classification_forward.1} parent=1 // pred_check
      _
    $region31: #{bert_classification_forward.1} parent=1 // pred_check_branch
      %40 = sbr.rel (0) target = $region33
    $region32: #{bert_classification_forward.1} parent=1 // pred_region
      _
    $region33: #{bert_classification_forward.1} parent=1 // pred_fallthru
      _
    // Predicated region
    $region34: #{bert_classification_forward.1} parent=1 // pred_check
      _
    $region35: #{bert_classification_forward.1} parent=1 // pred_check_branch
      %42 = sbr.rel (0) target = $region37
    $region36: #{bert_classification_forward.1} parent=1 // pred_region
      _
    $region37: #{bert_classification_forward.1} parent=1 // pred_fallthru
      _
    // Predicated region
    $region38: #{bert_classification_forward.1} parent=1 // pred_check
      _
    $region39: #{bert_classification_forward.1} parent=1 // pred_check_branch
      %44 = sbr.rel (0) target = $region41
    $region40: #{bert_classification_forward.1} parent=1 // pred_region
      _
    $region41: #{bert_classification_forward.1} parent=1 // pred_fallthru
      _
    // Predicated region
    $region42: #{bert_classification_forward.1} parent=1 // pred_check
      _
    $region43: #{bert_classification_forward.1} parent=1 // pred_check_branch
      %46 = sbr.rel (0) target = $region45
    $region44: #{bert_classification_forward.1} parent=1 // pred_region
      %47 = dma.done [#allocation6], 32
    $region45: #{bert_classification_forward.1} parent=1 // pred_fallthru
      _
    %48 = sfence
    %s50 = sld [smem:[#allocation4]]
    %s51 = scalar_lea.vmem %s2, %s50
    %v52 = vld [vmem:[%s51] sm:$0x1]
    %v53 = vld [vmem:[%s3] sm:$0x1]
    %v54 = vadd.f32 %v52, %v53
    %vm55 = vcmask 253952
    %56 = vst.msk [vmem:[#allocation2] sm:$0x1] %vm55, %v54
    %s57 = sld [smem:[#allocation4 + $0x1]]
    %s58 = scalar_lea.vmem %s2, %s57
    %v59 = vld [vmem:[%s58] sm:$0x1]
    %v60 = vld [vmem:[%s3 + $0x1] sm:$0x1]
    %v61 = vadd.f32 %v59, %v60
    %62 = vst.msk [vmem:[#allocation2 + $0x1] sm:$0x1] %vm55, %v61
    %s63 = sld [smem:[#allocation4 + $0x2]]
    %s64 = scalar_lea.vmem %s2, %s63
    %v65 = vld [vmem:[%s64] sm:$0x1]
    %v66 = vld [vmem:[%s3 + $0x2] sm:$0x1]
    %v67 = vadd.f32 %v65, %v66
    %68 = vst.msk [vmem:[#allocation2 + $0x2] sm:$0x1] %vm55, %v67
    %s69 = sld [smem:[#allocation4 + $0x3]]
    %s70 = scalar_lea.vmem %s2, %s69
    %v71 = vld [vmem:[%s70] sm:$0x1]
    %v72 = vld [vmem:[%s3 + $0x3] sm:$0x1]
    %v73 = vadd.f32 %v71, %v72
    %74 = vst.msk [vmem:[#allocation2 + $0x3] sm:$0x1] %vm55, %v73
    %s75 = sld [smem:[#allocation4 + $0x4]]
    %s76 = scalar_lea.vmem %s2, %s75
    %v77 = vld [vmem:[%s76] sm:$0x1]
    %v78 = vld [vmem:[%s3 + $0x4] sm:$0x1]
    %v79 = vadd.f32 %v77, %v78
    %80 = vst.msk [vmem:[#allocation2 + $0x4] sm:$0x1] %vm55, %v79
    %s81 = sld [smem:[#allocation4 + $0x5]]
    %s82 = scalar_lea.vmem %s2, %s81
    %v83 = vld [vmem:[%s82] sm:$0x1]
    %v84 = vld [vmem:[%s3 + $0x5] sm:$0x1]
    %v85 = vadd.f32 %v83, %v84
    %86 = vst.msk [vmem:[#allocation2 + $0x5] sm:$0x1] %vm55, %v85
    %s87 = sld [smem:[#allocation4 + $0x6]]
    %s88 = scalar_lea.vmem %s2, %s87
    %v89 = vld [vmem:[%s88] sm:$0x1]
    %v90 = vld [vmem:[%s3 + $0x6] sm:$0x1]
    %v91 = vadd.f32 %v89, %v90
    %92 = vst.msk [vmem:[#allocation2 + $0x6] sm:$0x1] %vm55, %v91
    %s93 = sld [smem:[#allocation4 + $0x7]]
    %s94 = scalar_lea.vmem %s2, %s93
    %v95 = vld [vmem:[%s94] sm:$0x1]
    %v96 = vld [vmem:[%s3 + $0x7] sm:$0x1]
    %v97 = vadd.f32 %v95, %v96
    %98 = vst.msk [vmem:[#allocation2 + $0x7] sm:$0x1] %vm55, %v97
    %s99 = sld [smem:[#allocation4 + $0x80]]
    %s100 = scalar_lea.vmem %s2, %s99
    %v101 = vld [vmem:[%s100] sm:$0x1]
    %v102 = vld [vmem:[%s3] sm:$0x1]
    %v103 = vadd.f32 %v101, %v102
    %104 = vst.msk [vmem:[#allocation2 + $0x8] sm:$0x1] %vm55, %v103
    %s105 = sld [smem:[#allocation4 + $0x81]]
    %s106 = scalar_lea.vmem %s2, %s105
    %v107 = vld [vmem:[%s106] sm:$0x1]
    %v108 = vld [vmem:[%s3 + $0x1] sm:$0x1]
    %v109 = vadd.f32 %v107, %v108
    %110 = vst.msk [vmem:[#allocation2 + $0x9] sm:$0x1] %vm55, %v109
    %s111 = sld [smem:[#allocation4 + $0x82]]
    %s112 = scalar_lea.vmem %s2, %s111
    %v113 = vld [vmem:[%s112] sm:$0x1]
    %v114 = vld [vmem:[%s3 + $0x2] sm:$0x1]
    %v115 = vadd.f32 %v113, %v114
    %116 = vst.msk [vmem:[#allocation2 + $0xa] sm:$0x1] %vm55, %v115
    %s117 = sld [smem:[#allocation4 + $0x83]]
    %s118 = scalar_lea.vmem %s2, %s117
    %v119 = vld [vmem:[%s118] sm:$0x1]
    %v120 = vld [vmem:[%s3 + $0x3] sm:$0x1]
    %v121 = vadd.f32 %v119, %v120
    %122 = vst.msk [vmem:[#allocation2 + $0xb] sm:$0x1] %vm55, %v121
    %s123 = sld [smem:[#allocation4 + $0x84]]
    %s124 = scalar_lea.vmem %s2, %s123
    %v125 = vld [vmem:[%s124] sm:$0x1]
    %v126 = vld [vmem:[%s3 + $0x4] sm:$0x1]
    %v127 = vadd.f32 %v125, %v126
    %128 = vst.msk [vmem:[#allocation2 + $0xc] sm:$0x1] %vm55, %v127
    %s129 = sld [smem:[#allocation4 + $0x85]]
    %s130 = scalar_lea.vmem %s2, %s129
    %v131 = vld [vmem:[%s130] sm:$0x1]
    %v132 = vld [vmem:[%s3 + $0x5] sm:$0x1]
    %v133 = vadd.f32 %v131, %v132
    %134 = vst.msk [vmem:[#allocation2 + $0xd] sm:$0x1] %vm55, %v133
    %s135 = sld [smem:[#allocation4 + $0x86]]
    %s136 = scalar_lea.vmem %s2, %s135
    %v137 = vld [vmem:[%s136] sm:$0x1]
    %v138 = vld [vmem:[%s3 + $0x6] sm:$0x1]
    %v139 = vadd.f32 %v137, %v138
    %140 = vst.msk [vmem:[#allocation2 + $0xe] sm:$0x1] %vm55, %v139
    %s141 = sld [smem:[#allocation4 + $0x87]]
    %s142 = scalar_lea.vmem %s2, %s141
    %v143 = vld [vmem:[%s142] sm:$0x1]
    %v144 = vld [vmem:[%s3 + $0x7] sm:$0x1]
    %v145 = vadd.f32 %v143, %v144
    %146 = vst.msk [vmem:[#allocation2 + $0xf] sm:$0x1] %vm55, %v145
    %v147 = vld [vmem:[#allocation2] sm:$0xff]
    %v148 = vld [vmem:[#allocation2 + $0x8] sm:$0xff]
    %v149 = vld [vmem:[%s9] sm:$0x1]
    %v150 = vld [vmem:[%s9 + $0x1] sm:$0x1]
    %vm151 = vcmask 261120
    %v152 = vsel %vm151, %v147, 0.0
    %153 = vadd.xlane.f32.xlu0 %v152
    %v154 = vpop.xlane.xlu0 %153
    %v155 = vsel %vm151, %v148, 0.0
    %156 = vadd.xlane.f32.xlu0 %v155
    %v157 = vpop.xlane.xlu0 %156
    %v158 = vrcp.pop 32.0
    %v159 = vmul.f32 %v154, %v158
    %v160 = vmul.f32 %v157, %v158
    %v161 = vsub.f32 %v147, %v159
    %v162 = vsub.f32 %v148, %v160
    %v163 = vmul.f32 %v161, %v161
    %v164 = vmul.f32 %v162, %v162
    %v165 = vsel %vm151, %v163, 0.0
    %166 = vadd.xlane.f32.xlu0 %v165
    %v167 = vpop.xlane.xlu0 %166
    %v168 = vsel %vm151, %v164, 0.0
    %169 = vadd.xlane.f32.xlu0 %v168
    %v170 = vpop.xlane.xlu0 %169
    %v171 = vmul.f32 %v167, %v158
    %v172 = vmul.f32 %v170, %v158
    %v173 = vadd.f32 %v171, 1e-12
    %v174 = vadd.f32 %v172, 1e-12
    %v175 = vrsqrt.pop %v173
    %v176 = vrsqrt.pop %v174
    %v177 = vmul.f32 %v161, %v175
    %v178 = vmul.f32 %v162, %v176
    %v179 = vlaneseq
    %v180 = vshrl.u32 %v179, 7
    %v181 = vsub.s32 0, %v180
    %v182 = vrot.slane %v149, %v181
    %v183 = vmul.f32 %v177, %v182
    %v184 = vmul.f32 %v178, %v182
    %v185 = vlaneseq
    %v186 = vshrl.u32 %v185, 7
    %v187 = vsub.s32 0, %v186
    %v188 = vrot.slane %v150, %v187
    %v189 = vadd.f32 %v183, %v188
    %v190 = vadd.f32 %v184, %v188
    %v191 = vld [vmem:[%s4] sm:$0xf]
    %v192 = vld [vmem:[%s4 + $0x4] sm:$0xf]
    %v193 = vld [vmem:[%s4 + $0x8] sm:$0xf]
    %v194 = vld [vmem:[%s4 + $0xc] sm:$0xf]
    %v195 = vpack.c.bf16 %v190, %v189
    %v196 = vld [vmem:[%s9 + $0x2] sm:$0x1]
    %v197 = vlaneseq
    %v198 = vshrl.u32 %v197, 7
    %v199 = vsub.s32 0, %v198
    %v200 = vrot.slane %v196, %v199
    %v205 = vunpack.c.l.b16 %v191
    %v206 = vunpack.c.l.b16 %v192
    %v207 = vunpack.c.l.b16 %v193
    %v208 = vunpack.c.l.b16 %v194
    %v209 = vpack.c.b16 %v206, %v205
    %v210 = vpack.c.b16 %v208, %v207
    %v214 = vsel %vm151, %v195, 0
    %216 = vmatprep.subr.bf16.mxu0 0
    %217 = vmatpush1.bf16.msra.mxu0 %v209
    %218 = vmatprep.subr.bf16.mxu0 0
    %219 = vmatpush1.bf16.msra.mxu0 %v210
    %220 = vmatprep.subr.bf16.mxu0 0
    %221 = vmatpush1.bf16.msra.mxu0 0
    %222 = vmatprep.subr.bf16.mxu0 0
    %223 = vmatpush1.bf16.msra.mxu0 0
    %224 = vmatprep.subr.bf16.mxu0 0
    %225 = vmatpush1.bf16.msra.mxu0 0
    %226 = vmatprep.subr.bf16.mxu0 0
    %227 = vmatpush1.bf16.msra.mxu0 0
    %228 = vmatprep.subr.bf16.mxu0 0
    %229 = vmatpush1.bf16.msra.mxu0 0
    %230 = vmatprep.subr.bf16.mxu0 0
    %231 = vmatpush1.bf16.msra.mxu0 0
    %232 = vmatprep.subr.bf16.mxu0 0
    %233 = vmatpush1.bf16.msra.mxu0 0
    %234 = vmatprep.subr.bf16.mxu0 0
    %235 = vmatpush1.bf16.msra.mxu0 0
    %236 = vmatprep.subr.bf16.mxu0 0
    %237 = vmatpush1.bf16.msra.mxu0 0
    %238 = vmatprep.subr.bf16.mxu0 0
    %239 = vmatpush1.bf16.msra.mxu0 0
    %240 = vmatprep.subr.bf16.mxu0 0
    %241 = vmatpush1.bf16.msra.mxu0 0
    %242 = vmatprep.subr.bf16.mxu0 0
    %243 = vmatpush1.bf16.msra.mxu0 0
    %244 = vmatprep.subr.bf16.mxu0 0
    %245 = vmatpush1.bf16.msra.mxu0 0
    %246 = vmatprep.subr.bf16.mxu0 0
    %247 = vmatpush1.bf16.msra.mxu0 0
    %248 = vmatprep.mubr.bf16.mxu0 0
    %249 = vmatmul.mubr.bf16.gmra.mrb[0].mxu0 %v214
    %v250 = vpop.f32.mrb[0].mxu0
    %v251 = vadd.f32 %v200, %v250
    %v252 = vpop.f32.mrb[0].mxu0
    %v253 = vpop.f32.mrb[0].mxu0
    %v254 = vadd.f32 %v200, %v253
    %v255 = vpop.f32.mrb[0].mxu0
    %256 = vdwg.mxu0
    %v257 = vld [vmem:[%s1] sm:$0x1]
    %v258 = vsub.f32 1.0, %v257
    %v259 = vmul.f32 %v258, -10000.0
    %261 = vrot.lane.b32.xlu0 %v251, 96
    %v262 = vpop.permute.xlu0 %261
    %vm263 = vcmask 64512
    %v264 = vsel %vm263, %v251, 0
    %v266 = vsel %vm263, %v262, 0
    %268 = vmatprep.subr.mxu0 0.0
    %269 = vmatpush1.xpose.msra.mxu0 %v266
    %270 = vmatprep.subr.mxu0 0.0
    %271 = vmatpush1.xpose.msra.mxu0 0.0
    %272 = vmatprep.subr.mxu0 0.0
    %273 = vmatpush1.xpose.msra.mxu0 0.0
    %274 = vmatprep.subr.mxu0 0.0
    %275 = vmatpush1.xpose.msra.mxu0 0.0
    %276 = vmatprep.subr.mxu0 0.0
    %277 = vmatpush1.xpose.msra.mxu0 0.0
    %278 = vmatprep.subr.mxu0 0.0
    %279 = vmatpush1.xpose.msra.mxu0 0.0
    %280 = vmatprep.subr.mxu0 0.0
    %281 = vmatpush1.xpose.msra.mxu0 0.0
    %282 = vmatprep.subr.mxu0 0.0
    %283 = vmatpush1.xpose.msra.mxu0 0.0
    %284 = vmatprep.subr.mxu0 0.0
    %285 = vmatpush1.xpose.msra.mxu0 0.0
    %286 = vmatprep.subr.mxu0 0.0
    %287 = vmatpush1.xpose.msra.mxu0 0.0
    %288 = vmatprep.subr.mxu0 0.0
    %289 = vmatpush1.xpose.msra.mxu0 0.0
    %290 = vmatprep.subr.mxu0 0.0
    %291 = vmatpush1.xpose.msra.mxu0 0.0
    %292 = vmatprep.subr.mxu0 0.0
    %293 = vmatpush1.xpose.msra.mxu0 0.0
    %294 = vmatprep.subr.mxu0 0.0
    %295 = vmatpush1.xpose.msra.mxu0 0.0
    %296 = vmatprep.subr.mxu0 0.0
    %297 = vmatpush1.xpose.msra.mxu0 0.0
    %298 = vmatprep.subr.mxu0 0.0
    %299 = vmatpush1.xpose.msra.mxu0 0.0
    %300 = vmatprep.subr.mxu0 0.0
    %301 = vmatpush1.xpose.msra.mxu0 0.0
    %302 = vmatprep.subr.mxu0 0.0
    %303 = vmatpush1.xpose.msra.mxu0 0.0
    %304 = vmatprep.subr.mxu0 0.0
    %305 = vmatpush1.xpose.msra.mxu0 0.0
    %306 = vmatprep.subr.mxu0 0.0
    %307 = vmatpush1.xpose.msra.mxu0 0.0
    %308 = vmatprep.subr.mxu0 0.0
    %309 = vmatpush1.xpose.msra.mxu0 0.0
    %310 = vmatprep.subr.mxu0 0.0
    %311 = vmatpush1.xpose.msra.mxu0 0.0
    %312 = vmatprep.subr.mxu0 0.0
    %313 = vmatpush1.xpose.msra.mxu0 0.0
    %314 = vmatprep.subr.mxu0 0.0
    %315 = vmatpush1.xpose.msra.mxu0 0.0
    %316 = vmatprep.subr.mxu0 0.0
    %317 = vmatpush1.xpose.msra.mxu0 0.0
    %318 = vmatprep.subr.mxu0 0.0
    %319 = vmatpush1.xpose.msra.mxu0 0.0
    %320 = vmatprep.subr.mxu0 0.0
    %321 = vmatpush1.xpose.msra.mxu0 0.0
    %322 = vmatprep.subr.mxu0 0.0
    %323 = vmatpush1.xpose.msra.mxu0 0.0
    %324 = vmatprep.subr.mxu0 0.0
    %325 = vmatpush1.xpose.msra.mxu0 0.0
    %326 = vmatprep.subr.mxu0 0.0
    %327 = vmatpush1.xpose.msra.mxu0 0.0
    %328 = vmatprep.subr.mxu0 0.0
    %329 = vmatpush1.xpose.msra.mxu0 0.0
    %330 = vmatprep.subr.mxu0 0.0
    %331 = vmatpush1.xpose.msra.mxu0 0.0
    %332 = vmatprep.mubr.f32.mxu0 0.0
    %333 = vmatmul.mubr.f32.gmra.mrb[0].mxu0 %v264
    %v334 = vpop.f32.mrb[0].mxu0
    %v335 = vadd.f32 0.0, %v334
    %v336 = vpop.f32.mrb[0].mxu0
    %337 = vdwg.mxu0
    %v338 = vmul.f32 %v335, 0.35355338
    %v339 = vlaneseq
    %v340 = vshrl.u32 %v339, 7
    %v341 = vsub.s32 0, %v340
    %v342 = vrot.slane %v259, %v341
    %v343 = vadd.f32 %v338, %v342
    %v344 = vsel %vm263, %v343, -inf
    %345 = vmax.xlane.f32.xlu0 %v344
    %v346 = vpop.xlane.xlu0 %345
    %v347 = vsub.f32 %v343, %v346
    %v348 = vmul.f32 %v347, 1.442695
    %v349 = vpow.pop %v348
    %v350 = vsel %vm263, %v349, 0.0
    %351 = vadd.xlane.f32.xlu0 %v350
    %v352 = vpop.xlane.xlu0 %351
    %v353 = vrcp.pop %v352
    %v354 = vmul.f32 %v349, %v353
    %355 = vrot.lane.b32.xlu0 %v251, 64
    %v356 = vpop.permute.xlu0 %355
    %v359 = vsel %vm263, %v354, 0
    %361 = vmatprep.subr.mxu0 0.0
    %362 = vmatpush1.msra.mxu0 %v356
    %363 = vmatprep.subr.mxu0 0.0
    %364 = vmatpush1.msra.mxu0 0.0
    %365 = vmatprep.subr.mxu0 0.0
    %366 = vmatpush1.msra.mxu0 0.0
    %367 = vmatprep.subr.mxu0 0.0
    %368 = vmatpush1.msra.mxu0 0.0
    %369 = vmatprep.subr.mxu0 0.0
    %370 = vmatpush1.msra.mxu0 0.0
    %371 = vmatprep.subr.mxu0 0.0
    %372 = vmatpush1.msra.mxu0 0.0
    %373 = vmatprep.subr.mxu0 0.0
    %374 = vmatpush1.msra.mxu0 0.0
    %375 = vmatprep.subr.mxu0 0.0
    %376 = vmatpush1.msra.mxu0 0.0
    %377 = vmatprep.subr.mxu0 0.0
    %378 = vmatpush1.msra.mxu0 0.0
    %379 = vmatprep.subr.mxu0 0.0
    %380 = vmatpush1.msra.mxu0 0.0
    %381 = vmatprep.subr.mxu0 0.0
    %382 = vmatpush1.msra.mxu0 0.0
    %383 = vmatprep.subr.mxu0 0.0
    %384 = vmatpush1.msra.mxu0 0.0
    %385 = vmatprep.subr.mxu0 0.0
    %386 = vmatpush1.msra.mxu0 0.0
    %387 = vmatprep.subr.mxu0 0.0
    %388 = vmatpush1.msra.mxu0 0.0
    %389 = vmatprep.subr.mxu0 0.0
    %390 = vmatpush1.msra.mxu0 0.0
    %391 = vmatprep.subr.mxu0 0.0
    %392 = vmatpush1.msra.mxu0 0.0
    %393 = vmatprep.subr.mxu0 0.0
    %394 = vmatpush1.msra.mxu0 0.0
    %395 = vmatprep.subr.mxu0 0.0
    %396 = vmatpush1.msra.mxu0 0.0
    %397 = vmatprep.subr.mxu0 0.0
    %398 = vmatpush1.msra.mxu0 0.0
    %399 = vmatprep.subr.mxu0 0.0
    %400 = vmatpush1.msra.mxu0 0.0
    %401 = vmatprep.subr.mxu0 0.0
    %402 = vmatpush1.msra.mxu0 0.0
    %403 = vmatprep.subr.mxu0 0.0
    %404 = vmatpush1.msra.mxu0 0.0
    %405 = vmatprep.subr.mxu0 0.0
    %406 = vmatpush1.msra.mxu0 0.0
    %407 = vmatprep.subr.mxu0 0.0
    %408 = vmatpush1.msra.mxu0 0.0
    %409 = vmatprep.subr.mxu0 0.0
    %410 = vmatpush1.msra.mxu0 0.0
    %411 = vmatprep.subr.mxu0 0.0
    %412 = vmatpush1.msra.mxu0 0.0
    %413 = vmatprep.subr.mxu0 0.0
    %414 = vmatpush1.msra.mxu0 0.0
    %415 = vmatprep.subr.mxu0 0.0
    %416 = vmatpush1.msra.mxu0 0.0
    %417 = vmatprep.subr.mxu0 0.0
    %418 = vmatpush1.msra.mxu0 0.0
    %419 = vmatprep.subr.mxu0 0.0
    %420 = vmatpush1.msra.mxu0 0.0
    %421 = vmatprep.subr.mxu0 0.0
    %422 = vmatpush1.msra.mxu0 0.0
    %423 = vmatprep.subr.mxu0 0.0
    %424 = vmatpush1.msra.mxu0 0.0
    %425 = vmatprep.mubr.f32.mxu0 0.0
    %426 = vmatmul.mubr.f32.gmra.mrb[0].mxu0 %v359
    %v427 = vpop.f32.mrb[0].mxu0
    %v428 = vadd.f32 0.0, %v427
    %v429 = vpop.f32.mrb[0].mxu0
    %430 = vdwg.mxu0
    %431 = vst.msk [vmem:[#allocation3] sm:$0xff] %vm263, %v428
    %432 = vrot.lane.b32.xlu0 %v251, 120
    %v433 = vpop.permute.xlu0 %432
    %434 = vrot.lane.b32.xlu0 %v251, 88
    %v435 = vpop.permute.xlu0 %434
    %v436 = vsel %vm263, %v433, 0
    %v438 = vsel %vm263, %v435, 0
    %440 = vmatprep.subr.mxu0 0.0
    %441 = vmatpush1.xpose.msra.mxu0 %v438
    %442 = vmatprep.subr.mxu0 0.0
    %443 = vmatpush1.xpose.msra.mxu0 0.0
    %444 = vmatprep.subr.mxu0 0.0
    %445 = vmatpush1.xpose.msra.mxu0 0.0
    %446 = vmatprep.subr.mxu0 0.0
    %447 = vmatpush1.xpose.msra.mxu0 0.0
    %448 = vmatprep.subr.mxu0 0.0
    %449 = vmatpush1.xpose.msra.mxu0 0.0
    %450 = vmatprep.subr.mxu0 0.0
    %451 = vmatpush1.xpose.msra.mxu0 0.0
    %452 = vmatprep.subr.mxu0 0.0
    %453 = vmatpush1.xpose.msra.mxu0 0.0
    %454 = vmatprep.subr.mxu0 0.0
    %455 = vmatpush1.xpose.msra.mxu0 0.0
    %456 = vmatprep.subr.mxu0 0.0
    %457 = vmatpush1.xpose.msra.mxu0 0.0
    %458 = vmatprep.subr.mxu0 0.0
    %459 = vmatpush1.xpose.msra.mxu0 0.0
    %460 = vmatprep.subr.mxu0 0.0
    %461 = vmatpush1.xpose.msra.mxu0 0.0
    %462 = vmatprep.subr.mxu0 0.0
    %463 = vmatpush1.xpose.msra.mxu0 0.0
    %464 = vmatprep.subr.mxu0 0.0
    %465 = vmatpush1.xpose.msra.mxu0 0.0
    %466 = vmatprep.subr.mxu0 0.0
    %467 = vmatpush1.xpose.msra.mxu0 0.0
    %468 = vmatprep.subr.mxu0 0.0
    %469 = vmatpush1.xpose.msra.mxu0 0.0
    %470 = vmatprep.subr.mxu0 0.0
    %471 = vmatpush1.xpose.msra.mxu0 0.0
    %472 = vmatprep.subr.mxu0 0.0
    %473 = vmatpush1.xpose.msra.mxu0 0.0
    %474 = vmatprep.subr.mxu0 0.0
    %475 = vmatpush1.xpose.msra.mxu0 0.0
    %476 = vmatprep.subr.mxu0 0.0
    %477 = vmatpush1.xpose.msra.mxu0 0.0
    %478 = vmatprep.subr.mxu0 0.0
    %479 = vmatpush1.xpose.msra.mxu0 0.0
    %480 = vmatprep.subr.mxu0 0.0
    %481 = vmatpush1.xpose.msra.mxu0 0.0
    %482 = vmatprep.subr.mxu0 0.0
    %483 = vmatpush1.xpose.msra.mxu0 0.0
    %484 = vmatprep.subr.mxu0 0.0
    %485 = vmatpush1.xpose.msra.mxu0 0.0
    %486 = vmatprep.subr.mxu0 0.0
    %487 = vmatpush1.xpose.msra.mxu0 0.0
    %488 = vmatprep.subr.mxu0 0.0
    %489 = vmatpush1.xpose.msra.mxu0 0.0
    %490 = vmatprep.subr.mxu0 0.0
    %491 = vmatpush1.xpose.msra.mxu0 0.0
    %492 = vmatprep.subr.mxu0 0.0
    %493 = vmatpush1.xpose.msra.mxu0 0.0
    %494 = vmatprep.subr.mxu0 0.0
    %495 = vmatpush1.xpose.msra.mxu0 0.0
    %496 = vmatprep.subr.mxu0 0.0
    %497 = vmatpush1.xpose.msra.mxu0 0.0
    %498 = vmatprep.subr.mxu0 0.0
    %499 = vmatpush1.xpose.msra.mxu0 0.0
    %500 = vmatprep.subr.mxu0 0.0
    %501 = vmatpush1.xpose.msra.mxu0 0.0
    %502 = vmatprep.subr.mxu0 0.0
    %503 = vmatpush1.xpose.msra.mxu0 0.0
    %504 = vmatprep.mubr.f32.mxu0 0.0
    %505 = vmatmul.mubr.f32.gmra.mrb[0].mxu0 %v436
    %v506 = vpop.f32.mrb[0].mxu0
    %v507 = vadd.f32 0.0, %v506
    %v508 = vpop.f32.mrb[0].mxu0
    %509 = vdwg.mxu0
    %v510 = vmul.f32 %v507, 0.35355338
    %v511 = vadd.f32 %v510, %v342
    %v512 = vsel %vm263, %v511, -inf
    %513 = vmax.xlane.f32.xlu0 %v512
    %v514 = vpop.xlane.xlu0 %513
    %v515 = vsub.f32 %v511, %v514
    %v516 = vmul.f32 %v515, 1.442695
    %v517 = vpow.pop %v516
    %v518 = vsel %vm263, %v517, 0.0
    %519 = vadd.xlane.f32.xlu0 %v518
    %v520 = vpop.xlane.xlu0 %519
    %v521 = vrcp.pop %v520
    %v522 = vmul.f32 %v517, %v521
    %523 = vrot.lane.b32.xlu0 %v251, 56
    %v524 = vpop.permute.xlu0 %523
    %v527 = vsel %vm263, %v522, 0
    %529 = vmatprep.subr.mxu0 0.0
    %530 = vmatpush1.msra.mxu0 %v524
    %531 = vmatprep.subr.mxu0 0.0
    %532 = vmatpush1.msra.mxu0 0.0
    %533 = vmatprep.subr.mxu0 0.0
    %534 = vmatpush1.msra.mxu0 0.0
    %535 = vmatprep.subr.mxu0 0.0
    %536 = vmatpush1.msra.mxu0 0.0
    %537 = vmatprep.subr.mxu0 0.0
    %538 = vmatpush1.msra.mxu0 0.0
    %539 = vmatprep.subr.mxu0 0.0
    %540 = vmatpush1.msra.mxu0 0.0
    %541 = vmatprep.subr.mxu0 0.0
    %542 = vmatpush1.msra.mxu0 0.0
    %543 = vmatprep.subr.mxu0 0.0
    %544 = vmatpush1.msra.mxu0 0.0
    %545 = vmatprep.subr.mxu0 0.0
    %546 = vmatpush1.msra.mxu0 0.0
    %547 = vmatprep.subr.mxu0 0.0
    %548 = vmatpush1.msra.mxu0 0.0
    %549 = vmatprep.subr.mxu0 0.0
    %550 = vmatpush1.msra.mxu0 0.0
    %551 = vmatprep.subr.mxu0 0.0
    %552 = vmatpush1.msra.mxu0 0.0
    %553 = vmatprep.subr.mxu0 0.0
    %554 = vmatpush1.msra.mxu0 0.0
    %555 = vmatprep.subr.mxu0 0.0
    %556 = vmatpush1.msra.mxu0 0.0
    %557 = vmatprep.subr.mxu0 0.0
    %558 = vmatpush1.msra.mxu0 0.0
    %559 = vmatprep.subr.mxu0 0.0
    %560 = vmatpush1.msra.mxu0 0.0
    %561 = vmatprep.subr.mxu0 0.0
    %562 = vmatpush1.msra.mxu0 0.0
    %563 = vmatprep.subr.mxu0 0.0
    %564 = vmatpush1.msra.mxu0 0.0
    %565 = vmatprep.subr.mxu0 0.0
    %566 = vmatpush1.msra.mxu0 0.0
    %567 = vmatprep.subr.mxu0 0.0
    %568 = vmatpush1.msra.mxu0 0.0
    %569 = vmatprep.subr.mxu0 0.0
    %570 = vmatpush1.msra.mxu0 0.0
    %571 = vmatprep.subr.mxu0 0.0
    %572 = vmatpush1.msra.mxu0 0.0
    %573 = vmatprep.subr.mxu0 0.0
    %574 = vmatpush1.msra.mxu0 0.0
    %575 = vmatprep.subr.mxu0 0.0
    %576 = vmatpush1.msra.mxu0 0.0
    %577 = vmatprep.subr.mxu0 0.0
    %578 = vmatpush1.msra.mxu0 0.0
    %579 = vmatprep.subr.mxu0 0.0
    %580 = vmatpush1.msra.mxu0 0.0
    %581 = vmatprep.subr.mxu0 0.0
    %582 = vmatpush1.msra.mxu0 0.0
    %583 = vmatprep.subr.mxu0 0.0
    %584 = vmatpush1.msra.mxu0 0.0
    %585 = vmatprep.subr.mxu0 0.0
    %586 = vmatpush1.msra.mxu0 0.0
    %587 = vmatprep.subr.mxu0 0.0
    %588 = vmatpush1.msra.mxu0 0.0
    %589 = vmatprep.subr.mxu0 0.0
    %590 = vmatpush1.msra.mxu0 0.0
    %591 = vmatprep.subr.mxu0 0.0
    %592 = vmatpush1.msra.mxu0 0.0
    %593 = vmatprep.mubr.f32.mxu0 0.0
    %594 = vmatmul.mubr.f32.gmra.mrb[0].mxu0 %v527
    %v595 = vpop.f32.mrb[0].mxu0
    %v596 = vadd.f32 0.0, %v595
    %v597 = vpop.f32.mrb[0].mxu0
    %598 = vdwg.mxu0
    %600 = vrot.lane.b32.xlu0 %v596, 8
    %v601 = vpop.permute.xlu0 %600
    %vm603 = vcmask 130112
    %604 = vst.msk [vmem:[#allocation3] sm:$0xff] %vm603, %v601
    %605 = vrot.lane.b32.xlu0 %v251, 112
    %v606 = vpop.permute.xlu0 %605
    %607 = vrot.lane.b32.xlu0 %v251, 80
    %v608 = vpop.permute.xlu0 %607
    %v609 = vsel %vm263, %v606, 0
    %v611 = vsel %vm263, %v608, 0
    %613 = vmatprep.subr.mxu0 0.0
    %614 = vmatpush1.xpose.msra.mxu0 %v611
    %615 = vmatprep.subr.mxu0 0.0
    %616 = vmatpush1.xpose.msra.mxu0 0.0
    %617 = vmatprep.subr.mxu0 0.0
    %618 = vmatpush1.xpose.msra.mxu0 0.0
    %619 = vmatprep.subr.mxu0 0.0
    %620 = vmatpush1.xpose.msra.mxu0 0.0
    %621 = vmatprep.subr.mxu0 0.0
    %622 = vmatpush1.xpose.msra.mxu0 0.0
    %623 = vmatprep.subr.mxu0 0.0
    %624 = vmatpush1.xpose.msra.mxu0 0.0
    %625 = vmatprep.subr.mxu0 0.0
    %626 = vmatpush1.xpose.msra.mxu0 0.0
    %627 = vmatprep.subr.mxu0 0.0
    %628 = vmatpush1.xpose.msra.mxu0 0.0
    %629 = vmatprep.subr.mxu0 0.0
    %630 = vmatpush1.xpose.msra.mxu0 0.0
    %631 = vmatprep.subr.mxu0 0.0
    %632 = vmatpush1.xpose.msra.mxu0 0.0
    %633 = vmatprep.subr.mxu0 0.0
    %634 = vmatpush1.xpose.msra.mxu0 0.0
    %635 = vmatprep.subr.mxu0 0.0
    %636 = vmatpush1.xpose.msra.mxu0 0.0
    %637 = vmatprep.subr.mxu0 0.0
    %638 = vmatpush1.xpose.msra.mxu0 0.0
    %639 = vmatprep.subr.mxu0 0.0
    %640 = vmatpush1.xpose.msra.mxu0 0.0
    %641 = vmatprep.subr.mxu0 0.0
    %642 = vmatpush1.xpose.msra.mxu0 0.0
    %643 = vmatprep.subr.mxu0 0.0
    %644 = vmatpush1.xpose.msra.mxu0 0.0
    %645 = vmatprep.subr.mxu0 0.0
    %646 = vmatpush1.xpose.msra.mxu0 0.0
    %647 = vmatprep.subr.mxu0 0.0
    %648 = vmatpush1.xpose.msra.mxu0 0.0
    %649 = vmatprep.subr.mxu0 0.0
    %650 = vmatpush1.xpose.msra.mxu0 0.0
    %651 = vmatprep.subr.mxu0 0.0
    %652 = vmatpush1.xpose.msra.mxu0 0.0
    %653 = vmatprep.subr.mxu0 0.0
    %654 = vmatpush1.xpose.msra.mxu0 0.0
    %655 = vmatprep.subr.mxu0 0.0
    %656 = vmatpush1.xpose.msra.mxu0 0.0
    %657 = vmatprep.subr.mxu0 0.0
    %658 = vmatpush1.xpose.msra.mxu0 0.0
    %659 = vmatprep.subr.mxu0 0.0
    %660 = vmatpush1.xpose.msra.mxu0 0.0
    %661 = vmatprep.subr.mxu0 0.0
    %662 = vmatpush1.xpose.msra.mxu0 0.0
    %663 = vmatprep.subr.mxu0 0.0
    %664 = vmatpush1.xpose.msra.mxu0 0.0
    %665 = vmatprep.subr.mxu0 0.0
    %666 = vmatpush1.xpose.msra.mxu0 0.0
    %667 = vmatprep.subr.mxu0 0.0
    %668 = vmatpush1.xpose.msra.mxu0 0.0
    %669 = vmatprep.subr.mxu0 0.0
    %670 = vmatpush1.xpose.msra.mxu0 0.0
    %671 = vmatprep.subr.mxu0 0.0
    %672 = vmatpush1.xpose.msra.mxu0 0.0
    %673 = vmatprep.subr.mxu0 0.0
    %674 = vmatpush1.xpose.msra.mxu0 0.0
    %675 = vmatprep.subr.mxu0 0.0
    %676 = vmatpush1.xpose.msra.mxu0 0.0
    %677 = vmatprep.mubr.f32.mxu0 0.0
    %678 = vmatmul.mubr.f32.gmra.mrb[0].mxu0 %v609
    %v679 = vpop.f32.mrb[0].mxu0
    %v680 = vadd.f32 0.0, %v679
    %v681 = vpop.f32.mrb[0].mxu0
    %682 = vdwg.mxu0
    %v683 = vmul.f32 %v680, 0.35355338
    %v684 = vadd.f32 %v683, %v342
    %v685 = vsel %vm263, %v684, -inf
    %686 = vmax.xlane.f32.xlu0 %v685
    %v687 = vpop.xlane.xlu0 %686
    %v688 = vsub.f32 %v684, %v687
    %v689 = vmul.f32 %v688, 1.442695
    %v690 = vpow.pop %v689
    %v691 = vsel %vm263, %v690, 0.0
    %692 = vadd.xlane.f32.xlu0 %v691
    %v693 = vpop.xlane.xlu0 %692
    %v694 = vrcp.pop %v693
    %v695 = vmul.f32 %v690, %v694
    %696 = vrot.lane.b32.xlu0 %v251, 48
    %v697 = vpop.permute.xlu0 %696
    %v700 = vsel %vm263, %v695, 0
    %702 = vmatprep.subr.mxu0 0.0
    %703 = vmatpush1.msra.mxu0 %v697
    %704 = vmatprep.subr.mxu0 0.0
    %705 = vmatpush1.msra.mxu0 0.0
    %706 = vmatprep.subr.mxu0 0.0
    %707 = vmatpush1.msra.mxu0 0.0
    %708 = vmatprep.subr.mxu0 0.0
    %709 = vmatpush1.msra.mxu0 0.0
    %710 = vmatprep.subr.mxu0 0.0
    %711 = vmatpush1.msra.mxu0 0.0
    %712 = vmatprep.subr.mxu0 0.0
    %713 = vmatpush1.msra.mxu0 0.0
    %714 = vmatprep.subr.mxu0 0.0
    %715 = vmatpush1.msra.mxu0 0.0
    %716 = vmatprep.subr.mxu0 0.0
    %717 = vmatpush1.msra.mxu0 0.0
    %718 = vmatprep.subr.mxu0 0.0
    %719 = vmatpush1.msra.mxu0 0.0
    %720 = vmatprep.subr.mxu0 0.0
    %721 = vmatpush1.msra.mxu0 0.0
    %722 = vmatprep.subr.mxu0 0.0
    %723 = vmatpush1.msra.mxu0 0.0
    %724 = vmatprep.subr.mxu0 0.0
    %725 = vmatpush1.msra.mxu0 0.0
    %726 = vmatprep.subr.mxu0 0.0
    %727 = vmatpush1.msra.mxu0 0.0
    %728 = vmatprep.subr.mxu0 0.0
    %729 = vmatpush1.msra.mxu0 0.0
    %730 = vmatprep.subr.mxu0 0.0
    %731 = vmatpush1.msra.mxu0 0.0
    %732 = vmatprep.subr.mxu0 0.0
    %733 = vmatpush1.msra.mxu0 0.0
    %734 = vmatprep.subr.mxu0 0.0
    %735 = vmatpush1.msra.mxu0 0.0
    %736 = vmatprep.subr.mxu0 0.0
    %737 = vmatpush1.msra.mxu0 0.0
    %738 = vmatprep.subr.mxu0 0.0
    %739 = vmatpush1.msra.mxu0 0.0
    %740 = vmatprep.subr.mxu0 0.0
    %741 = vmatpush1.msra.mxu0 0.0
    %742 = vmatprep.subr.mxu0 0.0
    %743 = vmatpush1.msra.mxu0 0.0
    %744 = vmatprep.subr.mxu0 0.0
    %745 = vmatpush1.msra.mxu0 0.0
    %746 = vmatprep.subr.mxu0 0.0
    %747 = vmatpush1.msra.mxu0 0.0
    %748 = vmatprep.subr.mxu0 0.0
    %749 = vmatpush1.msra.mxu0 0.0
    %750 = vmatprep.subr.mxu0 0.0
    %751 = vmatpush1.msra.mxu0 0.0
    %752 = vmatprep.subr.mxu0 0.0
    %753 = vmatpush1.msra.mxu0 0.0
    %754 = vmatprep.subr.mxu0 0.0
    %755 = vmatpush1.msra.mxu0 0.0
    %756 = vmatprep.subr.mxu0 0.0
    %757 = vmatpush1.msra.mxu0 0.0
    %758 = vmatprep.subr.mxu0 0.0
    %759 = vmatpush1.msra.mxu0 0.0
    %760 = vmatprep.subr.mxu0 0.0
    %761 = vmatpush1.msra.mxu0 0.0
    %762 = vmatprep.subr.mxu0 0.0
    %763 = vmatpush1.msra.mxu0 0.0
    %764 = vmatprep.subr.mxu0 0.0
    %765 = vmatpush1.msra.mxu0 0.0
    %766 = vmatprep.mubr.f32.mxu0 0.0
    %767 = vmatmul.mubr.f32.gmra.mrb[0].mxu0 %v700
    %v768 = vpop.f32.mrb[0].mxu0
    %v769 = vadd.f32 0.0, %v768
    %v770 = vpop.f32.mrb[0].mxu0
    %771 = vdwg.mxu0
    %773 = vrot.lane.b32.xlu0 %v769, 16
    %v774 = vpop.permute.xlu0 %773
    %vm776 = vcmask 195712
    %777 = vst.msk [vmem:[#allocation3] sm:$0xff] %vm776, %v774
    %778 = vrot.lane.b32.xlu0 %v251, 104
    %v779 = vpop.permute.xlu0 %778
    %780 = vrot.lane.b32.xlu0 %v251, 72
    %v781 = vpop.permute.xlu0 %780
    %v782 = vsel %vm263, %v779, 0
    %v784 = vsel %vm263, %v781, 0
    %786 = vmatprep.subr.mxu0 0.0
    %787 = vmatpush1.xpose.msra.mxu0 %v784
    %788 = vmatprep.subr.mxu0 0.0
    %789 = vmatpush1.xpose.msra.mxu0 0.0
    %790 = vmatprep.subr.mxu0 0.0
    %791 = vmatpush1.xpose.msra.mxu0 0.0
    %792 = vmatprep.subr.mxu0 0.0
    %793 = vmatpush1.xpose.msra.mxu0 0.0
    %794 = vmatprep.subr.mxu0 0.0
    %795 = vmatpush1.xpose.msra.mxu0 0.0
    %796 = vmatprep.subr.mxu0 0.0
    %797 = vmatpush1.xpose.msra.mxu0 0.0
    %798 = vmatprep.subr.mxu0 0.0
    %799 = vmatpush1.xpose.msra.mxu0 0.0
    %800 = vmatprep.subr.mxu0 0.0
    %801 = vmatpush1.xpose.msra.mxu0 0.0
    %802 = vmatprep.subr.mxu0 0.0
    %803 = vmatpush1.xpose.msra.mxu0 0.0
    %804 = vmatprep.subr.mxu0 0.0
    %805 = vmatpush1.xpose.msra.mxu0 0.0
    %806 = vmatprep.subr.mxu0 0.0
    %807 = vmatpush1.xpose.msra.mxu0 0.0
    %808 = vmatprep.subr.mxu0 0.0
    %809 = vmatpush1.xpose.msra.mxu0 0.0
    %810 = vmatprep.subr.mxu0 0.0
    %811 = vmatpush1.xpose.msra.mxu0 0.0
    %812 = vmatprep.subr.mxu0 0.0
    %813 = vmatpush1.xpose.msra.mxu0 0.0
    %814 = vmatprep.subr.mxu0 0.0
    %815 = vmatpush1.xpose.msra.mxu0 0.0
    %816 = vmatprep.subr.mxu0 0.0
    %817 = vmatpush1.xpose.msra.mxu0 0.0
    %818 = vmatprep.subr.mxu0 0.0
    %819 = vmatpush1.xpose.msra.mxu0 0.0
    %820 = vmatprep.subr.mxu0 0.0
    %821 = vmatpush1.xpose.msra.mxu0 0.0
    %822 = vmatprep.subr.mxu0 0.0
    %823 = vmatpush1.xpose.msra.mxu0 0.0
    %824 = vmatprep.subr.mxu0 0.0
    %825 = vmatpush1.xpose.msra.mxu0 0.0
    %826 = vmatprep.subr.mxu0 0.0
    %827 = vmatpush1.xpose.msra.mxu0 0.0
    %828 = vmatprep.subr.mxu0 0.0
    %829 = vmatpush1.xpose.msra.mxu0 0.0
    %830 = vmatprep.subr.mxu0 0.0
    %831 = vmatpush1.xpose.msra.mxu0 0.0
    %832 = vmatprep.subr.mxu0 0.0
    %833 = vmatpush1.xpose.msra.mxu0 0.0
    %834 = vmatprep.subr.mxu0 0.0
    %835 = vmatpush1.xpose.msra.mxu0 0.0
    %836 = vmatprep.subr.mxu0 0.0
    %837 = vmatpush1.xpose.msra.mxu0 0.0
    %838 = vmatprep.subr.mxu0 0.0
    %839 = vmatpush1.xpose.msra.mxu0 0.0
    %840 = vmatprep.subr.mxu0 0.0
    %841 = vmatpush1.xpose.msra.mxu0 0.0
    %842 = vmatprep.subr.mxu0 0.0
    %843 = vmatpush1.xpose.msra.mxu0 0.0
    %844 = vmatprep.subr.mxu0 0.0
    %845 = vmatpush1.xpose.msra.mxu0 0.0
    %846 = vmatprep.subr.mxu0 0.0
    %847 = vmatpush1.xpose.msra.mxu0 0.0
    %848 = vmatprep.subr.mxu0 0.0
    %849 = vmatpush1.xpose.msra.mxu0 0.0
    %850 = vmatprep.mubr.f32.mxu0 0.0
    %851 = vmatmul.mubr.f32.gmra.mrb[0].mxu0 %v782
    %v852 = vpop.f32.mrb[0].mxu0
    %v853 = vadd.f32 0.0, %v852
    %v854 = vpop.f32.mrb[0].mxu0
    %855 = vdwg.mxu0
    %v856 = vmul.f32 %v853, 0.35355338
    %v857 = vadd.f32 %v856, %v342
    %v858 = vsel %vm263, %v857, -inf
    %859 = vmax.xlane.f32.xlu0 %v858
    %v860 = vpop.xlane.xlu0 %859
    %v861 = vsub.f32 %v857, %v860
    %v862 = vmul.f32 %v861, 1.442695
    %v863 = vpow.pop %v862
    %v864 = vsel %vm263, %v863, 0.0
    %865 = vadd.xlane.f32.xlu0 %v864
    %v866 = vpop.xlane.xlu0 %865
    %v867 = vrcp.pop %v866
    %v868 = vmul.f32 %v863, %v867
    %869 = vrot.lane.b32.xlu0 %v251, 40
    %v870 = vpop.permute.xlu0 %869
    %v873 = vsel %vm263, %v868, 0
    %875 = vmatprep.subr.mxu0 0.0
    %876 = vmatpush1.msra.mxu0 %v870
    %877 = vmatprep.subr.mxu0 0.0
    %878 = vmatpush1.msra.mxu0 0.0
    %879 = vmatprep.subr.mxu0 0.0
    %880 = vmatpush1.msra.mxu0 0.0
    %881 = vmatprep.subr.mxu0 0.0
    %882 = vmatpush1.msra.mxu0 0.0
    %883 = vmatprep.subr.mxu0 0.0
    %884 = vmatpush1.msra.mxu0 0.0
    %885 = vmatprep.subr.mxu0 0.0
    %886 = vmatpush1.msra.mxu0 0.0
    %887 = vmatprep.subr.mxu0 0.0
    %888 = vmatpush1.msra.mxu0 0.0
    %889 = vmatprep.subr.mxu0 0.0
    %890 = vmatpush1.msra.mxu0 0.0
    %891 = vmatprep.subr.mxu0 0.0
    %892 = vmatpush1.msra.mxu0 0.0
    %893 = vmatprep.subr.mxu0 0.0
    %894 = vmatpush1.msra.mxu0 0.0
    %895 = vmatprep.subr.mxu0 0.0
    %896 = vmatpush1.msra.mxu0 0.0
    %897 = vmatprep.subr.mxu0 0.0
    %898 = vmatpush1.msra.mxu0 0.0
    %899 = vmatprep.subr.mxu0 0.0
    %900 = vmatpush1.msra.mxu0 0.0
    %901 = vmatprep.subr.mxu0 0.0
    %902 = vmatpush1.msra.mxu0 0.0
    %903 = vmatprep.subr.mxu0 0.0
    %904 = vmatpush1.msra.mxu0 0.0
    %905 = vmatprep.subr.mxu0 0.0
    %906 = vmatpush1.msra.mxu0 0.0
    %907 = vmatprep.subr.mxu0 0.0
    %908 = vmatpush1.msra.mxu0 0.0
    %909 = vmatprep.subr.mxu0 0.0
    %910 = vmatpush1.msra.mxu0 0.0
    %911 = vmatprep.subr.mxu0 0.0
    %912 = vmatpush1.msra.mxu0 0.0
    %913 = vmatprep.subr.mxu0 0.0
    %914 = vmatpush1.msra.mxu0 0.0
    %915 = vmatprep.subr.mxu0 0.0
    %916 = vmatpush1.msra.mxu0 0.0
    %917 = vmatprep.subr.mxu0 0.0
    %918 = vmatpush1.msra.mxu0 0.0
    %919 = vmatprep.subr.mxu0 0.0
    %920 = vmatpush1.msra.mxu0 0.0
    %921 = vmatprep.subr.mxu0 0.0
    %922 = vmatpush1.msra.mxu0 0.0
    %923 = vmatprep.subr.mxu0 0.0
    %924 = vmatpush1.msra.mxu0 0.0
    %925 = vmatprep.subr.mxu0 0.0
    %926 = vmatpush1.msra.mxu0 0.0
    %927 = vmatprep.subr.mxu0 0.0
    %928 = vmatpush1.msra.mxu0 0.0
    %929 = vmatprep.subr.mxu0 0.0
    %930 = vmatpush1.msra.mxu0 0.0
    %931 = vmatprep.subr.mxu0 0.0
    %932 = vmatpush1.msra.mxu0 0.0
    %933 = vmatprep.subr.mxu0 0.0
    %934 = vmatpush1.msra.mxu0 0.0
    %935 = vmatprep.subr.mxu0 0.0
    %936 = vmatpush1.msra.mxu0 0.0
    %937 = vmatprep.subr.mxu0 0.0
    %938 = vmatpush1.msra.mxu0 0.0
    %939 = vmatprep.mubr.f32.mxu0 0.0
    %940 = vmatmul.mubr.f32.gmra.mrb[0].mxu0 %v873
    %v941 = vpop.f32.mrb[0].mxu0
    %v942 = vadd.f32 0.0, %v941
    %v943 = vpop.f32.mrb[0].mxu0
    %944 = vdwg.mxu0
    %946 = vrot.lane.b32.xlu0 %v942, 24
    %v947 = vpop.permute.xlu0 %946
    %vm949 = vcmask 261312
    %950 = vst.msk [vmem:[#allocation3] sm:$0xff] %vm949, %v947
    %v951 = vld [vmem:[%s1 + $0x1] sm:$0x1]
    %v952 = vsub.f32 1.0, %v951
    %v953 = vmul.f32 %v952, -10000.0
    %955 = vrot.lane.b32.xlu0 %v254, 96
    %v956 = vpop.permute.xlu0 %955
    %v957 = vsel %vm263, %v254, 0
    %v959 = vsel %vm263, %v956, 0
    %961 = vmatprep.subr.mxu0 0.0
    %962 = vmatpush1.xpose.msra.mxu0 %v959
    %963 = vmatprep.subr.mxu0 0.0
    %964 = vmatpush1.xpose.msra.mxu0 0.0
    %965 = vmatprep.subr.mxu0 0.0
    %966 = vmatpush1.xpose.msra.mxu0 0.0
    %967 = vmatprep.subr.mxu0 0.0
    %968 = vmatpush1.xpose.msra.mxu0 0.0
    %969 = vmatprep.subr.mxu0 0.0
    %970 = vmatpush1.xpose.msra.mxu0 0.0
    %971 = vmatprep.subr.mxu0 0.0
    %972 = vmatpush1.xpose.msra.mxu0 0.0
    %973 = vmatprep.subr.mxu0 0.0
    %974 = vmatpush1.xpose.msra.mxu0 0.0
    %975 = vmatprep.subr.mxu0 0.0
    %976 = vmatpush1.xpose.msra.mxu0 0.0
    %977 = vmatprep.subr.mxu0 0.0
    %978 = vmatpush1.xpose.msra.mxu0 0.0
    %979 = vmatprep.subr.mxu0 0.0
    %980 = vmatpush1.xpose.msra.mxu0 0.0
    %981 = vmatprep.subr.mxu0 0.0
    %982 = vmatpush1.xpose.msra.mxu0 0.0
    %983 = vmatprep.subr.mxu0 0.0
    %984 = vmatpush1.xpose.msra.mxu0 0.0
    %985 = vmatprep.subr.mxu0 0.0
    %986 = vmatpush1.xpose.msra.mxu0 0.0
    %987 = vmatprep.subr.mxu0 0.0
    %988 = vmatpush1.xpose.msra.mxu0 0.0
    %989 = vmatprep.subr.mxu0 0.0
    %990 = vmatpush1.xpose.msra.mxu0 0.0
    %991 = vmatprep.subr.mxu0 0.0
    %992 = vmatpush1.xpose.msra.mxu0 0.0
    %993 = vmatprep.subr.mxu0 0.0
    %994 = vmatpush1.xpose.msra.mxu0 0.0
    %995 = vmatprep.subr.mxu0 0.0
    %996 = vmatpush1.xpose.msra.mxu0 0.0
    %997 = vmatprep.subr.mxu0 0.0
    %998 = vmatpush1.xpose.msra.mxu0 0.0
    %999 = vmatprep.subr.mxu0 0.0
    %1000 = vmatpush1.xpose.msra.mxu0 0.0
    %1001 = vmatprep.subr.mxu0 0.0
    %1002 = vmatpush1.xpose.msra.mxu0 0.0
    %1003 = vmatprep.subr.mxu0 0.0
    %1004 = vmatpush1.xpose.msra.mxu0 0.0
    %1005 = vmatprep.subr.mxu0 0.0
    %1006 = vmatpush1.xpose.msra.mxu0 0.0
    %1007 = vmatprep.subr.mxu0 0.0
    %1008 = vmatpush1.xpose.msra.mxu0 0.0
    %1009 = vmatprep.subr.mxu0 0.0
    %1010 = vmatpush1.xpose.msra.mxu0 0.0
    %1011 = vmatprep.subr.mxu0 0.0
    %1012 = vmatpush1.xpose.msra.mxu0 0.0
    %1013 = vmatprep.subr.mxu0 0.0
    %1014 = vmatpush1.xpose.msra.mxu0 0.0
    %1015 = vmatprep.subr.mxu0 0.0
    %1016 = vmatpush1.xpose.msra.mxu0 0.0
    %1017 = vmatprep.subr.mxu0 0.0
    %1018 = vmatpush1.xpose.msra.mxu0 0.0
    %1019 = vmatprep.subr.mxu0 0.0
    %1020 = vmatpush1.xpose.msra.mxu0 0.0
    %1021 = vmatprep.subr.mxu0 0.0
    %1022 = vmatpush1.xpose.msra.mxu0 0.0
    %1023 = vmatprep.subr.mxu0 0.0
    %1024 = vmatpush1.xpose.msra.mxu0 0.0
    %1025 = vmatprep.mubr.f32.mxu0 0.0
    %1026 = vmatmul.mubr.f32.gmra.mrb[0].mxu0 %v957
    %v1027 = vpop.f32.mrb[0].mxu0
    %v1028 = vadd.f32 0.0, %v1027
    %v1029 = vpop.f32.mrb[0].mxu0
    %1030 = vdwg.mxu0
    %v1031 = vmul.f32 %v1028, 0.35355338
    %v1032 = vlaneseq
    %v1033 = vshrl.u32 %v1032, 7
    %v1034 = vsub.s32 0, %v1033
    %v1035 = vrot.slane %v953, %v1034
    %v1036 = vadd.f32 %v1031, %v1035
    %v1037 = vsel %vm263, %v1036, -inf
    %1038 = vmax.xlane.f32.xlu0 %v1037
    %v1039 = vpop.xlane.xlu0 %1038
    %v1040 = vsub.f32 %v1036, %v1039
    %v1041 = vmul.f32 %v1040, 1.442695
    %v1042 = vpow.pop %v1041
    %v1043 = vsel %vm263, %v1042, 0.0
    %1044 = vadd.xlane.f32.xlu0 %v1043
    %v1045 = vpop.xlane.xlu0 %1044
    %v1046 = vrcp.pop %v1045
    %v1047 = vmul.f32 %v1042, %v1046
    %1048 = vrot.lane.b32.xlu0 %v254, 64
    %v1049 = vpop.permute.xlu0 %1048
    %v1052 = vsel %vm263, %v1047, 0
    %1054 = vmatprep.subr.mxu0 0.0
    %1055 = vmatpush1.msra.mxu0 %v1049
    %1056 = vmatprep.subr.mxu0 0.0
    %1057 = vmatpush1.msra.mxu0 0.0
    %1058 = vmatprep.subr.mxu0 0.0
    %1059 = vmatpush1.msra.mxu0 0.0
    %1060 = vmatprep.subr.mxu0 0.0
    %1061 = vmatpush1.msra.mxu0 0.0
    %1062 = vmatprep.subr.mxu0 0.0
    %1063 = vmatpush1.msra.mxu0 0.0
    %1064 = vmatprep.subr.mxu0 0.0
    %1065 = vmatpush1.msra.mxu0 0.0
    %1066 = vmatprep.subr.mxu0 0.0
    %1067 = vmatpush1.msra.mxu0 0.0
    %1068 = vmatprep.subr.mxu0 0.0
    %1069 = vmatpush1.msra.mxu0 0.0
    %1070 = vmatprep.subr.mxu0 0.0
    %1071 = vmatpush1.msra.mxu0 0.0
    %1072 = vmatprep.subr.mxu0 0.0
    %1073 = vmatpush1.msra.mxu0 0.0
    %1074 = vmatprep.subr.mxu0 0.0
    %1075 = vmatpush1.msra.mxu0 0.0
    %1076 = vmatprep.subr.mxu0 0.0
    %1077 = vmatpush1.msra.mxu0 0.0
    %1078 = vmatprep.subr.mxu0 0.0
    %1079 = vmatpush1.msra.mxu0 0.0
    %1080 = vmatprep.subr.mxu0 0.0
    %1081 = vmatpush1.msra.mxu0 0.0
    %1082 = vmatprep.subr.mxu0 0.0
    %1083 = vmatpush1.msra.mxu0 0.0
    %1084 = vmatprep.subr.mxu0 0.0
    %1085 = vmatpush1.msra.mxu0 0.0
    %1086 = vmatprep.subr.mxu0 0.0
    %1087 = vmatpush1.msra.mxu0 0.0
    %1088 = vmatprep.subr.mxu0 0.0
    %1089 = vmatpush1.msra.mxu0 0.0
    %1090 = vmatprep.subr.mxu0 0.0
    %1091 = vmatpush1.msra.mxu0 0.0
    %1092 = vmatprep.subr.mxu0 0.0
    %1093 = vmatpush1.msra.mxu0 0.0
    %1094 = vmatprep.subr.mxu0 0.0
    %1095 = vmatpush1.msra.mxu0 0.0
    %1096 = vmatprep.subr.mxu0 0.0
    %1097 = vmatpush1.msra.mxu0 0.0
    %1098 = vmatprep.subr.mxu0 0.0
    %1099 = vmatpush1.msra.mxu0 0.0
    %1100 = vmatprep.subr.mxu0 0.0
    %1101 = vmatpush1.msra.mxu0 0.0
    %1102 = vmatprep.subr.mxu0 0.0
    %1103 = vmatpush1.msra.mxu0 0.0
    %1104 = vmatprep.subr.mxu0 0.0
    %1105 = vmatpush1.msra.mxu0 0.0
    %1106 = vmatprep.subr.mxu0 0.0
    %1107 = vmatpush1.msra.mxu0 0.0
    %1108 = vmatprep.subr.mxu0 0.0
    %1109 = vmatpush1.msra.mxu0 0.0
    %1110 = vmatprep.subr.mxu0 0.0
    %1111 = vmatpush1.msra.mxu0 0.0
    %1112 = vmatprep.subr.mxu0 0.0
    %1113 = vmatpush1.msra.mxu0 0.0
    %1114 = vmatprep.subr.mxu0 0.0
    %1115 = vmatpush1.msra.mxu0 0.0
    %1116 = vmatprep.subr.mxu0 0.0
    %1117 = vmatpush1.msra.mxu0 0.0
    %1118 = vmatprep.mubr.f32.mxu0 0.0
    %1119 = vmatmul.mubr.f32.gmra.mrb[0].mxu0 %v1052
    %v1120 = vpop.f32.mrb[0].mxu0
    %v1121 = vadd.f32 0.0, %v1120
    %v1122 = vpop.f32.mrb[0].mxu0
    %1123 = vdwg.mxu0
    %1124 = vst.msk [vmem:[#allocation3 + $0x8] sm:$0xff] %vm263, %v1121
    %1125 = vrot.lane.b32.xlu0 %v254, 120
    %v1126 = vpop.permute.xlu0 %1125
    %1127 = vrot.lane.b32.xlu0 %v254, 88
    %v1128 = vpop.permute.xlu0 %1127
    %v1129 = vsel %vm263, %v1126, 0
    %v1131 = vsel %vm263, %v1128, 0
    %1133 = vmatprep.subr.mxu0 0.0
    %1134 = vmatpush1.xpose.msra.mxu0 %v1131
    %1135 = vmatprep.subr.mxu0 0.0
    %1136 = vmatpush1.xpose.msra.mxu0 0.0
    %1137 = vmatprep.subr.mxu0 0.0
    %1138 = vmatpush1.xpose.msra.mxu0 0.0
    %1139 = vmatprep.subr.mxu0 0.0
    %1140 = vmatpush1.xpose.msra.mxu0 0.0
    %1141 = vmatprep.subr.mxu0 0.0
    %1142 = vmatpush1.xpose.msra.mxu0 0.0
    %1143 = vmatprep.subr.mxu0 0.0
    %1144 = vmatpush1.xpose.msra.mxu0 0.0
    %1145 = vmatprep.subr.mxu0 0.0
    %1146 = vmatpush1.xpose.msra.mxu0 0.0
    %1147 = vmatprep.subr.mxu0 0.0
    %1148 = vmatpush1.xpose.msra.mxu0 0.0
    %1149 = vmatprep.subr.mxu0 0.0
    %1150 = vmatpush1.xpose.msra.mxu0 0.0
    %1151 = vmatprep.subr.mxu0 0.0
    %1152 = vmatpush1.xpose.msra.mxu0 0.0
    %1153 = vmatprep.subr.mxu0 0.0
    %1154 = vmatpush1.xpose.msra.mxu0 0.0
    %1155 = vmatprep.subr.mxu0 0.0
    %1156 = vmatpush1.xpose.msra.mxu0 0.0
    %1157 = vmatprep.subr.mxu0 0.0
    %1158 = vmatpush1.xpose.msra.mxu0 0.0
    %1159 = vmatprep.subr.mxu0 0.0
    %1160 = vmatpush1.xpose.msra.mxu0 0.0
    %1161 = vmatprep.subr.mxu0 0.0
    %1162 = vmatpush1.xpose.msra.mxu0 0.0
    %1163 = vmatprep.subr.mxu0 0.0
    %1164 = vmatpush1.xpose.msra.mxu0 0.0
    %1165 = vmatprep.subr.mxu0 0.0
    %1166 = vmatpush1.xpose.msra.mxu0 0.0
    %1167 = vmatprep.subr.mxu0 0.0
    %1168 = vmatpush1.xpose.msra.mxu0 0.0
    %1169 = vmatprep.subr.mxu0 0.0
    %1170 = vmatpush1.xpose.msra.mxu0 0.0
    %1171 = vmatprep.subr.mxu0 0.0
    %1172 = vmatpush1.xpose.msra.mxu0 0.0
    %1173 = vmatprep.subr.mxu0 0.0
    %1174 = vmatpush1.xpose.msra.mxu0 0.0
    %1175 = vmatprep.subr.mxu0 0.0
    %1176 = vmatpush1.xpose.msra.mxu0 0.0
    %1177 = vmatprep.subr.mxu0 0.0
    %1178 = vmatpush1.xpose.msra.mxu0 0.0
    %1179 = vmatprep.subr.mxu0 0.0
    %1180 = vmatpush1.xpose.msra.mxu0 0.0
    %1181 = vmatprep.subr.mxu0 0.0
    %1182 = vmatpush1.xpose.msra.mxu0 0.0
    %1183 = vmatprep.subr.mxu0 0.0
    %1184 = vmatpush1.xpose.msra.mxu0 0.0
    %1185 = vmatprep.subr.mxu0 0.0
    %1186 = vmatpush1.xpose.msra.mxu0 0.0
    %1187 = vmatprep.subr.mxu0 0.0
    %1188 = vmatpush1.xpose.msra.mxu0 0.0
    %1189 = vmatprep.subr.mxu0 0.0
    %1190 = vmatpush1.xpose.msra.mxu0 0.0
    %1191 = vmatprep.subr.mxu0 0.0
    %1192 = vmatpush1.xpose.msra.mxu0 0.0
    %1193 = vmatprep.subr.mxu0 0.0
    %1194 = vmatpush1.xpose.msra.mxu0 0.0
    %1195 = vmatprep.subr.mxu0 0.0
    %1196 = vmatpush1.xpose.msra.mxu0 0.0
    %1197 = vmatprep.mubr.f32.mxu0 0.0
    %1198 = vmatmul.mubr.f32.gmra.mrb[0].mxu0 %v1129
    %v1199 = vpop.f32.mrb[0].mxu0
    %v1200 = vadd.f32 0.0, %v1199
    %v1201 = vpop.f32.mrb[0].mxu0
    %1202 = vdwg.mxu0
    %v1203 = vmul.f32 %v1200, 0.35355338
    %v1204 = vadd.f32 %v1203, %v1035
    %v1205 = vsel %vm263, %v1204, -inf
    %1206 = vmax.xlane.f32.xlu0 %v1205
    %v1207 = vpop.xlane.xlu0 %1206
    %v1208 = vsub.f32 %v1204, %v1207
    %v1209 = vmul.f32 %v1208, 1.442695
    %v1210 = vpow.pop %v1209
    %v1211 = vsel %vm263, %v1210, 0.0
    %1212 = vadd.xlane.f32.xlu0 %v1211
    %v1213 = vpop.xlane.xlu0 %1212
    %v1214 = vrcp.pop %v1213
    %v1215 = vmul.f32 %v1210, %v1214
    %1216 = vrot.lane.b32.xlu0 %v254, 56
    %v1217 = vpop.permute.xlu0 %1216
    %v1220 = vsel %vm263, %v1215, 0
    %1222 = vmatprep.subr.mxu0 0.0
    %1223 = vmatpush1.msra.mxu0 %v1217
    %1224 = vmatprep.subr.mxu0 0.0
    %1225 = vmatpush1.msra.mxu0 0.0
    %1226 = vmatprep.subr.mxu0 0.0
    %1227 = vmatpush1.msra.mxu0 0.0
    %1228 = vmatprep.subr.mxu0 0.0
    %1229 = vmatpush1.msra.mxu0 0.0
    %1230 = vmatprep.subr.mxu0 0.0
    %1231 = vmatpush1.msra.mxu0 0.0
    %1232 = vmatprep.subr.mxu0 0.0
    %1233 = vmatpush1.msra.mxu0 0.0
    %1234 = vmatprep.subr.mxu0 0.0
    %1235 = vmatpush1.msra.mxu0 0.0
    %1236 = vmatprep.subr.mxu0 0.0
    %1237 = vmatpush1.msra.mxu0 0.0
    %1238 = vmatprep.subr.mxu0 0.0
    %1239 = vmatpush1.msra.mxu0 0.0
    %1240 = vmatprep.subr.mxu0 0.0
    %1241 = vmatpush1.msra.mxu0 0.0
    %1242 = vmatprep.subr.mxu0 0.0
    %1243 = vmatpush1.msra.mxu0 0.0
    %1244 = vmatprep.subr.mxu0 0.0
    %1245 = vmatpush1.msra.mxu0 0.0
    %1246 = vmatprep.subr.mxu0 0.0
    %1247 = vmatpush1.msra.mxu0 0.0
    %1248 = vmatprep.subr.mxu0 0.0
    %1249 = vmatpush1.msra.mxu0 0.0
    %1250 = vmatprep.subr.mxu0 0.0
    %1251 = vmatpush1.msra.mxu0 0.0
    %1252 = vmatprep.subr.mxu0 0.0
    %1253 = vmatpush1.msra.mxu0 0.0
    %1254 = vmatprep.subr.mxu0 0.0
    %1255 = vmatpush1.msra.mxu0 0.0
    %1256 = vmatprep.subr.mxu0 0.0
    %1257 = vmatpush1.msra.mxu0 0.0
    %1258 = vmatprep.subr.mxu0 0.0
    %1259 = vmatpush1.msra.mxu0 0.0
    %1260 = vmatprep.subr.mxu0 0.0
    %1261 = vmatpush1.msra.mxu0 0.0
    %1262 = vmatprep.subr.mxu0 0.0
    %1263 = vmatpush1.msra.mxu0 0.0
    %1264 = vmatprep.subr.mxu0 0.0
    %1265 = vmatpush1.msra.mxu0 0.0
    %1266 = vmatprep.subr.mxu0 0.0
    %1267 = vmatpush1.msra.mxu0 0.0
    %1268 = vmatprep.subr.mxu0 0.0
    %1269 = vmatpush1.msra.mxu0 0.0
    %1270 = vmatprep.subr.mxu0 0.0
    %1271 = vmatpush1.msra.mxu0 0.0
    %1272 = vmatprep.subr.mxu0 0.0
    %1273 = vmatpush1.msra.mxu0 0.0
    %1274 = vmatprep.subr.mxu0 0.0
    %1275 = vmatpush1.msra.mxu0 0.0
    %1276 = vmatprep.subr.mxu0 0.0
    %1277 = vmatpush1.msra.mxu0 0.0
    %1278 = vmatprep.subr.mxu0 0.0
    %1279 = vmatpush1.msra.mxu0 0.0
    %1280 = vmatprep.subr.mxu0 0.0
    %1281 = vmatpush1.msra.mxu0 0.0
    %1282 = vmatprep.subr.mxu0 0.0
    %1283 = vmatpush1.msra.mxu0 0.0
    %1284 = vmatprep.subr.mxu0 0.0
    %1285 = vmatpush1.msra.mxu0 0.0
    %1286 = vmatprep.mubr.f32.mxu0 0.0
    %1287 = vmatmul.mubr.f32.gmra.mrb[0].mxu0 %v1220
    %v1288 = vpop.f32.mrb[0].mxu0
    %v1289 = vadd.f32 0.0, %v1288
    %v1290 = vpop.f32.mrb[0].mxu0
    %1291 = vdwg.mxu0
    %1293 = vrot.lane.b32.xlu0 %v1289, 8
    %v1294 = vpop.permute.xlu0 %1293
    %1296 = vst.msk [vmem:[#allocation3 + $0x8] sm:$0xff] %vm603, %v1294
    %1297 = vrot.lane.b32.xlu0 %v254, 112
    %v1298 = vpop.permute.xlu0 %1297
    %1299 = vrot.lane.b32.xlu0 %v254, 80
    %v1300 = vpop.permute.xlu0 %1299
    %v1301 = vsel %vm263, %v1298, 0
    %v1303 = vsel %vm263, %v1300, 0
    %1305 = vmatprep.subr.mxu0 0.0
    %1306 = vmatpush1.xpose.msra.mxu0 %v1303
    %1307 = vmatprep.subr.mxu0 0.0
    %1308 = vmatpush1.xpose.msra.mxu0 0.0
    %1309 = vmatprep.subr.mxu0 0.0
    %1310 = vmatpush1.xpose.msra.mxu0 0.0
    %1311 = vmatprep.subr.mxu0 0.0
    %1312 = vmatpush1.xpose.msra.mxu0 0.0
    %1313 = vmatprep.subr.mxu0 0.0
    %1314 = vmatpush1.xpose.msra.mxu0 0.0
    %1315 = vmatprep.subr.mxu0 0.0
    %1316 = vmatpush1.xpose.msra.mxu0 0.0
    %1317 = vmatprep.subr.mxu0 0.0
    %1318 = vmatpush1.xpose.msra.mxu0 0.0
    %1319 = vmatprep.subr.mxu0 0.0
    %1320 = vmatpush1.xpose.msra.mxu0 0.0
    %1321 = vmatprep.subr.mxu0 0.0
    %1322 = vmatpush1.xpose.msra.mxu0 0.0
    %1323 = vmatprep.subr.mxu0 0.0
    %1324 = vmatpush1.xpose.msra.mxu0 0.0
    %1325 = vmatprep.subr.mxu0 0.0
    %1326 = vmatpush1.xpose.msra.mxu0 0.0
    %1327 = vmatprep.subr.mxu0 0.0
    %1328 = vmatpush1.xpose.msra.mxu0 0.0
    %1329 = vmatprep.subr.mxu0 0.0
    %1330 = vmatpush1.xpose.msra.mxu0 0.0
    %1331 = vmatprep.subr.mxu0 0.0
    %1332 = vmatpush1.xpose.msra.mxu0 0.0
    %1333 = vmatprep.subr.mxu0 0.0
    %1334 = vmatpush1.xpose.msra.mxu0 0.0
    %1335 = vmatprep.subr.mxu0 0.0
    %1336 = vmatpush1.xpose.msra.mxu0 0.0
    %1337 = vmatprep.subr.mxu0 0.0
    %1338 = vmatpush1.xpose.msra.mxu0 0.0
    %1339 = vmatprep.subr.mxu0 0.0
    %1340 = vmatpush1.xpose.msra.mxu0 0.0
    %1341 = vmatprep.subr.mxu0 0.0
    %1342 = vmatpush1.xpose.msra.mxu0 0.0
    %1343 = vmatprep.subr.mxu0 0.0
    %1344 = vmatpush1.xpose.msra.mxu0 0.0
    %1345 = vmatprep.subr.mxu0 0.0
    %1346 = vmatpush1.xpose.msra.mxu0 0.0
    %1347 = vmatprep.subr.mxu0 0.0
    %1348 = vmatpush1.xpose.msra.mxu0 0.0
    %1349 = vmatprep.subr.mxu0 0.0
    %1350 = vmatpush1.xpose.msra.mxu0 0.0
    %1351 = vmatprep.subr.mxu0 0.0
    %1352 = vmatpush1.xpose.msra.mxu0 0.0
    %1353 = vmatprep.subr.mxu0 0.0
    %1354 = vmatpush1.xpose.msra.mxu0 0.0
    %1355 = vmatprep.subr.mxu0 0.0
    %1356 = vmatpush1.xpose.msra.mxu0 0.0
    %1357 = vmatprep.subr.mxu0 0.0
    %1358 = vmatpush1.xpose.msra.mxu0 0.0
    %1359 = vmatprep.subr.mxu0 0.0
    %1360 = vmatpush1.xpose.msra.mxu0 0.0
    %1361 = vmatprep.subr.mxu0 0.0
    %1362 = vmatpush1.xpose.msra.mxu0 0.0
    %1363 = vmatprep.subr.mxu0 0.0
    %1364 = vmatpush1.xpose.msra.mxu0 0.0
    %1365 = vmatprep.subr.mxu0 0.0
    %1366 = vmatpush1.xpose.msra.mxu0 0.0
    %1367 = vmatprep.subr.mxu0 0.0
    %1368 = vmatpush1.xpose.msra.mxu0 0.0
    %1369 = vmatprep.mubr.f32.mxu0 0.0
    %1370 = vmatmul.mubr.f32.gmra.mrb[0].mxu0 %v1301
    %v1371 = vpop.f32.mrb[0].mxu0
    %v1372 = vadd.f32 0.0, %v1371
    %v1373 = vpop.f32.mrb[0].mxu0
    %1374 = vdwg.mxu0
    %v1375 = vmul.f32 %v1372, 0.35355338
    %v1376 = vadd.f32 %v1375, %v1035
    %v1377 = vsel %vm263, %v1376, -inf
    %1378 = vmax.xlane.f32.xlu0 %v1377
    %v1379 = vpop.xlane.xlu0 %1378
    %v1380 = vsub.f32 %v1376, %v1379
    %v1381 = vmul.f32 %v1380, 1.442695
    %v1382 = vpow.pop %v1381
    %v1383 = vsel %vm263, %v1382, 0.0
    %1384 = vadd.xlane.f32.xlu0 %v1383
    %v1385 = vpop.xlane.xlu0 %1384
    %v1386 = vrcp.pop %v1385
    %v1387 = vmul.f32 %v1382, %v1386
    %1388 = vrot.lane.b32.xlu0 %v254, 48
    %v1389 = vpop.permute.xlu0 %1388
    %v1392 = vsel %vm263, %v1387, 0
    %1394 = vmatprep.subr.mxu0 0.0
    %1395 = vmatpush1.msra.mxu0 %v1389
    %1396 = vmatprep.subr.mxu0 0.0
    %1397 = vmatpush1.msra.mxu0 0.0
    %1398 = vmatprep.subr.mxu0 0.0
    %1399 = vmatpush1.msra.mxu0 0.0
    %1400 = vmatprep.subr.mxu0 0.0
    %1401 = vmatpush1.msra.mxu0 0.0
    %1402 = vmatprep.subr.mxu0 0.0
    %1403 = vmatpush1.msra.mxu0 0.0
    %1404 = vmatprep.subr.mxu0 0.0
    %1405 = vmatpush1.msra.mxu0 0.0
    %1406 = vmatprep.subr.mxu0 0.0
    %1407 = vmatpush1.msra.mxu0 0.0
    %1408 = vmatprep.subr.mxu0 0.0
    %1409 = vmatpush1.msra.mxu0 0.0
    %1410 = vmatprep.subr.mxu0 0.0
    %1411 = vmatpush1.msra.mxu0 0.0
    %1412 = vmatprep.subr.mxu0 0.0
    %1413 = vmatpush1.msra.mxu0 0.0
    %1414 = vmatprep.subr.mxu0 0.0
    %1415 = vmatpush1.msra.mxu0 0.0
    %1416 = vmatprep.subr.mxu0 0.0
    %1417 = vmatpush1.msra.mxu0 0.0
    %1418 = vmatprep.subr.mxu0 0.0
    %1419 = vmatpush1.msra.mxu0 0.0
    %1420 = vmatprep.subr.mxu0 0.0
    %1421 = vmatpush1.msra.mxu0 0.0
    %1422 = vmatprep.subr.mxu0 0.0
    %1423 = vmatpush1.msra.mxu0 0.0
    %1424 = vmatprep.subr.mxu0 0.0
    %1425 = vmatpush1.msra.mxu0 0.0
    %1426 = vmatprep.subr.mxu0 0.0
    %1427 = vmatpush1.msra.mxu0 0.0
    %1428 = vmatprep.subr.mxu0 0.0
    %1429 = vmatpush1.msra.mxu0 0.0
    %1430 = vmatprep.subr.mxu0 0.0
    %1431 = vmatpush1.msra.mxu0 0.0
    %1432 = vmatprep.subr.mxu0 0.0
    %1433 = vmatpush1.msra.mxu0 0.0
    %1434 = vmatprep.subr.mxu0 0.0
    %1435 = vmatpush1.msra.mxu0 0.0
    %1436 = vmatprep.subr.mxu0 0.0
    %1437 = vmatpush1.msra.mxu0 0.0
    %1438 = vmatprep.subr.mxu0 0.0
    %1439 = vmatpush1.msra.mxu0 0.0
    %1440 = vmatprep.subr.mxu0 0.0
    %1441 = vmatpush1.msra.mxu0 0.0
    %1442 = vmatprep.subr.mxu0 0.0
    %1443 = vmatpush1.msra.mxu0 0.0
    %1444 = vmatprep.subr.mxu0 0.0
    %1445 = vmatpush1.msra.mxu0 0.0
    %1446 = vmatprep.subr.mxu0 0.0
    %1447 = vmatpush1.msra.mxu0 0.0
    %1448 = vmatprep.subr.mxu0 0.0
    %1449 = vmatpush1.msra.mxu0 0.0
    %1450 = vmatprep.subr.mxu0 0.0
    %1451 = vmatpush1.msra.mxu0 0.0
    %1452 = vmatprep.subr.mxu0 0.0
    %1453 = vmatpush1.msra.mxu0 0.0
    %1454 = vmatprep.subr.mxu0 0.0
    %1455 = vmatpush1.msra.mxu0 0.0
    %1456 = vmatprep.subr.mxu0 0.0
    %1457 = vmatpush1.msra.mxu0 0.0
    %1458 = vmatprep.mubr.f32.mxu0 0.0
    %1459 = vmatmul.mubr.f32.gmra.mrb[0].mxu0 %v1392
    %v1460 = vpop.f32.mrb[0].mxu0
    %v1461 = vadd.f32 0.0, %v1460
    %v1462 = vpop.f32.mrb[0].mxu0
    %1463 = vdwg.mxu0
    %1465 = vrot.lane.b32.xlu0 %v1461, 16
    %v1466 = vpop.permute.xlu0 %1465
    %1468 = vst.msk [vmem:[#allocation3 + $0x8] sm:$0xff] %vm776, %v1466
    %1469 = vrot.lane.b32.xlu0 %v254, 104
    %v1470 = vpop.permute.xlu0 %1469
    %1471 = vrot.lane.b32.xlu0 %v254, 72
    %v1472 = vpop.permute.xlu0 %1471
    %v1473 = vsel %vm263, %v1470, 0
    %v1475 = vsel %vm263, %v1472, 0
    %1477 = vmatprep.subr.mxu0 0.0
    %1478 = vmatpush1.xpose.msra.mxu0 %v1475
    %1479 = vmatprep.subr.mxu0 0.0
    %1480 = vmatpush1.xpose.msra.mxu0 0.0
    %1481 = vmatprep.subr.mxu0 0.0
    %1482 = vmatpush1.xpose.msra.mxu0 0.0
    %1483 = vmatprep.subr.mxu0 0.0
    %1484 = vmatpush1.xpose.msra.mxu0 0.0
    %1485 = vmatprep.subr.mxu0 0.0
    %1486 = vmatpush1.xpose.msra.mxu0 0.0
    %1487 = vmatprep.subr.mxu0 0.0
    %1488 = vmatpush1.xpose.msra.mxu0 0.0
    %1489 = vmatprep.subr.mxu0 0.0
    %1490 = vmatpush1.xpose.msra.mxu0 0.0
    %1491 = vmatprep.subr.mxu0 0.0
    %1492 = vmatpush1.xpose.msra.mxu0 0.0
    %1493 = vmatprep.subr.mxu0 0.0
    %1494 = vmatpush1.xpose.msra.mxu0 0.0
    %1495 = vmatprep.subr.mxu0 0.0
    %1496 = vmatpush1.xpose.msra.mxu0 0.0
    %1497 = vmatprep.subr.mxu0 0.0
    %1498 = vmatpush1.xpose.msra.mxu0 0.0
    %1499 = vmatprep.subr.mxu0 0.0
    %1500 = vmatpush1.xpose.msra.mxu0 0.0
    %1501 = vmatprep.subr.mxu0 0.0
    %1502 = vmatpush1.xpose.msra.mxu0 0.0
    %1503 = vmatprep.subr.mxu0 0.0
    %1504 = vmatpush1.xpose.msra.mxu0 0.0
    %1505 = vmatprep.subr.mxu0 0.0
    %1506 = vmatpush1.xpose.msra.mxu0 0.0
    %1507 = vmatprep.subr.mxu0 0.0
    %1508 = vmatpush1.xpose.msra.mxu0 0.0
    %1509 = vmatprep.subr.mxu0 0.0
    %1510 = vmatpush1.xpose.msra.mxu0 0.0
    %1511 = vmatprep.subr.mxu0 0.0
    %1512 = vmatpush1.xpose.msra.mxu0 0.0
    %1513 = vmatprep.subr.mxu0 0.0
    %1514 = vmatpush1.xpose.msra.mxu0 0.0
    %1515 = vmatprep.subr.mxu0 0.0
    %1516 = vmatpush1.xpose.msra.mxu0 0.0
    %1517 = vmatprep.subr.mxu0 0.0
    %1518 = vmatpush1.xpose.msra.mxu0 0.0
    %1519 = vmatprep.subr.mxu0 0.0
    %1520 = vmatpush1.xpose.msra.mxu0 0.0
    %1521 = vmatprep.subr.mxu0 0.0
    %1522 = vmatpush1.xpose.msra.mxu0 0.0
    %1523 = vmatprep.subr.mxu0 0.0
    %1524 = vmatpush1.xpose.msra.mxu0 0.0
    %1525 = vmatprep.subr.mxu0 0.0
    %1526 = vmatpush1.xpose.msra.mxu0 0.0
    %1527 = vmatprep.subr.mxu0 0.0
    %1528 = vmatpush1.xpose.msra.mxu0 0.0
    %1529 = vmatprep.subr.mxu0 0.0
    %1530 = vmatpush1.xpose.msra.mxu0 0.0
    %1531 = vmatprep.subr.mxu0 0.0
    %1532 = vmatpush1.xpose.msra.mxu0 0.0
    %1533 = vmatprep.subr.mxu0 0.0
    %1534 = vmatpush1.xpose.msra.mxu0 0.0
    %1535 = vmatprep.subr.mxu0 0.0
    %1536 = vmatpush1.xpose.msra.mxu0 0.0
    %1537 = vmatprep.subr.mxu0 0.0
    %1538 = vmatpush1.xpose.msra.mxu0 0.0
    %1539 = vmatprep.subr.mxu0 0.0
    %1540 = vmatpush1.xpose.msra.mxu0 0.0
    %1541 = vmatprep.mubr.f32.mxu0 0.0
    %1542 = vmatmul.mubr.f32.gmra.mrb[0].mxu0 %v1473
    %v1543 = vpop.f32.mrb[0].mxu0
    %v1544 = vadd.f32 0.0, %v1543
    %v1545 = vpop.f32.mrb[0].mxu0
    %1546 = vdwg.mxu0
    %v1547 = vmul.f32 %v1544, 0.35355338
    %v1548 = vadd.f32 %v1547, %v1035
    %v1549 = vsel %vm263, %v1548, -inf
    %1550 = vmax.xlane.f32.xlu0 %v1549
    %v1551 = vpop.xlane.xlu0 %1550
    %v1552 = vsub.f32 %v1548, %v1551
    %v1553 = vmul.f32 %v1552, 1.442695
    %v1554 = vpow.pop %v1553
    %v1555 = vsel %vm263, %v1554, 0.0
    %1556 = vadd.xlane.f32.xlu0 %v1555
    %v1557 = vpop.xlane.xlu0 %1556
    %v1558 = vrcp.pop %v1557
    %v1559 = vmul.f32 %v1554, %v1558
    %1560 = vrot.lane.b32.xlu0 %v254, 40
    %v1561 = vpop.permute.xlu0 %1560
    %v1564 = vsel %vm263, %v1559, 0
    %1566 = vmatprep.subr.mxu0 0.0
    %1567 = vmatpush1.msra.mxu0 %v1561
    %1568 = vmatprep.subr.mxu0 0.0
    %1569 = vmatpush1.msra.mxu0 0.0
    %1570 = vmatprep.subr.mxu0 0.0
    %1571 = vmatpush1.msra.mxu0 0.0
    %1572 = vmatprep.subr.mxu0 0.0
    %1573 = vmatpush1.msra.mxu0 0.0
    %1574 = vmatprep.subr.mxu0 0.0
    %1575 = vmatpush1.msra.mxu0 0.0
    %1576 = vmatprep.subr.mxu0 0.0
    %1577 = vmatpush1.msra.mxu0 0.0
    %1578 = vmatprep.subr.mxu0 0.0
    %1579 = vmatpush1.msra.mxu0 0.0
    %1580 = vmatprep.subr.mxu0 0.0
    %1581 = vmatpush1.msra.mxu0 0.0
    %1582 = vmatprep.subr.mxu0 0.0
    %1583 = vmatpush1.msra.mxu0 0.0
    %1584 = vmatprep.subr.mxu0 0.0
    %1585 = vmatpush1.msra.mxu0 0.0
    %1586 = vmatprep.subr.mxu0 0.0
    %1587 = vmatpush1.msra.mxu0 0.0
    %1588 = vmatprep.subr.mxu0 0.0
    %1589 = vmatpush1.msra.mxu0 0.0
    %1590 = vmatprep.subr.mxu0 0.0
    %1591 = vmatpush1.msra.mxu0 0.0
    %1592 = vmatprep.subr.mxu0 0.0
    %1593 = vmatpush1.msra.mxu0 0.0
    %1594 = vmatprep.subr.mxu0 0.0
    %1595 = vmatpush1.msra.mxu0 0.0
    %1596 = vmatprep.subr.mxu0 0.0
    %1597 = vmatpush1.msra.mxu0 0.0
    %1598 = vmatprep.subr.mxu0 0.0
    %1599 = vmatpush1.msra.mxu0 0.0
    %1600 = vmatprep.subr.mxu0 0.0
    %1601 = vmatpush1.msra.mxu0 0.0
    %1602 = vmatprep.subr.mxu0 0.0
    %1603 = vmatpush1.msra.mxu0 0.0
    %1604 = vmatprep.subr.mxu0 0.0
    %1605 = vmatpush1.msra.mxu0 0.0
    %1606 = vmatprep.subr.mxu0 0.0
    %1607 = vmatpush1.msra.mxu0 0.0
    %1608 = vmatprep.subr.mxu0 0.0
    %1609 = vmatpush1.msra.mxu0 0.0
    %1610 = vmatprep.subr.mxu0 0.0
    %1611 = vmatpush1.msra.mxu0 0.0
    %1612 = vmatprep.subr.mxu0 0.0
    %1613 = vmatpush1.msra.mxu0 0.0
    %1614 = vmatprep.subr.mxu0 0.0
    %1615 = vmatpush1.msra.mxu0 0.0
    %1616 = vmatprep.subr.mxu0 0.0
    %1617 = vmatpush1.msra.mxu0 0.0
    %1618 = vmatprep.subr.mxu0 0.0
    %1619 = vmatpush1.msra.mxu0 0.0
    %1620 = vmatprep.subr.mxu0 0.0
    %1621 = vmatpush1.msra.mxu0 0.0
    %1622 = vmatprep.subr.mxu0 0.0
    %1623 = vmatpush1.msra.mxu0 0.0
    %1624 = vmatprep.subr.mxu0 0.0
    %1625 = vmatpush1.msra.mxu0 0.0
    %1626 = vmatprep.subr.mxu0 0.0
    %1627 = vmatpush1.msra.mxu0 0.0
    %1628 = vmatprep.subr.mxu0 0.0
    %1629 = vmatpush1.msra.mxu0 0.0
    %1630 = vmatprep.mubr.f32.mxu0 0.0
    %1631 = vmatmul.mubr.f32.gmra.mrb[0].mxu0 %v1564
    %v1632 = vpop.f32.mrb[0].mxu0
    %v1633 = vadd.f32 0.0, %v1632
    %v1634 = vpop.f32.mrb[0].mxu0
    %1635 = vdwg.mxu0
    %1637 = vrot.lane.b32.xlu0 %v1633, 24
    %v1638 = vpop.permute.xlu0 %1637
    %1640 = vst.msk [vmem:[#allocation3 + $0x8] sm:$0xff] %vm949, %v1638
    %v1641 = vld [vmem:[#allocation3] sm:$0xff]
    %v1642 = vld [vmem:[#allocation3 + $0x8] sm:$0xff]
    %v1643 = vld [vmem:[%s5] sm:$0xf]
    %v1644 = vld [vmem:[%s5 + $0x4] sm:$0xf]
    %v1645 = vld [vmem:[%s5 + $0x8] sm:$0xf]
    %v1646 = vld [vmem:[%s5 + $0xc] sm:$0xf]
    %v1647 = vpack.c.bf16 %v1642, %v1641
    %v1648 = vld [vmem:[%s9 + $0x3] sm:$0x1]
    %v1649 = vlaneseq
    %v1650 = vshrl.u32 %v1649, 7
    %v1651 = vsub.s32 0, %v1650
    %v1652 = vrot.slane %v1648, %v1651
    %v1657 = vunpack.c.l.b16 %v1643
    %v1658 = vunpack.c.l.b16 %v1644
    %v1659 = vunpack.c.l.b16 %v1645
    %v1660 = vunpack.c.l.b16 %v1646
    %v1661 = vpack.c.b16 %v1658, %v1657
    %v1662 = vpack.c.b16 %v1660, %v1659
    %v1666 = vsel %vm151, %v1647, 0
    %1668 = vmatprep.subr.bf16.mxu0 0
    %1669 = vmatpush1.bf16.msra.mxu0 %v1661
    %1670 = vmatprep.subr.bf16.mxu0 0
    %1671 = vmatpush1.bf16.msra.mxu0 %v1662
    %1672 = vmatprep.subr.bf16.mxu0 0
    %1673 = vmatpush1.bf16.msra.mxu0 0
    %1674 = vmatprep.subr.bf16.mxu0 0
    %1675 = vmatpush1.bf16.msra.mxu0 0
    %1676 = vmatprep.subr.bf16.mxu0 0
    %1677 = vmatpush1.bf16.msra.mxu0 0
    %1678 = vmatprep.subr.bf16.mxu0 0
    %1679 = vmatpush1.bf16.msra.mxu0 0
    %1680 = vmatprep.subr.bf16.mxu0 0
    %1681 = vmatpush1.bf16.msra.mxu0 0
    %1682 = vmatprep.subr.bf16.mxu0 0
    %1683 = vmatpush1.bf16.msra.mxu0 0
    %1684 = vmatprep.subr.bf16.mxu0 0
    %1685 = vmatpush1.bf16.msra.mxu0 0
    %1686 = vmatprep.subr.bf16.mxu0 0
    %1687 = vmatpush1.bf16.msra.mxu0 0
    %1688 = vmatprep.subr.bf16.mxu0 0
    %1689 = vmatpush1.bf16.msra.mxu0 0
    %1690 = vmatprep.subr.bf16.mxu0 0
    %1691 = vmatpush1.bf16.msra.mxu0 0
    %1692 = vmatprep.subr.bf16.mxu0 0
    %1693 = vmatpush1.bf16.msra.mxu0 0
    %1694 = vmatprep.subr.bf16.mxu0 0
    %1695 = vmatpush1.bf16.msra.mxu0 0
    %1696 = vmatprep.subr.bf16.mxu0 0
    %1697 = vmatpush1.bf16.msra.mxu0 0
    %1698 = vmatprep.subr.bf16.mxu0 0
    %1699 = vmatpush1.bf16.msra.mxu0 0
    %1700 = vmatprep.mubr.bf16.mxu0 0
    %1701 = vmatmul.mubr.bf16.gmra.mrb[0].mxu0 %v1666
    %v1702 = vpop.f32.mrb[0].mxu0
    %v1703 = vadd.f32 %v1652, %v1702
    %v1704 = vpop.f32.mrb[0].mxu0
    %v1705 = vpop.f32.mrb[0].mxu0
    %v1706 = vadd.f32 %v1652, %v1705
    %v1707 = vpop.f32.mrb[0].mxu0
    %1708 = vdwg.mxu0
    %v1709 = vadd.f32 %v189, %v1703
    %v1710 = vadd.f32 %v190, %v1706
    %v1711 = vld [vmem:[%s9 + $0x4] sm:$0x1]
    %v1712 = vld [vmem:[%s9 + $0x5] sm:$0x1]
    %v1713 = vsel %vm151, %v1709, 0.0
    %1714 = vadd.xlane.f32.xlu0 %v1713
    %v1715 = vpop.xlane.xlu0 %1714
    %v1716 = vsel %vm151, %v1710, 0.0
    %1717 = vadd.xlane.f32.xlu0 %v1716
    %v1718 = vpop.xlane.xlu0 %1717
    %v1719 = vmul.f32 %v1715, %v158
    %v1720 = vmul.f32 %v1718, %v158
    %v1721 = vsub.f32 %v1709, %v1719
    %v1722 = vsub.f32 %v1710, %v1720
    %v1723 = vmul.f32 %v1721, %v1721
    %v1724 = vmul.f32 %v1722, %v1722
    %v1725 = vsel %vm151, %v1723, 0.0
    %1726 = vadd.xlane.f32.xlu0 %v1725
    %v1727 = vpop.xlane.xlu0 %1726
    %v1728 = vsel %vm151, %v1724, 0.0
    %1729 = vadd.xlane.f32.xlu0 %v1728
    %v1730 = vpop.xlane.xlu0 %1729
    %v1731 = vmul.f32 %v1727, %v158
    %v1732 = vmul.f32 %v1730, %v158
    %v1733 = vadd.f32 %v1731, 1e-12
    %v1734 = vadd.f32 %v1732, 1e-12
    %v1735 = vrsqrt.pop %v1733
    %v1736 = vrsqrt.pop %v1734
    %v1737 = vmul.f32 %v1721, %v1735
    %v1738 = vmul.f32 %v1722, %v1736
    %v1739 = vlaneseq
    %v1740 = vshrl.u32 %v1739, 7
    %v1741 = vsub.s32 0, %v1740
    %v1742 = vrot.slane %v1711, %v1741
    %v1743 = vmul.f32 %v1737, %v1742
    %v1744 = vmul.f32 %v1738, %v1742
    %v1745 = vlaneseq
    %v1746 = vshrl.u32 %v1745, 7
    %v1747 = vsub.s32 0, %v1746
    %v1748 = vrot.slane %v1712, %v1747
    %v1749 = vadd.f32 %v1743, %v1748
    %v1750 = vadd.f32 %v1744, %v1748
    %v1751 = vld [vmem:[%s6] sm:$0xf]
    %v1752 = vld [vmem:[%s6 + $0x4] sm:$0xf]
    %v1753 = vld [vmem:[%s6 + $0x8] sm:$0xf]
    %v1754 = vld [vmem:[%s6 + $0xc] sm:$0xf]
    %v1755 = vpack.c.bf16 %v1750, %v1749
    %v1756 = vld [vmem:[%s9 + $0x6] sm:$0x1]
    %v1757 = vlaneseq
    %v1758 = vshrl.u32 %v1757, 7
    %v1759 = vsub.s32 0, %v1758
    %v1760 = vrot.slane %v1756, %v1759
    %v1765 = vunpack.c.l.b16 %v1751
    %v1766 = vunpack.c.l.b16 %v1752
    %v1767 = vunpack.c.l.b16 %v1753
    %v1768 = vunpack.c.l.b16 %v1754
    %v1769 = vpack.c.b16 %v1766, %v1765
    %v1770 = vpack.c.b16 %v1768, %v1767
    %v1774 = vsel %vm151, %v1755, 0
    %1776 = vmatprep.subr.bf16.mxu0 0
    %1777 = vmatpush1.bf16.msra.mxu0 %v1769
    %1778 = vmatprep.subr.bf16.mxu0 0
    %1779 = vmatpush1.bf16.msra.mxu0 %v1770
    %1780 = vmatprep.subr.bf16.mxu0 0
    %1781 = vmatpush1.bf16.msra.mxu0 0
    %1782 = vmatprep.subr.bf16.mxu0 0
    %1783 = vmatpush1.bf16.msra.mxu0 0
    %1784 = vmatprep.subr.bf16.mxu0 0
    %1785 = vmatpush1.bf16.msra.mxu0 0
    %1786 = vmatprep.subr.bf16.mxu0 0
    %1787 = vmatpush1.bf16.msra.mxu0 0
    %1788 = vmatprep.subr.bf16.mxu0 0
    %1789 = vmatpush1.bf16.msra.mxu0 0
    %1790 = vmatprep.subr.bf16.mxu0 0
    %1791 = vmatpush1.bf16.msra.mxu0 0
    %1792 = vmatprep.subr.bf16.mxu0 0
    %1793 = vmatpush1.bf16.msra.mxu0 0
    %1794 = vmatprep.subr.bf16.mxu0 0
    %1795 = vmatpush1.bf16.msra.mxu0 0
    %1796 = vmatprep.subr.bf16.mxu0 0
    %1797 = vmatpush1.bf16.msra.mxu0 0
    %1798 = vmatprep.subr.bf16.mxu0 0
    %1799 = vmatpush1.bf16.msra.mxu0 0
    %1800 = vmatprep.subr.bf16.mxu0 0
    %1801 = vmatpush1.bf16.msra.mxu0 0
    %1802 = vmatprep.subr.bf16.mxu0 0
    %1803 = vmatpush1.bf16.msra.mxu0 0
    %1804 = vmatprep.subr.bf16.mxu0 0
    %1805 = vmatpush1.bf16.msra.mxu0 0
    %1806 = vmatprep.subr.bf16.mxu0 0
    %1807 = vmatpush1.bf16.msra.mxu0 0
    %1808 = vmatprep.mubr.bf16.mxu0 0
    %1809 = vmatmul.mubr.bf16.gmra.mrb[0].mxu0 %v1774
    %v1810 = vpop.f32.mrb[0].mxu0
    %v1811 = vadd.f32 %v1760, %v1810
    %v1812 = vpop.f32.mrb[0].mxu0
    %v1813 = vpop.f32.mrb[0].mxu0
    %v1814 = vadd.f32 %v1760, %v1813
    %v1815 = vpop.f32.mrb[0].mxu0
    %1816 = vdwg.mxu0
    %v1817 = vmul.f32 %v1811, 0.5
    %v1818 = vmul.f32 %v1814, 0.5
    %v1819 = vmul.f32 %v1811, 0.70710677
    %v1820 = vmul.f32 %v1814, 0.70710677
    %vm1821 = vcmp.ge.f32.partialorder %v1819, 0.0
    %vm1822 = vcmp.ge.f32.partialorder %v1820, 0.0
    %v1823 = vsel %vm1821, 1.0, -1.0
    %v1824 = vsel %vm1822, 1.0, -1.0
    %v1825 = vand.u32 2147483647, %v1819
    %v1826 = vand.u32 2147483647, %v1820
    %v1827 = vmul.f32 %v1825, 0.3275911
    %v1828 = vmul.f32 %v1826, 0.3275911
    %v1829 = vadd.f32 %v1827, 1.0
    %v1830 = vadd.f32 %v1828, 1.0
    %v1831 = vrcp.pop %v1829
    %v1832 = vmul.f32 1.0, %v1831
    %v1833 = vrcp.pop %v1830
    %v1834 = vmul.f32 1.0, %v1833
    %v1835 = vmul.f32 %v1832, 1.0614054
    %v1836 = vmul.f32 %v1834, 1.0614054
    %v1837 = vadd.f32 %v1835, -1.4531521
    %v1838 = vadd.f32 %v1836, -1.4531521
    %v1839 = vmul.f32 %v1837, %v1832
    %v1840 = vmul.f32 %v1838, %v1834
    %v1841 = vadd.f32 %v1839, 1.4214138
    %v1842 = vadd.f32 %v1840, 1.4214138
    %v1843 = vmul.f32 %v1841, %v1832
    %v1844 = vmul.f32 %v1842, %v1834
    %v1845 = vadd.f32 %v1843, -0.28449672
    %v1846 = vadd.f32 %v1844, -0.28449672
    %v1847 = vmul.f32 %v1845, %v1832
    %v1848 = vmul.f32 %v1846, %v1834
    %v1849 = vadd.f32 %v1847, 0.2548296
    %v1850 = vadd.f32 %v1848, 0.2548296
    %v1851 = vmul.f32 %v1849, %v1832
    %v1852 = vmul.f32 %v1850, %v1834
    %v1853 = vsub.f32 0.0, %v1825
    %v1854 = vsub.f32 0.0, %v1826
    %v1855 = vmul.f32 %v1853, %v1825
    %v1856 = vmul.f32 %v1854, %v1826
    %v1857 = vmul.f32 %v1855, 1.442695
    %v1858 = vpow.pop %v1857
    %v1859 = vmul.f32 %v1856, 1.442695
    %v1860 = vpow.pop %v1859
    %v1861 = vmul.f32 %v1851, %v1858
    %v1862 = vmul.f32 %v1852, %v1860
    %v1863 = vsub.f32 1.0, %v1861
    %v1864 = vsub.f32 1.0, %v1862
    %v1865 = vmul.f32 %v1823, %v1863
    %v1866 = vmul.f32 %v1824, %v1864
    %v1867 = vadd.f32 %v1865, 1.0
    %v1868 = vadd.f32 %v1866, 1.0
    %v1869 = vmul.f32 %v1817, %v1867
    %v1870 = vmul.f32 %v1818, %v1868
    %v1871 = vld [vmem:[%s7] sm:$0xf]
    %v1872 = vld [vmem:[%s7 + $0x4] sm:$0xf]
    %v1873 = vld [vmem:[%s7 + $0x8] sm:$0xf]
    %v1874 = vld [vmem:[%s7 + $0xc] sm:$0xf]
    %v1875 = vld [vmem:[%s7 + $0x10] sm:$0xf]
    %v1876 = vld [vmem:[%s7 + $0x14] sm:$0xf]
    %v1877 = vld [vmem:[%s7 + $0x18] sm:$0xf]
    %v1878 = vld [vmem:[%s7 + $0x1c] sm:$0xf]
    %v1879 = vpack.c.bf16 %v1870, %v1869
    %v1880 = vld [vmem:[%s9 + $0x7] sm:$0x1]
    %v1881 = vlaneseq
    %v1882 = vshrl.u32 %v1881, 7
    %v1883 = vsub.s32 0, %v1882
    %v1884 = vrot.slane %v1880, %v1883
    %v1893 = vunpack.c.l.b16 %v1871
    %v1894 = vunpack.c.l.b16 %v1872
    %v1895 = vunpack.c.l.b16 %v1873
    %v1896 = vunpack.c.l.b16 %v1874
    %v1897 = vunpack.c.l.b16 %v1875
    %v1898 = vunpack.c.l.b16 %v1876
    %v1899 = vunpack.c.l.b16 %v1877
    %v1900 = vunpack.c.l.b16 %v1878
    %v1901 = vpack.c.b16 %v1894, %v1893
    %v1902 = vpack.c.b16 %v1896, %v1895
    %v1903 = vpack.c.b16 %v1898, %v1897
    %v1904 = vpack.c.b16 %v1900, %v1899
    %vm1909 = vcmask 523264
    %v1911 = vsel %vm1909, %v1879, 0
    %1913 = vmatprep.subr.bf16.mxu0 0
    %1914 = vmatpush1.bf16.msra.mxu0 %v1901
    %1915 = vmatprep.subr.bf16.mxu0 0
    %1916 = vmatpush1.bf16.msra.mxu0 %v1902
    %1917 = vmatprep.subr.bf16.mxu0 0
    %1918 = vmatpush1.bf16.msra.mxu0 %v1903
    %1919 = vmatprep.subr.bf16.mxu0 0
    %1920 = vmatpush1.bf16.msra.mxu0 %v1904
    %1921 = vmatprep.subr.bf16.mxu0 0
    %1922 = vmatpush1.bf16.msra.mxu0 0
    %1923 = vmatprep.subr.bf16.mxu0 0
    %1924 = vmatpush1.bf16.msra.mxu0 0
    %1925 = vmatprep.subr.bf16.mxu0 0
    %1926 = vmatpush1.bf16.msra.mxu0 0
    %1927 = vmatprep.subr.bf16.mxu0 0
    %1928 = vmatpush1.bf16.msra.mxu0 0
    %1929 = vmatprep.subr.bf16.mxu0 0
    %1930 = vmatpush1.bf16.msra.mxu0 0
    %1931 = vmatprep.subr.bf16.mxu0 0
    %1932 = vmatpush1.bf16.msra.mxu0 0
    %1933 = vmatprep.subr.bf16.mxu0 0
    %1934 = vmatpush1.bf16.msra.mxu0 0
    %1935 = vmatprep.subr.bf16.mxu0 0
    %1936 = vmatpush1.bf16.msra.mxu0 0
    %1937 = vmatprep.subr.bf16.mxu0 0
    %1938 = vmatpush1.bf16.msra.mxu0 0
    %1939 = vmatprep.subr.bf16.mxu0 0
    %1940 = vmatpush1.bf16.msra.mxu0 0
    %1941 = vmatprep.subr.bf16.mxu0 0
    %1942 = vmatpush1.bf16.msra.mxu0 0
    %1943 = vmatprep.subr.bf16.mxu0 0
    %1944 = vmatpush1.bf16.msra.mxu0 0
    %1945 = vmatprep.mubr.bf16.mxu0 0
    %1946 = vmatmul.mubr.bf16.gmra.mrb[0].mxu0 %v1911
    %v1947 = vpop.f32.mrb[0].mxu0
    %v1948 = vadd.f32 %v1884, %v1947
    %v1949 = vpop.f32.mrb[0].mxu0
    %v1950 = vpop.f32.mrb[0].mxu0
    %v1951 = vadd.f32 %v1884, %v1950
    %v1952 = vpop.f32.mrb[0].mxu0
    %1953 = vdwg.mxu0
    %v1954 = vadd.f32 %v1749, %v1948
    %v1955 = vadd.f32 %v1750, %v1951
    %v1956 = vld [vmem:[%s9 + $0x8] sm:$0x1]
    %v1957 = vld [vmem:[%s9 + $0x9] sm:$0x1]
    %v1958 = vsel %vm151, %v1954, 0.0
    %1959 = vadd.xlane.f32.xlu0 %v1958
    %v1960 = vpop.xlane.xlu0 %1959
    %v1961 = vsel %vm151, %v1955, 0.0
    %1962 = vadd.xlane.f32.xlu0 %v1961
    %v1963 = vpop.xlane.xlu0 %1962
    %v1964 = vmul.f32 %v1960, %v158
    %v1965 = vmul.f32 %v1963, %v158
    %v1966 = vsub.f32 %v1954, %v1964
    %v1967 = vsub.f32 %v1955, %v1965
    %v1968 = vmul.f32 %v1966, %v1966
    %v1969 = vmul.f32 %v1967, %v1967
    %v1970 = vsel %vm151, %v1968, 0.0
    %1971 = vadd.xlane.f32.xlu0 %v1970
    %v1972 = vpop.xlane.xlu0 %1971
    %v1973 = vsel %vm151, %v1969, 0.0
    %1974 = vadd.xlane.f32.xlu0 %v1973
    %v1975 = vpop.xlane.xlu0 %1974
    %v1976 = vmul.f32 %v1972, %v158
    %v1977 = vmul.f32 %v1975, %v158
    %v1978 = vadd.f32 %v1976, 1e-12
    %v1979 = vadd.f32 %v1977, 1e-12
    %v1980 = vrsqrt.pop %v1978
    %v1981 = vrsqrt.pop %v1979
    %v1982 = vmul.f32 %v1966, %v1980
    %v1983 = vmul.f32 %v1967, %v1981
    %v1984 = vlaneseq
    %v1985 = vshrl.u32 %v1984, 7
    %v1986 = vsub.s32 0, %v1985
    %v1987 = vrot.slane %v1956, %v1986
    %v1988 = vmul.f32 %v1982, %v1987
    %v1989 = vmul.f32 %v1983, %v1987
    %v1990 = vlaneseq
    %v1991 = vshrl.u32 %v1990, 7
    %v1992 = vsub.s32 0, %v1991
    %v1993 = vrot.slane %v1957, %v1992
    %v1994 = vadd.f32 %v1988, %v1993
    %v1995 = vadd.f32 %v1989, %v1993
    %s1996 = scalar_lea.vmem %s4, 16
    %v1997 = vld [vmem:[%s1996] sm:$0xf]
    %v1998 = vld [vmem:[%s1996 + $0x4] sm:$0xf]
    %v1999 = vld [vmem:[%s1996 + $0x8] sm:$0xf]
    %v2000 = vld [vmem:[%s1996 + $0xc] sm:$0xf]
    %v2001 = vpack.c.bf16 %v1995, %v1994
    %v2002 = vld [vmem:[%s9 + $0xa] sm:$0x1]
    %v2003 = vlaneseq
    %v2004 = vshrl.u32 %v2003, 7
    %v2005 = vsub.s32 0, %v2004
    %v2006 = vrot.slane %v2002, %v2005
    %v2011 = vunpack.c.l.b16 %v1997
    %v2012 = vunpack.c.l.b16 %v1998
    %v2013 = vunpack.c.l.b16 %v1999
    %v2014 = vunpack.c.l.b16 %v2000
    %v2015 = vpack.c.b16 %v2012, %v2011
    %v2016 = vpack.c.b16 %v2014, %v2013
    %v2020 = vsel %vm151, %v2001, 0
    %2022 = vmatprep.subr.bf16.mxu0 0
    %2023 = vmatpush1.bf16.msra.mxu0 %v2015
    %2024 = vmatprep.subr.bf16.mxu0 0
    %2025 = vmatpush1.bf16.msra.mxu0 %v2016
    %2026 = vmatprep.subr.bf16.mxu0 0
    %2027 = vmatpush1.bf16.msra.mxu0 0
    %2028 = vmatprep.subr.bf16.mxu0 0
    %2029 = vmatpush1.bf16.msra.mxu0 0
    %2030 = vmatprep.subr.bf16.mxu0 0
    %2031 = vmatpush1.bf16.msra.mxu0 0
    %2032 = vmatprep.subr.bf16.mxu0 0
    %2033 = vmatpush1.bf16.msra.mxu0 0
    %2034 = vmatprep.subr.bf16.mxu0 0
    %2035 = vmatpush1.bf16.msra.mxu0 0
    %2036 = vmatprep.subr.bf16.mxu0 0
    %2037 = vmatpush1.bf16.msra.mxu0 0
    %2038 = vmatprep.subr.bf16.mxu0 0
    %2039 = vmatpush1.bf16.msra.mxu0 0
    %2040 = vmatprep.subr.bf16.mxu0 0
    %2041 = vmatpush1.bf16.msra.mxu0 0
    %2042 = vmatprep.subr.bf16.mxu0 0
    %2043 = vmatpush1.bf16.msra.mxu0 0
    %2044 = vmatprep.subr.bf16.mxu0 0
    %2045 = vmatpush1.bf16.msra.mxu0 0
    %2046 = vmatprep.subr.bf16.mxu0 0
    %2047 = vmatpush1.bf16.msra.mxu0 0
    %2048 = vmatprep.subr.bf16.mxu0 0
    %2049 = vmatpush1.bf16.msra.mxu0 0
    %2050 = vmatprep.subr.bf16.mxu0 0
    %2051 = vmatpush1.bf16.msra.mxu0 0
    %2052 = vmatprep.subr.bf16.mxu0 0
    %2053 = vmatpush1.bf16.msra.mxu0 0
    %2054 = vmatprep.mubr.bf16.mxu0 0
    %2055 = vmatmul.mubr.bf16.gmra.mrb[0].mxu0 %v2020
    %v2056 = vpop.f32.mrb[0].mxu0
    %v2057 = vadd.f32 %v2006, %v2056
    %v2058 = vpop.f32.mrb[0].mxu0
    %v2059 = vpop.f32.mrb[0].mxu0
    %v2060 = vadd.f32 %v2006, %v2059
    %v2061 = vpop.f32.mrb[0].mxu0
    %2062 = vdwg.mxu0
    %v2063 = vld [vmem:[%s1] sm:$0x1]
    %v2064 = vsub.f32 1.0, %v2063
    %v2065 = vmul.f32 %v2064, -10000.0
    %2067 = vrot.lane.b32.xlu0 %v2057, 96
    %v2068 = vpop.permute.xlu0 %2067
    %v2069 = vsel %vm263, %v2057, 0
    %v2071 = vsel %vm263, %v2068, 0
    %2073 = vmatprep.subr.mxu0 0.0
    %2074 = vmatpush1.xpose.msra.mxu0 %v2071
    %2075 = vmatprep.subr.mxu0 0.0
    %2076 = vmatpush1.xpose.msra.mxu0 0.0
    %2077 = vmatprep.subr.mxu0 0.0
    %2078 = vmatpush1.xpose.msra.mxu0 0.0
    %2079 = vmatprep.subr.mxu0 0.0
    %2080 = vmatpush1.xpose.msra.mxu0 0.0
    %2081 = vmatprep.subr.mxu0 0.0
    %2082 = vmatpush1.xpose.msra.mxu0 0.0
    %2083 = vmatprep.subr.mxu0 0.0
    %2084 = vmatpush1.xpose.msra.mxu0 0.0
    %2085 = vmatprep.subr.mxu0 0.0
    %2086 = vmatpush1.xpose.msra.mxu0 0.0
    %2087 = vmatprep.subr.mxu0 0.0
    %2088 = vmatpush1.xpose.msra.mxu0 0.0
    %2089 = vmatprep.subr.mxu0 0.0
    %2090 = vmatpush1.xpose.msra.mxu0 0.0
    %2091 = vmatprep.subr.mxu0 0.0
    %2092 = vmatpush1.xpose.msra.mxu0 0.0
    %2093 = vmatprep.subr.mxu0 0.0
    %2094 = vmatpush1.xpose.msra.mxu0 0.0
    %2095 = vmatprep.subr.mxu0 0.0
    %2096 = vmatpush1.xpose.msra.mxu0 0.0
    %2097 = vmatprep.subr.mxu0 0.0
    %2098 = vmatpush1.xpose.msra.mxu0 0.0
    %2099 = vmatprep.subr.mxu0 0.0
    %2100 = vmatpush1.xpose.msra.mxu0 0.0
    %2101 = vmatprep.subr.mxu0 0.0
    %2102 = vmatpush1.xpose.msra.mxu0 0.0
    %2103 = vmatprep.subr.mxu0 0.0
    %2104 = vmatpush1.xpose.msra.mxu0 0.0
    %2105 = vmatprep.subr.mxu0 0.0
    %2106 = vmatpush1.xpose.msra.mxu0 0.0
    %2107 = vmatprep.subr.mxu0 0.0
    %2108 = vmatpush1.xpose.msra.mxu0 0.0
    %2109 = vmatprep.subr.mxu0 0.0
    %2110 = vmatpush1.xpose.msra.mxu0 0.0
    %2111 = vmatprep.subr.mxu0 0.0
    %2112 = vmatpush1.xpose.msra.mxu0 0.0
    %2113 = vmatprep.subr.mxu0 0.0
    %2114 = vmatpush1.xpose.msra.mxu0 0.0
    %2115 = vmatprep.subr.mxu0 0.0
    %2116 = vmatpush1.xpose.msra.mxu0 0.0
    %2117 = vmatprep.subr.mxu0 0.0
    %2118 = vmatpush1.xpose.msra.mxu0 0.0
    %2119 = vmatprep.subr.mxu0 0.0
    %2120 = vmatpush1.xpose.msra.mxu0 0.0
    %2121 = vmatprep.subr.mxu0 0.0
    %2122 = vmatpush1.xpose.msra.mxu0 0.0
    %2123 = vmatprep.subr.mxu0 0.0
    %2124 = vmatpush1.xpose.msra.mxu0 0.0
    %2125 = vmatprep.subr.mxu0 0.0
    %2126 = vmatpush1.xpose.msra.mxu0 0.0
    %2127 = vmatprep.subr.mxu0 0.0
    %2128 = vmatpush1.xpose.msra.mxu0 0.0
    %2129 = vmatprep.subr.mxu0 0.0
    %2130 = vmatpush1.xpose.msra.mxu0 0.0
    %2131 = vmatprep.subr.mxu0 0.0
    %2132 = vmatpush1.xpose.msra.mxu0 0.0
    %2133 = vmatprep.subr.mxu0 0.0
    %2134 = vmatpush1.xpose.msra.mxu0 0.0
    %2135 = vmatprep.subr.mxu0 0.0
    %2136 = vmatpush1.xpose.msra.mxu0 0.0
    %2137 = vmatprep.mubr.f32.mxu0 0.0
    %2138 = vmatmul.mubr.f32.gmra.mrb[0].mxu0 %v2069
    %v2139 = vpop.f32.mrb[0].mxu0
    %v2140 = vadd.f32 0.0, %v2139
    %v2141 = vpop.f32.mrb[0].mxu0
    %2142 = vdwg.mxu0
    %v2143 = vmul.f32 %v2140, 0.35355338
    %v2144 = vlaneseq
    %v2145 = vshrl.u32 %v2144, 7
    %v2146 = vsub.s32 0, %v2145
    %v2147 = vrot.slane %v2065, %v2146
    %v2148 = vadd.f32 %v2143, %v2147
    %v2149 = vsel %vm263, %v2148, -inf
    %2150 = vmax.xlane.f32.xlu0 %v2149
    %v2151 = vpop.xlane.xlu0 %2150
    %v2152 = vsub.f32 %v2148, %v2151
    %v2153 = vmul.f32 %v2152, 1.442695
    %v2154 = vpow.pop %v2153
    %v2155 = vsel %vm263, %v2154, 0.0
    %2156 = vadd.xlane.f32.xlu0 %v2155
    %v2157 = vpop.xlane.xlu0 %2156
    %v2158 = vrcp.pop %v2157
    %v2159 = vmul.f32 %v2154, %v2158
    %2160 = vrot.lane.b32.xlu0 %v2057, 64
    %v2161 = vpop.permute.xlu0 %2160
    %v2164 = vsel %vm263, %v2159, 0
    %2166 = vmatprep.subr.mxu0 0.0
    %2167 = vmatpush1.msra.mxu0 %v2161
    %2168 = vmatprep.subr.mxu0 0.0
    %2169 = vmatpush1.msra.mxu0 0.0
    %2170 = vmatprep.subr.mxu0 0.0
    %2171 = vmatpush1.msra.mxu0 0.0
    %2172 = vmatprep.subr.mxu0 0.0
    %2173 = vmatpush1.msra.mxu0 0.0
    %2174 = vmatprep.subr.mxu0 0.0
    %2175 = vmatpush1.msra.mxu0 0.0
    %2176 = vmatprep.subr.mxu0 0.0
    %2177 = vmatpush1.msra.mxu0 0.0
    %2178 = vmatprep.subr.mxu0 0.0
    %2179 = vmatpush1.msra.mxu0 0.0
    %2180 = vmatprep.subr.mxu0 0.0
    %2181 = vmatpush1.msra.mxu0 0.0
    %2182 = vmatprep.subr.mxu0 0.0
    %2183 = vmatpush1.msra.mxu0 0.0
    %2184 = vmatprep.subr.mxu0 0.0
    %2185 = vmatpush1.msra.mxu0 0.0
    %2186 = vmatprep.subr.mxu0 0.0
    %2187 = vmatpush1.msra.mxu0 0.0
    %2188 = vmatprep.subr.mxu0 0.0
    %2189 = vmatpush1.msra.mxu0 0.0
    %2190 = vmatprep.subr.mxu0 0.0
    %2191 = vmatpush1.msra.mxu0 0.0
    %2192 = vmatprep.subr.mxu0 0.0
    %2193 = vmatpush1.msra.mxu0 0.0
    %2194 = vmatprep.subr.mxu0 0.0
    %2195 = vmatpush1.msra.mxu0 0.0
    %2196 = vmatprep.subr.mxu0 0.0
    %2197 = vmatpush1.msra.mxu0 0.0
    %2198 = vmatprep.subr.mxu0 0.0
    %2199 = vmatpush1.msra.mxu0 0.0
    %2200 = vmatprep.subr.mxu0 0.0
    %2201 = vmatpush1.msra.mxu0 0.0
    %2202 = vmatprep.subr.mxu0 0.0
    %2203 = vmatpush1.msra.mxu0 0.0
    %2204 = vmatprep.subr.mxu0 0.0
    %2205 = vmatpush1.msra.mxu0 0.0
    %2206 = vmatprep.subr.mxu0 0.0
    %2207 = vmatpush1.msra.mxu0 0.0
    %2208 = vmatprep.subr.mxu0 0.0
    %2209 = vmatpush1.msra.mxu0 0.0
    %2210 = vmatprep.subr.mxu0 0.0
    %2211 = vmatpush1.msra.mxu0 0.0
    %2212 = vmatprep.subr.mxu0 0.0
    %2213 = vmatpush1.msra.mxu0 0.0
    %2214 = vmatprep.subr.mxu0 0.0
    %2215 = vmatpush1.msra.mxu0 0.0
    %2216 = vmatprep.subr.mxu0 0.0
    %2217 = vmatpush1.msra.mxu0 0.0
    %2218 = vmatprep.subr.mxu0 0.0
    %2219 = vmatpush1.msra.mxu0 0.0
    %2220 = vmatprep.subr.mxu0 0.0
    %2221 = vmatpush1.msra.mxu0 0.0
    %2222 = vmatprep.subr.mxu0 0.0
    %2223 = vmatpush1.msra.mxu0 0.0
    %2224 = vmatprep.subr.mxu0 0.0
    %2225 = vmatpush1.msra.mxu0 0.0
    %2226 = vmatprep.subr.mxu0 0.0
    %2227 = vmatpush1.msra.mxu0 0.0
    %2228 = vmatprep.subr.mxu0 0.0
    %2229 = vmatpush1.msra.mxu0 0.0
    %2230 = vmatprep.mubr.f32.mxu0 0.0
    %2231 = vmatmul.mubr.f32.gmra.mrb[0].mxu0 %v2164
    %v2232 = vpop.f32.mrb[0].mxu0
    %v2233 = vadd.f32 0.0, %v2232
    %v2234 = vpop.f32.mrb[0].mxu0
    %2235 = vdwg.mxu0
    %2236 = vst.msk [vmem:[#allocation3] sm:$0xff] %vm263, %v2233
    %2237 = vrot.lane.b32.xlu0 %v2057, 120
    %v2238 = vpop.permute.xlu0 %2237
    %2239 = vrot.lane.b32.xlu0 %v2057, 88
    %v2240 = vpop.permute.xlu0 %2239
    %v2241 = vsel %vm263, %v2238, 0
    %v2243 = vsel %vm263, %v2240, 0
    %2245 = vmatprep.subr.mxu0 0.0
    %2246 = vmatpush1.xpose.msra.mxu0 %v2243
    %2247 = vmatprep.subr.mxu0 0.0
    %2248 = vmatpush1.xpose.msra.mxu0 0.0
    %2249 = vmatprep.subr.mxu0 0.0
    %2250 = vmatpush1.xpose.msra.mxu0 0.0
    %2251 = vmatprep.subr.mxu0 0.0
    %2252 = vmatpush1.xpose.msra.mxu0 0.0
    %2253 = vmatprep.subr.mxu0 0.0
    %2254 = vmatpush1.xpose.msra.mxu0 0.0
    %2255 = vmatprep.subr.mxu0 0.0
    %2256 = vmatpush1.xpose.msra.mxu0 0.0
    %2257 = vmatprep.subr.mxu0 0.0
    %2258 = vmatpush1.xpose.msra.mxu0 0.0
    %2259 = vmatprep.subr.mxu0 0.0
    %2260 = vmatpush1.xpose.msra.mxu0 0.0
    %2261 = vmatprep.subr.mxu0 0.0
    %2262 = vmatpush1.xpose.msra.mxu0 0.0
    %2263 = vmatprep.subr.mxu0 0.0
    %2264 = vmatpush1.xpose.msra.mxu0 0.0
    %2265 = vmatprep.subr.mxu0 0.0
    %2266 = vmatpush1.xpose.msra.mxu0 0.0
    %2267 = vmatprep.subr.mxu0 0.0
    %2268 = vmatpush1.xpose.msra.mxu0 0.0
    %2269 = vmatprep.subr.mxu0 0.0
    %2270 = vmatpush1.xpose.msra.mxu0 0.0
    %2271 = vmatprep.subr.mxu0 0.0
    %2272 = vmatpush1.xpose.msra.mxu0 0.0
    %2273 = vmatprep.subr.mxu0 0.0
    %2274 = vmatpush1.xpose.msra.mxu0 0.0
    %2275 = vmatprep.subr.mxu0 0.0
    %2276 = vmatpush1.xpose.msra.mxu0 0.0
    %2277 = vmatprep.subr.mxu0 0.0
    %2278 = vmatpush1.xpose.msra.mxu0 0.0
    %2279 = vmatprep.subr.mxu0 0.0
    %2280 = vmatpush1.xpose.msra.mxu0 0.0
    %2281 = vmatprep.subr.mxu0 0.0
    %2282 = vmatpush1.xpose.msra.mxu0 0.0
    %2283 = vmatprep.subr.mxu0 0.0
    %2284 = vmatpush1.xpose.msra.mxu0 0.0
    %2285 = vmatprep.subr.mxu0 0.0
    %2286 = vmatpush1.xpose.msra.mxu0 0.0
    %2287 = vmatprep.subr.mxu0 0.0
    %2288 = vmatpush1.xpose.msra.mxu0 0.0
    %2289 = vmatprep.subr.mxu0 0.0
    %2290 = vmatpush1.xpose.msra.mxu0 0.0
    %2291 = vmatprep.subr.mxu0 0.0
    %2292 = vmatpush1.xpose.msra.mxu0 0.0
    %2293 = vmatprep.subr.mxu0 0.0
    %2294 = vmatpush1.xpose.msra.mxu0 0.0
    %2295 = vmatprep.subr.mxu0 0.0
    %2296 = vmatpush1.xpose.msra.mxu0 0.0
    %2297 = vmatprep.subr.mxu0 0.0
    %2298 = vmatpush1.xpose.msra.mxu0 0.0
    %2299 = vmatprep.subr.mxu0 0.0
    %2300 = vmatpush1.xpose.msra.mxu0 0.0
    %2301 = vmatprep.subr.mxu0 0.0
    %2302 = vmatpush1.xpose.msra.mxu0 0.0
    %2303 = vmatprep.subr.mxu0 0.0
    %2304 = vmatpush1.xpose.msra.mxu0 0.0
    %2305 = vmatprep.subr.mxu0 0.0
    %2306 = vmatpush1.xpose.msra.mxu0 0.0
    %2307 = vmatprep.subr.mxu0 0.0
    %2308 = vmatpush1.xpose.msra.mxu0 0.0
    %2309 = vmatprep.mubr.f32.mxu0 0.0
    %2310 = vmatmul.mubr.f32.gmra.mrb[0].mxu0 %v2241
    %v2311 = vpop.f32.mrb[0].mxu0
    %v2312 = vadd.f32 0.0, %v2311
    %v2313 = vpop.f32.mrb[0].mxu0
    %2314 = vdwg.mxu0
    %v2315 = vmul.f32 %v2312, 0.35355338
    %v2316 = vadd.f32 %v2315, %v2147
    %v2317 = vsel %vm263, %v2316, -inf
    %2318 = vmax.xlane.f32.xlu0 %v2317
    %v2319 = vpop.xlane.xlu0 %2318
    %v2320 = vsub.f32 %v2316, %v2319
    %v2321 = vmul.f32 %v2320, 1.442695
    %v2322 = vpow.pop %v2321
    %v2323 = vsel %vm263, %v2322, 0.0
    %2324 = vadd.xlane.f32.xlu0 %v2323
    %v2325 = vpop.xlane.xlu0 %2324
    %v2326 = vrcp.pop %v2325
    %v2327 = vmul.f32 %v2322, %v2326
    %2328 = vrot.lane.b32.xlu0 %v2057, 56
    %v2329 = vpop.permute.xlu0 %2328
    %v2332 = vsel %vm263, %v2327, 0
    %2334 = vmatprep.subr.mxu0 0.0
    %2335 = vmatpush1.msra.mxu0 %v2329
    %2336 = vmatprep.subr.mxu0 0.0
    %2337 = vmatpush1.msra.mxu0 0.0
    %2338 = vmatprep.subr.mxu0 0.0
    %2339 = vmatpush1.msra.mxu0 0.0
    %2340 = vmatprep.subr.mxu0 0.0
    %2341 = vmatpush1.msra.mxu0 0.0
    %2342 = vmatprep.subr.mxu0 0.0
    %2343 = vmatpush1.msra.mxu0 0.0
    %2344 = vmatprep.subr.mxu0 0.0
    %2345 = vmatpush1.msra.mxu0 0.0
    %2346 = vmatprep.subr.mxu0 0.0
    %2347 = vmatpush1.msra.mxu0 0.0
    %2348 = vmatprep.subr.mxu0 0.0
    %2349 = vmatpush1.msra.mxu0 0.0
    %2350 = vmatprep.subr.mxu0 0.0
    %2351 = vmatpush1.msra.mxu0 0.0
    %2352 = vmatprep.subr.mxu0 0.0
    %2353 = vmatpush1.msra.mxu0 0.0
    %2354 = vmatprep.subr.mxu0 0.0
    %2355 = vmatpush1.msra.mxu0 0.0
    %2356 = vmatprep.subr.mxu0 0.0
    %2357 = vmatpush1.msra.mxu0 0.0
    %2358 = vmatprep.subr.mxu0 0.0
    %2359 = vmatpush1.msra.mxu0 0.0
    %2360 = vmatprep.subr.mxu0 0.0
    %2361 = vmatpush1.msra.mxu0 0.0
    %2362 = vmatprep.subr.mxu0 0.0
    %2363 = vmatpush1.msra.mxu0 0.0
    %2364 = vmatprep.subr.mxu0 0.0
    %2365 = vmatpush1.msra.mxu0 0.0
    %2366 = vmatprep.subr.mxu0 0.0
    %2367 = vmatpush1.msra.mxu0 0.0
    %2368 = vmatprep.subr.mxu0 0.0
    %2369 = vmatpush1.msra.mxu0 0.0
    %2370 = vmatprep.subr.mxu0 0.0
    %2371 = vmatpush1.msra.mxu0 0.0
    %2372 = vmatprep.subr.mxu0 0.0
    %2373 = vmatpush1.msra.mxu0 0.0
    %2374 = vmatprep.subr.mxu0 0.0
    %2375 = vmatpush1.msra.mxu0 0.0
    %2376 = vmatprep.subr.mxu0 0.0
    %2377 = vmatpush1.msra.mxu0 0.0
    %2378 = vmatprep.subr.mxu0 0.0
    %2379 = vmatpush1.msra.mxu0 0.0
    %2380 = vmatprep.subr.mxu0 0.0
    %2381 = vmatpush1.msra.mxu0 0.0
    %2382 = vmatprep.subr.mxu0 0.0
    %2383 = vmatpush1.msra.mxu0 0.0
    %2384 = vmatprep.subr.mxu0 0.0
    %2385 = vmatpush1.msra.mxu0 0.0
    %2386 = vmatprep.subr.mxu0 0.0
    %2387 = vmatpush1.msra.mxu0 0.0
    %2388 = vmatprep.subr.mxu0 0.0
    %2389 = vmatpush1.msra.mxu0 0.0
    %2390 = vmatprep.subr.mxu0 0.0
    %2391 = vmatpush1.msra.mxu0 0.0
    %2392 = vmatprep.subr.mxu0 0.0
    %2393 = vmatpush1.msra.mxu0 0.0
    %2394 = vmatprep.subr.mxu0 0.0
    %2395 = vmatpush1.msra.mxu0 0.0
    %2396 = vmatprep.subr.mxu0 0.0
    %2397 = vmatpush1.msra.mxu0 0.0
    %2398 = vmatprep.mubr.f32.mxu0 0.0
    %2399 = vmatmul.mubr.f32.gmra.mrb[0].mxu0 %v2332
    %v2400 = vpop.f32.mrb[0].mxu0
    %v2401 = vadd.f32 0.0, %v2400
    %v2402 = vpop.f32.mrb[0].mxu0
    %2403 = vdwg.mxu0
    %2405 = vrot.lane.b32.xlu0 %v2401, 8
    %v2406 = vpop.permute.xlu0 %2405
    %2408 = vst.msk [vmem:[#allocation3] sm:$0xff] %vm603, %v2406
    %2409 = vrot.lane.b32.xlu0 %v2057, 112
    %v2410 = vpop.permute.xlu0 %2409
    %2411 = vrot.lane.b32.xlu0 %v2057, 80
    %v2412 = vpop.permute.xlu0 %2411
    %v2413 = vsel %vm263, %v2410, 0
    %v2415 = vsel %vm263, %v2412, 0
    %2417 = vmatprep.subr.mxu0 0.0
    %2418 = vmatpush1.xpose.msra.mxu0 %v2415
    %2419 = vmatprep.subr.mxu0 0.0
    %2420 = vmatpush1.xpose.msra.mxu0 0.0
    %2421 = vmatprep.subr.mxu0 0.0
    %2422 = vmatpush1.xpose.msra.mxu0 0.0
    %2423 = vmatprep.subr.mxu0 0.0
    %2424 = vmatpush1.xpose.msra.mxu0 0.0
    %2425 = vmatprep.subr.mxu0 0.0
    %2426 = vmatpush1.xpose.msra.mxu0 0.0
    %2427 = vmatprep.subr.mxu0 0.0
    %2428 = vmatpush1.xpose.msra.mxu0 0.0
    %2429 = vmatprep.subr.mxu0 0.0
    %2430 = vmatpush1.xpose.msra.mxu0 0.0
    %2431 = vmatprep.subr.mxu0 0.0
    %2432 = vmatpush1.xpose.msra.mxu0 0.0
    %2433 = vmatprep.subr.mxu0 0.0
    %2434 = vmatpush1.xpose.msra.mxu0 0.0
    %2435 = vmatprep.subr.mxu0 0.0
    %2436 = vmatpush1.xpose.msra.mxu0 0.0
    %2437 = vmatprep.subr.mxu0 0.0
    %2438 = vmatpush1.xpose.msra.mxu0 0.0
    %2439 = vmatprep.subr.mxu0 0.0
    %2440 = vmatpush1.xpose.msra.mxu0 0.0
    %2441 = vmatprep.subr.mxu0 0.0
    %2442 = vmatpush1.xpose.msra.mxu0 0.0
    %2443 = vmatprep.subr.mxu0 0.0
    %2444 = vmatpush1.xpose.msra.mxu0 0.0
    %2445 = vmatprep.subr.mxu0 0.0
    %2446 = vmatpush1.xpose.msra.mxu0 0.0
    %2447 = vmatprep.subr.mxu0 0.0
    %2448 = vmatpush1.xpose.msra.mxu0 0.0
    %2449 = vmatprep.subr.mxu0 0.0
    %2450 = vmatpush1.xpose.msra.mxu0 0.0
    %2451 = vmatprep.subr.mxu0 0.0
    %2452 = vmatpush1.xpose.msra.mxu0 0.0
    %2453 = vmatprep.subr.mxu0 0.0
    %2454 = vmatpush1.xpose.msra.mxu0 0.0
    %2455 = vmatprep.subr.mxu0 0.0
    %2456 = vmatpush1.xpose.msra.mxu0 0.0
    %2457 = vmatprep.subr.mxu0 0.0
    %2458 = vmatpush1.xpose.msra.mxu0 0.0
    %2459 = vmatprep.subr.mxu0 0.0
    %2460 = vmatpush1.xpose.msra.mxu0 0.0
    %2461 = vmatprep.subr.mxu0 0.0
    %2462 = vmatpush1.xpose.msra.mxu0 0.0
    %2463 = vmatprep.subr.mxu0 0.0
    %2464 = vmatpush1.xpose.msra.mxu0 0.0
    %2465 = vmatprep.subr.mxu0 0.0
    %2466 = vmatpush1.xpose.msra.mxu0 0.0
    %2467 = vmatprep.subr.mxu0 0.0
    %2468 = vmatpush1.xpose.msra.mxu0 0.0
    %2469 = vmatprep.subr.mxu0 0.0
    %2470 = vmatpush1.xpose.msra.mxu0 0.0
    %2471 = vmatprep.subr.mxu0 0.0
    %2472 = vmatpush1.xpose.msra.mxu0 0.0
    %2473 = vmatprep.subr.mxu0 0.0
    %2474 = vmatpush1.xpose.msra.mxu0 0.0
    %2475 = vmatprep.subr.mxu0 0.0
    %2476 = vmatpush1.xpose.msra.mxu0 0.0
    %2477 = vmatprep.subr.mxu0 0.0
    %2478 = vmatpush1.xpose.msra.mxu0 0.0
    %2479 = vmatprep.subr.mxu0 0.0
    %2480 = vmatpush1.xpose.msra.mxu0 0.0
    %2481 = vmatprep.mubr.f32.mxu0 0.0
    %2482 = vmatmul.mubr.f32.gmra.mrb[0].mxu0 %v2413
    %v2483 = vpop.f32.mrb[0].mxu0
    %v2484 = vadd.f32 0.0, %v2483
    %v2485 = vpop.f32.mrb[0].mxu0
    %2486 = vdwg.mxu0
    %v2487 = vmul.f32 %v2484, 0.35355338
    %v2488 = vadd.f32 %v2487, %v2147
    %v2489 = vsel %vm263, %v2488, -inf
    %2490 = vmax.xlane.f32.xlu0 %v2489
    %v2491 = vpop.xlane.xlu0 %2490
    %v2492 = vsub.f32 %v2488, %v2491
    %v2493 = vmul.f32 %v2492, 1.442695
    %v2494 = vpow.pop %v2493
    %v2495 = vsel %vm263, %v2494, 0.0
    %2496 = vadd.xlane.f32.xlu0 %v2495
    %v2497 = vpop.xlane.xlu0 %2496
    %v2498 = vrcp.pop %v2497
    %v2499 = vmul.f32 %v2494, %v2498
    %2500 = vrot.lane.b32.xlu0 %v2057, 48
    %v2501 = vpop.permute.xlu0 %2500
    %v2504 = vsel %vm263, %v2499, 0
    %2506 = vmatprep.subr.mxu0 0.0
    %2507 = vmatpush1.msra.mxu0 %v2501
    %2508 = vmatprep.subr.mxu0 0.0
    %2509 = vmatpush1.msra.mxu0 0.0
    %2510 = vmatprep.subr.mxu0 0.0
    %2511 = vmatpush1.msra.mxu0 0.0
    %2512 = vmatprep.subr.mxu0 0.0
    %2513 = vmatpush1.msra.mxu0 0.0
    %2514 = vmatprep.subr.mxu0 0.0
    %2515 = vmatpush1.msra.mxu0 0.0
    %2516 = vmatprep.subr.mxu0 0.0
    %2517 = vmatpush1.msra.mxu0 0.0
    %2518 = vmatprep.subr.mxu0 0.0
    %2519 = vmatpush1.msra.mxu0 0.0
    %2520 = vmatprep.subr.mxu0 0.0
    %2521 = vmatpush1.msra.mxu0 0.0
    %2522 = vmatprep.subr.mxu0 0.0
    %2523 = vmatpush1.msra.mxu0 0.0
    %2524 = vmatprep.subr.mxu0 0.0
    %2525 = vmatpush1.msra.mxu0 0.0
    %2526 = vmatprep.subr.mxu0 0.0
    %2527 = vmatpush1.msra.mxu0 0.0
    %2528 = vmatprep.subr.mxu0 0.0
    %2529 = vmatpush1.msra.mxu0 0.0
    %2530 = vmatprep.subr.mxu0 0.0
    %2531 = vmatpush1.msra.mxu0 0.0
    %2532 = vmatprep.subr.mxu0 0.0
    %2533 = vmatpush1.msra.mxu0 0.0
    %2534 = vmatprep.subr.mxu0 0.0
    %2535 = vmatpush1.msra.mxu0 0.0
    %2536 = vmatprep.subr.mxu0 0.0
    %2537 = vmatpush1.msra.mxu0 0.0
    %2538 = vmatprep.subr.mxu0 0.0
    %2539 = vmatpush1.msra.mxu0 0.0
    %2540 = vmatprep.subr.mxu0 0.0
    %2541 = vmatpush1.msra.mxu0 0.0
    %2542 = vmatprep.subr.mxu0 0.0
    %2543 = vmatpush1.msra.mxu0 0.0
    %2544 = vmatprep.subr.mxu0 0.0
    %2545 = vmatpush1.msra.mxu0 0.0
    %2546 = vmatprep.subr.mxu0 0.0
    %2547 = vmatpush1.msra.mxu0 0.0
    %2548 = vmatprep.subr.mxu0 0.0
    %2549 = vmatpush1.msra.mxu0 0.0
    %2550 = vmatprep.subr.mxu0 0.0
    %2551 = vmatpush1.msra.mxu0 0.0
    %2552 = vmatprep.subr.mxu0 0.0
    %2553 = vmatpush1.msra.mxu0 0.0
    %2554 = vmatprep.subr.mxu0 0.0
    %2555 = vmatpush1.msra.mxu0 0.0
    %2556 = vmatprep.subr.mxu0 0.0
    %2557 = vmatpush1.msra.mxu0 0.0
    %2558 = vmatprep.subr.mxu0 0.0
    %2559 = vmatpush1.msra.mxu0 0.0
    %2560 = vmatprep.subr.mxu0 0.0
    %2561 = vmatpush1.msra.mxu0 0.0
    %2562 = vmatprep.subr.mxu0 0.0
    %2563 = vmatpush1.msra.mxu0 0.0
    %2564 = vmatprep.subr.mxu0 0.0
    %2565 = vmatpush1.msra.mxu0 0.0
    %2566 = vmatprep.subr.mxu0 0.0
    %2567 = vmatpush1.msra.mxu0 0.0
    %2568 = vmatprep.subr.mxu0 0.0
    %2569 = vmatpush1.msra.mxu0 0.0
    %2570 = vmatprep.mubr.f32.mxu0 0.0
    %2571 = vmatmul.mubr.f32.gmra.mrb[0].mxu0 %v2504
    %v2572 = vpop.f32.mrb[0].mxu0
    %v2573 = vadd.f32 0.0, %v2572
    %v2574 = vpop.f32.mrb[0].mxu0
    %2575 = vdwg.mxu0
    %2577 = vrot.lane.b32.xlu0 %v2573, 16
    %v2578 = vpop.permute.xlu0 %2577
    %2580 = vst.msk [vmem:[#allocation3] sm:$0xff] %vm776, %v2578
    %2581 = vrot.lane.b32.xlu0 %v2057, 104
    %v2582 = vpop.permute.xlu0 %2581
    %2583 = vrot.lane.b32.xlu0 %v2057, 72
    %v2584 = vpop.permute.xlu0 %2583
    %v2585 = vsel %vm263, %v2582, 0
    %v2587 = vsel %vm263, %v2584, 0
    %2589 = vmatprep.subr.mxu0 0.0
    %2590 = vmatpush1.xpose.msra.mxu0 %v2587
    %2591 = vmatprep.subr.mxu0 0.0
    %2592 = vmatpush1.xpose.msra.mxu0 0.0
    %2593 = vmatprep.subr.mxu0 0.0
    %2594 = vmatpush1.xpose.msra.mxu0 0.0
    %2595 = vmatprep.subr.mxu0 0.0
    %2596 = vmatpush1.xpose.msra.mxu0 0.0
    %2597 = vmatprep.subr.mxu0 0.0
    %2598 = vmatpush1.xpose.msra.mxu0 0.0
    %2599 = vmatprep.subr.mxu0 0.0
    %2600 = vmatpush1.xpose.msra.mxu0 0.0
    %2601 = vmatprep.subr.mxu0 0.0
    %2602 = vmatpush1.xpose.msra.mxu0 0.0
    %2603 = vmatprep.subr.mxu0 0.0
    %2604 = vmatpush1.xpose.msra.mxu0 0.0
    %2605 = vmatprep.subr.mxu0 0.0
    %2606 = vmatpush1.xpose.msra.mxu0 0.0
    %2607 = vmatprep.subr.mxu0 0.0
    %2608 = vmatpush1.xpose.msra.mxu0 0.0
    %2609 = vmatprep.subr.mxu0 0.0
    %2610 = vmatpush1.xpose.msra.mxu0 0.0
    %2611 = vmatprep.subr.mxu0 0.0
    %2612 = vmatpush1.xpose.msra.mxu0 0.0
    %2613 = vmatprep.subr.mxu0 0.0
    %2614 = vmatpush1.xpose.msra.mxu0 0.0
    %2615 = vmatprep.subr.mxu0 0.0
    %2616 = vmatpush1.xpose.msra.mxu0 0.0
    %2617 = vmatprep.subr.mxu0 0.0
    %2618 = vmatpush1.xpose.msra.mxu0 0.0
    %2619 = vmatprep.subr.mxu0 0.0
    %2620 = vmatpush1.xpose.msra.mxu0 0.0
    %2621 = vmatprep.subr.mxu0 0.0
    %2622 = vmatpush1.xpose.msra.mxu0 0.0
    %2623 = vmatprep.subr.mxu0 0.0
    %2624 = vmatpush1.xpose.msra.mxu0 0.0
    %2625 = vmatprep.subr.mxu0 0.0
    %2626 = vmatpush1.xpose.msra.mxu0 0.0
    %2627 = vmatprep.subr.mxu0 0.0
    %2628 = vmatpush1.xpose.msra.mxu0 0.0
    %2629 = vmatprep.subr.mxu0 0.0
    %2630 = vmatpush1.xpose.msra.mxu0 0.0
    %2631 = vmatprep.subr.mxu0 0.0
    %2632 = vmatpush1.xpose.msra.mxu0 0.0
    %2633 = vmatprep.subr.mxu0 0.0
    %2634 = vmatpush1.xpose.msra.mxu0 0.0
    %2635 = vmatprep.subr.mxu0 0.0
    %2636 = vmatpush1.xpose.msra.mxu0 0.0
    %2637 = vmatprep.subr.mxu0 0.0
    %2638 = vmatpush1.xpose.msra.mxu0 0.0
    %2639 = vmatprep.subr.mxu0 0.0
    %2640 = vmatpush1.xpose.msra.mxu0 0.0
    %2641 = vmatprep.subr.mxu0 0.0
    %2642 = vmatpush1.xpose.msra.mxu0 0.0
    %2643 = vmatprep.subr.mxu0 0.0
    %2644 = vmatpush1.xpose.msra.mxu0 0.0
    %2645 = vmatprep.subr.mxu0 0.0
    %2646 = vmatpush1.xpose.msra.mxu0 0.0
    %2647 = vmatprep.subr.mxu0 0.0
    %2648 = vmatpush1.xpose.msra.mxu0 0.0
    %2649 = vmatprep.subr.mxu0 0.0
    %2650 = vmatpush1.xpose.msra.mxu0 0.0
    %2651 = vmatprep.subr.mxu0 0.0
    %2652 = vmatpush1.xpose.msra.mxu0 0.0
    %2653 = vmatprep.mubr.f32.mxu0 0.0
    %2654 = vmatmul.mubr.f32.gmra.mrb[0].mxu0 %v2585
    %v2655 = vpop.f32.mrb[0].mxu0
    %v2656 = vadd.f32 0.0, %v2655
    %v2657 = vpop.f32.mrb[0].mxu0
    %2658 = vdwg.mxu0
    %v2659 = vmul.f32 %v2656, 0.35355338
    %v2660 = vadd.f32 %v2659, %v2147
    %v2661 = vsel %vm263, %v2660, -inf
    %2662 = vmax.xlane.f32.xlu0 %v2661
    %v2663 = vpop.xlane.xlu0 %2662
    %v2664 = vsub.f32 %v2660, %v2663
    %v2665 = vmul.f32 %v2664, 1.442695
    %v2666 = vpow.pop %v2665
    %v2667 = vsel %vm263, %v2666, 0.0
    %2668 = vadd.xlane.f32.xlu0 %v2667
    %v2669 = vpop.xlane.xlu0 %2668
    %v2670 = vrcp.pop %v2669
    %v2671 = vmul.f32 %v2666, %v2670
    %2672 = vrot.lane.b32.xlu0 %v2057, 40
    %v2673 = vpop.permute.xlu0 %2672
    %v2676 = vsel %vm263, %v2671, 0
    %2678 = vmatprep.subr.mxu0 0.0
    %2679 = vmatpush1.msra.mxu0 %v2673
    %2680 = vmatprep.subr.mxu0 0.0
    %2681 = vmatpush1.msra.mxu0 0.0
    %2682 = vmatprep.subr.mxu0 0.0
    %2683 = vmatpush1.msra.mxu0 0.0
    %2684 = vmatprep.subr.mxu0 0.0
    %2685 = vmatpush1.msra.mxu0 0.0
    %2686 = vmatprep.subr.mxu0 0.0
    %2687 = vmatpush1.msra.mxu0 0.0
    %2688 = vmatprep.subr.mxu0 0.0
    %2689 = vmatpush1.msra.mxu0 0.0
    %2690 = vmatprep.subr.mxu0 0.0
    %2691 = vmatpush1.msra.mxu0 0.0
    %2692 = vmatprep.subr.mxu0 0.0
    %2693 = vmatpush1.msra.mxu0 0.0
    %2694 = vmatprep.subr.mxu0 0.0
    %2695 = vmatpush1.msra.mxu0 0.0
    %2696 = vmatprep.subr.mxu0 0.0
    %2697 = vmatpush1.msra.mxu0 0.0
    %2698 = vmatprep.subr.mxu0 0.0
    %2699 = vmatpush1.msra.mxu0 0.0
    %2700 = vmatprep.subr.mxu0 0.0
    %2701 = vmatpush1.msra.mxu0 0.0
    %2702 = vmatprep.subr.mxu0 0.0
    %2703 = vmatpush1.msra.mxu0 0.0
    %2704 = vmatprep.subr.mxu0 0.0
    %2705 = vmatpush1.msra.mxu0 0.0
    %2706 = vmatprep.subr.mxu0 0.0
    %2707 = vmatpush1.msra.mxu0 0.0
    %2708 = vmatprep.subr.mxu0 0.0
    %2709 = vmatpush1.msra.mxu0 0.0
    %2710 = vmatprep.subr.mxu0 0.0
    %2711 = vmatpush1.msra.mxu0 0.0
    %2712 = vmatprep.subr.mxu0 0.0
    %2713 = vmatpush1.msra.mxu0 0.0
    %2714 = vmatprep.subr.mxu0 0.0
    %2715 = vmatpush1.msra.mxu0 0.0
    %2716 = vmatprep.subr.mxu0 0.0
    %2717 = vmatpush1.msra.mxu0 0.0
    %2718 = vmatprep.subr.mxu0 0.0
    %2719 = vmatpush1.msra.mxu0 0.0
    %2720 = vmatprep.subr.mxu0 0.0
    %2721 = vmatpush1.msra.mxu0 0.0
    %2722 = vmatprep.subr.mxu0 0.0
    %2723 = vmatpush1.msra.mxu0 0.0
    %2724 = vmatprep.subr.mxu0 0.0
    %2725 = vmatpush1.msra.mxu0 0.0
    %2726 = vmatprep.subr.mxu0 0.0
    %2727 = vmatpush1.msra.mxu0 0.0
    %2728 = vmatprep.subr.mxu0 0.0
    %2729 = vmatpush1.msra.mxu0 0.0
    %2730 = vmatprep.subr.mxu0 0.0
    %2731 = vmatpush1.msra.mxu0 0.0
    %2732 = vmatprep.subr.mxu0 0.0
    %2733 = vmatpush1.msra.mxu0 0.0
    %2734 = vmatprep.subr.mxu0 0.0
    %2735 = vmatpush1.msra.mxu0 0.0
    %2736 = vmatprep.subr.mxu0 0.0
    %2737 = vmatpush1.msra.mxu0 0.0
    %2738 = vmatprep.subr.mxu0 0.0
    %2739 = vmatpush1.msra.mxu0 0.0
    %2740 = vmatprep.subr.mxu0 0.0
    %2741 = vmatpush1.msra.mxu0 0.0
    %2742 = vmatprep.mubr.f32.mxu0 0.0
    %2743 = vmatmul.mubr.f32.gmra.mrb[0].mxu0 %v2676
    %v2744 = vpop.f32.mrb[0].mxu0
    %v2745 = vadd.f32 0.0, %v2744
    %v2746 = vpop.f32.mrb[0].mxu0
    %2747 = vdwg.mxu0
    %2749 = vrot.lane.b32.xlu0 %v2745, 24
    %v2750 = vpop.permute.xlu0 %2749
    %2752 = vst.msk [vmem:[#allocation3] sm:$0xff] %vm949, %v2750
    %v2753 = vld [vmem:[%s1 + $0x1] sm:$0x1]
    %v2754 = vsub.f32 1.0, %v2753
    %v2755 = vmul.f32 %v2754, -10000.0
    %2757 = vrot.lane.b32.xlu0 %v2060, 96
    %v2758 = vpop.permute.xlu0 %2757
    %v2759 = vsel %vm263, %v2060, 0
    %v2761 = vsel %vm263, %v2758, 0
    %2763 = vmatprep.subr.mxu0 0.0
    %2764 = vmatpush1.xpose.msra.mxu0 %v2761
    %2765 = vmatprep.subr.mxu0 0.0
    %2766 = vmatpush1.xpose.msra.mxu0 0.0
    %2767 = vmatprep.subr.mxu0 0.0
    %2768 = vmatpush1.xpose.msra.mxu0 0.0
    %2769 = vmatprep.subr.mxu0 0.0
    %2770 = vmatpush1.xpose.msra.mxu0 0.0
    %2771 = vmatprep.subr.mxu0 0.0
    %2772 = vmatpush1.xpose.msra.mxu0 0.0
    %2773 = vmatprep.subr.mxu0 0.0
    %2774 = vmatpush1.xpose.msra.mxu0 0.0
    %2775 = vmatprep.subr.mxu0 0.0
    %2776 = vmatpush1.xpose.msra.mxu0 0.0
    %2777 = vmatprep.subr.mxu0 0.0
    %2778 = vmatpush1.xpose.msra.mxu0 0.0
    %2779 = vmatprep.subr.mxu0 0.0
    %2780 = vmatpush1.xpose.msra.mxu0 0.0
    %2781 = vmatprep.subr.mxu0 0.0
    %2782 = vmatpush1.xpose.msra.mxu0 0.0
    %2783 = vmatprep.subr.mxu0 0.0
    %2784 = vmatpush1.xpose.msra.mxu0 0.0
    %2785 = vmatprep.subr.mxu0 0.0
    %2786 = vmatpush1.xpose.msra.mxu0 0.0
    %2787 = vmatprep.subr.mxu0 0.0
    %2788 = vmatpush1.xpose.msra.mxu0 0.0
    %2789 = vmatprep.subr.mxu0 0.0
    %2790 = vmatpush1.xpose.msra.mxu0 0.0
    %2791 = vmatprep.subr.mxu0 0.0
    %2792 = vmatpush1.xpose.msra.mxu0 0.0
    %2793 = vmatprep.subr.mxu0 0.0
    %2794 = vmatpush1.xpose.msra.mxu0 0.0
    %2795 = vmatprep.subr.mxu0 0.0
    %2796 = vmatpush1.xpose.msra.mxu0 0.0
    %2797 = vmatprep.subr.mxu0 0.0
    %2798 = vmatpush1.xpose.msra.mxu0 0.0
    %2799 = vmatprep.subr.mxu0 0.0
    %2800 = vmatpush1.xpose.msra.mxu0 0.0
    %2801 = vmatprep.subr.mxu0 0.0
    %2802 = vmatpush1.xpose.msra.mxu0 0.0
    %2803 = vmatprep.subr.mxu0 0.0
    %2804 = vmatpush1.xpose.msra.mxu0 0.0
    %2805 = vmatprep.subr.mxu0 0.0
    %2806 = vmatpush1.xpose.msra.mxu0 0.0
    %2807 = vmatprep.subr.mxu0 0.0
    %2808 = vmatpush1.xpose.msra.mxu0 0.0
    %2809 = vmatprep.subr.mxu0 0.0
    %2810 = vmatpush1.xpose.msra.mxu0 0.0
    %2811 = vmatprep.subr.mxu0 0.0
    %2812 = vmatpush1.xpose.msra.mxu0 0.0
    %2813 = vmatprep.subr.mxu0 0.0
    %2814 = vmatpush1.xpose.msra.mxu0 0.0
    %2815 = vmatprep.subr.mxu0 0.0
    %2816 = vmatpush1.xpose.msra.mxu0 0.0
    %2817 = vmatprep.subr.mxu0 0.0
    %2818 = vmatpush1.xpose.msra.mxu0 0.0
    %2819 = vmatprep.subr.mxu0 0.0
    %2820 = vmatpush1.xpose.msra.mxu0 0.0
    %2821 = vmatprep.subr.mxu0 0.0
    %2822 = vmatpush1.xpose.msra.mxu0 0.0
    %2823 = vmatprep.subr.mxu0 0.0
    %2824 = vmatpush1.xpose.msra.mxu0 0.0
    %2825 = vmatprep.subr.mxu0 0.0
    %2826 = vmatpush1.xpose.msra.mxu0 0.0
    %2827 = vmatprep.mubr.f32.mxu0 0.0
    %2828 = vmatmul.mubr.f32.gmra.mrb[0].mxu0 %v2759
    %v2829 = vpop.f32.mrb[0].mxu0
    %v2830 = vadd.f32 0.0, %v2829
    %v2831 = vpop.f32.mrb[0].mxu0
    %2832 = vdwg.mxu0
    %v2833 = vmul.f32 %v2830, 0.35355338
    %v2834 = vlaneseq
    %v2835 = vshrl.u32 %v2834, 7
    %v2836 = vsub.s32 0, %v2835
    %v2837 = vrot.slane %v2755, %v2836
    %v2838 = vadd.f32 %v2833, %v2837
    %v2839 = vsel %vm263, %v2838, -inf
    %2840 = vmax.xlane.f32.xlu0 %v2839
    %v2841 = vpop.xlane.xlu0 %2840
    %v2842 = vsub.f32 %v2838, %v2841
    %v2843 = vmul.f32 %v2842, 1.442695
    %v2844 = vpow.pop %v2843
    %v2845 = vsel %vm263, %v2844, 0.0
    %2846 = vadd.xlane.f32.xlu0 %v2845
    %v2847 = vpop.xlane.xlu0 %2846
    %v2848 = vrcp.pop %v2847
    %v2849 = vmul.f32 %v2844, %v2848
    %2850 = vrot.lane.b32.xlu0 %v2060, 64
    %v2851 = vpop.permute.xlu0 %2850
    %v2854 = vsel %vm263, %v2849, 0
    %2856 = vmatprep.subr.mxu0 0.0
    %2857 = vmatpush1.msra.mxu0 %v2851
    %2858 = vmatprep.subr.mxu0 0.0
    %2859 = vmatpush1.msra.mxu0 0.0
    %2860 = vmatprep.subr.mxu0 0.0
    %2861 = vmatpush1.msra.mxu0 0.0
    %2862 = vmatprep.subr.mxu0 0.0
    %2863 = vmatpush1.msra.mxu0 0.0
    %2864 = vmatprep.subr.mxu0 0.0
    %2865 = vmatpush1.msra.mxu0 0.0
    %2866 = vmatprep.subr.mxu0 0.0
    %2867 = vmatpush1.msra.mxu0 0.0
    %2868 = vmatprep.subr.mxu0 0.0
    %2869 = vmatpush1.msra.mxu0 0.0
    %2870 = vmatprep.subr.mxu0 0.0
    %2871 = vmatpush1.msra.mxu0 0.0
    %2872 = vmatprep.subr.mxu0 0.0
    %2873 = vmatpush1.msra.mxu0 0.0
    %2874 = vmatprep.subr.mxu0 0.0
    %2875 = vmatpush1.msra.mxu0 0.0
    %2876 = vmatprep.subr.mxu0 0.0
    %2877 = vmatpush1.msra.mxu0 0.0
    %2878 = vmatprep.subr.mxu0 0.0
    %2879 = vmatpush1.msra.mxu0 0.0
    %2880 = vmatprep.subr.mxu0 0.0
    %2881 = vmatpush1.msra.mxu0 0.0
    %2882 = vmatprep.subr.mxu0 0.0
    %2883 = vmatpush1.msra.mxu0 0.0
    %2884 = vmatprep.subr.mxu0 0.0
    %2885 = vmatpush1.msra.mxu0 0.0
    %2886 = vmatprep.subr.mxu0 0.0
    %2887 = vmatpush1.msra.mxu0 0.0
    %2888 = vmatprep.subr.mxu0 0.0
    %2889 = vmatpush1.msra.mxu0 0.0
    %2890 = vmatprep.subr.mxu0 0.0
    %2891 = vmatpush1.msra.mxu0 0.0
    %2892 = vmatprep.subr.mxu0 0.0
    %2893 = vmatpush1.msra.mxu0 0.0
    %2894 = vmatprep.subr.mxu0 0.0
    %2895 = vmatpush1.msra.mxu0 0.0
    %2896 = vmatprep.subr.mxu0 0.0
    %2897 = vmatpush1.msra.mxu0 0.0
    %2898 = vmatprep.subr.mxu0 0.0
    %2899 = vmatpush1.msra.mxu0 0.0
    %2900 = vmatprep.subr.mxu0 0.0
    %2901 = vmatpush1.msra.mxu0 0.0
    %2902 = vmatprep.subr.mxu0 0.0
    %2903 = vmatpush1.msra.mxu0 0.0
    %2904 = vmatprep.subr.mxu0 0.0
    %2905 = vmatpush1.msra.mxu0 0.0
    %2906 = vmatprep.subr.mxu0 0.0
    %2907 = vmatpush1.msra.mxu0 0.0
    %2908 = vmatprep.subr.mxu0 0.0
    %2909 = vmatpush1.msra.mxu0 0.0
    %2910 = vmatprep.subr.mxu0 0.0
    %2911 = vmatpush1.msra.mxu0 0.0
    %2912 = vmatprep.subr.mxu0 0.0
    %2913 = vmatpush1.msra.mxu0 0.0
    %2914 = vmatprep.subr.mxu0 0.0
    %2915 = vmatpush1.msra.mxu0 0.0
    %2916 = vmatprep.subr.mxu0 0.0
    %2917 = vmatpush1.msra.mxu0 0.0
    %2918 = vmatprep.subr.mxu0 0.0
    %2919 = vmatpush1.msra.mxu0 0.0
    %2920 = vmatprep.mubr.f32.mxu0 0.0
    %2921 = vmatmul.mubr.f32.gmra.mrb[0].mxu0 %v2854
    %v2922 = vpop.f32.mrb[0].mxu0
    %v2923 = vadd.f32 0.0, %v2922
    %v2924 = vpop.f32.mrb[0].mxu0
    %2925 = vdwg.mxu0
    %2926 = vst.msk [vmem:[#allocation3 + $0x8] sm:$0xff] %vm263, %v2923
    %2927 = vrot.lane.b32.xlu0 %v2060, 120
    %v2928 = vpop.permute.xlu0 %2927
    %2929 = vrot.lane.b32.xlu0 %v2060, 88
    %v2930 = vpop.permute.xlu0 %2929
    %v2931 = vsel %vm263, %v2928, 0
    %v2933 = vsel %vm263, %v2930, 0
    %2935 = vmatprep.subr.mxu0 0.0
    %2936 = vmatpush1.xpose.msra.mxu0 %v2933
    %2937 = vmatprep.subr.mxu0 0.0
    %2938 = vmatpush1.xpose.msra.mxu0 0.0
    %2939 = vmatprep.subr.mxu0 0.0
    %2940 = vmatpush1.xpose.msra.mxu0 0.0
    %2941 = vmatprep.subr.mxu0 0.0
    %2942 = vmatpush1.xpose.msra.mxu0 0.0
    %2943 = vmatprep.subr.mxu0 0.0
    %2944 = vmatpush1.xpose.msra.mxu0 0.0
    %2945 = vmatprep.subr.mxu0 0.0
    %2946 = vmatpush1.xpose.msra.mxu0 0.0
    %2947 = vmatprep.subr.mxu0 0.0
    %2948 = vmatpush1.xpose.msra.mxu0 0.0
    %2949 = vmatprep.subr.mxu0 0.0
    %2950 = vmatpush1.xpose.msra.mxu0 0.0
    %2951 = vmatprep.subr.mxu0 0.0
    %2952 = vmatpush1.xpose.msra.mxu0 0.0
    %2953 = vmatprep.subr.mxu0 0.0
    %2954 = vmatpush1.xpose.msra.mxu0 0.0
    %2955 = vmatprep.subr.mxu0 0.0
    %2956 = vmatpush1.xpose.msra.mxu0 0.0
    %2957 = vmatprep.subr.mxu0 0.0
    %2958 = vmatpush1.xpose.msra.mxu0 0.0
    %2959 = vmatprep.subr.mxu0 0.0
    %2960 = vmatpush1.xpose.msra.mxu0 0.0
    %2961 = vmatprep.subr.mxu0 0.0
    %2962 = vmatpush1.xpose.msra.mxu0 0.0
    %2963 = vmatprep.subr.mxu0 0.0
    %2964 = vmatpush1.xpose.msra.mxu0 0.0
    %2965 = vmatprep.subr.mxu0 0.0
    %2966 = vmatpush1.xpose.msra.mxu0 0.0
    %2967 = vmatprep.subr.mxu0 0.0
    %2968 = vmatpush1.xpose.msra.mxu0 0.0
    %2969 = vmatprep.subr.mxu0 0.0
    %2970 = vmatpush1.xpose.msra.mxu0 0.0
    %2971 = vmatprep.subr.mxu0 0.0
    %2972 = vmatpush1.xpose.msra.mxu0 0.0
    %2973 = vmatprep.subr.mxu0 0.0
    %2974 = vmatpush1.xpose.msra.mxu0 0.0
    %2975 = vmatprep.subr.mxu0 0.0
    %2976 = vmatpush1.xpose.msra.mxu0 0.0
    %2977 = vmatprep.subr.mxu0 0.0
    %2978 = vmatpush1.xpose.msra.mxu0 0.0
    %2979 = vmatprep.subr.mxu0 0.0
    %2980 = vmatpush1.xpose.msra.mxu0 0.0
    %2981 = vmatprep.subr.mxu0 0.0
    %2982 = vmatpush1.xpose.msra.mxu0 0.0
    %2983 = vmatprep.subr.mxu0 0.0
    %2984 = vmatpush1.xpose.msra.mxu0 0.0
    %2985 = vmatprep.subr.mxu0 0.0
    %2986 = vmatpush1.xpose.msra.mxu0 0.0
    %2987 = vmatprep.subr.mxu0 0.0
    %2988 = vmatpush1.xpose.msra.mxu0 0.0
    %2989 = vmatprep.subr.mxu0 0.0
    %2990 = vmatpush1.xpose.msra.mxu0 0.0
    %2991 = vmatprep.subr.mxu0 0.0
    %2992 = vmatpush1.xpose.msra.mxu0 0.0
    %2993 = vmatprep.subr.mxu0 0.0
    %2994 = vmatpush1.xpose.msra.mxu0 0.0
    %2995 = vmatprep.subr.mxu0 0.0
    %2996 = vmatpush1.xpose.msra.mxu0 0.0
    %2997 = vmatprep.subr.mxu0 0.0
    %2998 = vmatpush1.xpose.msra.mxu0 0.0
    %2999 = vmatprep.mubr.f32.mxu0 0.0
    %3000 = vmatmul.mubr.f32.gmra.mrb[0].mxu0 %v2931
    %v3001 = vpop.f32.mrb[0].mxu0
    %v3002 = vadd.f32 0.0, %v3001
    %v3003 = vpop.f32.mrb[0].mxu0
    %3004 = vdwg.mxu0
    %v3005 = vmul.f32 %v3002, 0.35355338
    %v3006 = vadd.f32 %v3005, %v2837
    %v3007 = vsel %vm263, %v3006, -inf
    %3008 = vmax.xlane.f32.xlu0 %v3007
    %v3009 = vpop.xlane.xlu0 %3008
    %v3010 = vsub.f32 %v3006, %v3009
    %v3011 = vmul.f32 %v3010, 1.442695
    %v3012 = vpow.pop %v3011
    %v3013 = vsel %vm263, %v3012, 0.0
    %3014 = vadd.xlane.f32.xlu0 %v3013
    %v3015 = vpop.xlane.xlu0 %3014
    %v3016 = vrcp.pop %v3015
    %v3017 = vmul.f32 %v3012, %v3016
    %3018 = vrot.lane.b32.xlu0 %v2060, 56
    %v3019 = vpop.permute.xlu0 %3018
    %v3022 = vsel %vm263, %v3017, 0
    %3024 = vmatprep.subr.mxu0 0.0
    %3025 = vmatpush1.msra.mxu0 %v3019
    %3026 = vmatprep.subr.mxu0 0.0
    %3027 = vmatpush1.msra.mxu0 0.0
    %3028 = vmatprep.subr.mxu0 0.0
    %3029 = vmatpush1.msra.mxu0 0.0
    %3030 = vmatprep.subr.mxu0 0.0
    %3031 = vmatpush1.msra.mxu0 0.0
    %3032 = vmatprep.subr.mxu0 0.0
    %3033 = vmatpush1.msra.mxu0 0.0
    %3034 = vmatprep.subr.mxu0 0.0
    %3035 = vmatpush1.msra.mxu0 0.0
    %3036 = vmatprep.subr.mxu0 0.0
    %3037 = vmatpush1.msra.mxu0 0.0
    %3038 = vmatprep.subr.mxu0 0.0
    %3039 = vmatpush1.msra.mxu0 0.0
    %3040 = vmatprep.subr.mxu0 0.0
    %3041 = vmatpush1.msra.mxu0 0.0
    %3042 = vmatprep.subr.mxu0 0.0
    %3043 = vmatpush1.msra.mxu0 0.0
    %3044 = vmatprep.subr.mxu0 0.0
    %3045 = vmatpush1.msra.mxu0 0.0
    %3046 = vmatprep.subr.mxu0 0.0
    %3047 = vmatpush1.msra.mxu0 0.0
    %3048 = vmatprep.subr.mxu0 0.0
    %3049 = vmatpush1.msra.mxu0 0.0
    %3050 = vmatprep.subr.mxu0 0.0
    %3051 = vmatpush1.msra.mxu0 0.0
    %3052 = vmatprep.subr.mxu0 0.0
    %3053 = vmatpush1.msra.mxu0 0.0
    %3054 = vmatprep.subr.mxu0 0.0
    %3055 = vmatpush1.msra.mxu0 0.0
    %3056 = vmatprep.subr.mxu0 0.0
    %3057 = vmatpush1.msra.mxu0 0.0
    %3058 = vmatprep.subr.mxu0 0.0
    %3059 = vmatpush1.msra.mxu0 0.0
    %3060 = vmatprep.subr.mxu0 0.0
    %3061 = vmatpush1.msra.mxu0 0.0
    %3062 = vmatprep.subr.mxu0 0.0
    %3063 = vmatpush1.msra.mxu0 0.0
    %3064 = vmatprep.subr.mxu0 0.0
    %3065 = vmatpush1.msra.mxu0 0.0
    %3066 = vmatprep.subr.mxu0 0.0
    %3067 = vmatpush1.msra.mxu0 0.0
    %3068 = vmatprep.subr.mxu0 0.0
    %3069 = vmatpush1.msra.mxu0 0.0
    %3070 = vmatprep.subr.mxu0 0.0
    %3071 = vmatpush1.msra.mxu0 0.0
    %3072 = vmatprep.subr.mxu0 0.0
    %3073 = vmatpush1.msra.mxu0 0.0
    %3074 = vmatprep.subr.mxu0 0.0
    %3075 = vmatpush1.msra.mxu0 0.0
    %3076 = vmatprep.subr.mxu0 0.0
    %3077 = vmatpush1.msra.mxu0 0.0
    %3078 = vmatprep.subr.mxu0 0.0
    %3079 = vmatpush1.msra.mxu0 0.0
    %3080 = vmatprep.subr.mxu0 0.0
    %3081 = vmatpush1.msra.mxu0 0.0
    %3082 = vmatprep.subr.mxu0 0.0
    %3083 = vmatpush1.msra.mxu0 0.0
    %3084 = vmatprep.subr.mxu0 0.0
    %3085 = vmatpush1.msra.mxu0 0.0
    %3086 = vmatprep.subr.mxu0 0.0
    %3087 = vmatpush1.msra.mxu0 0.0
    %3088 = vmatprep.mubr.f32.mxu0 0.0
    %3089 = vmatmul.mubr.f32.gmra.mrb[0].mxu0 %v3022
    %v3090 = vpop.f32.mrb[0].mxu0
    %v3091 = vadd.f32 0.0, %v3090
    %v3092 = vpop.f32.mrb[0].mxu0
    %3093 = vdwg.mxu0
    %3095 = vrot.lane.b32.xlu0 %v3091, 8
    %v3096 = vpop.permute.xlu0 %3095
    %3098 = vst.msk [vmem:[#allocation3 + $0x8] sm:$0xff] %vm603, %v3096
    %3099 = vrot.lane.b32.xlu0 %v2060, 112
    %v3100 = vpop.permute.xlu0 %3099
    %3101 = vrot.lane.b32.xlu0 %v2060, 80
    %v3102 = vpop.permute.xlu0 %3101
    %v3103 = vsel %vm263, %v3100, 0
    %v3105 = vsel %vm263, %v3102, 0
    %3107 = vmatprep.subr.mxu0 0.0
    %3108 = vmatpush1.xpose.msra.mxu0 %v3105
    %3109 = vmatprep.subr.mxu0 0.0
    %3110 = vmatpush1.xpose.msra.mxu0 0.0
    %3111 = vmatprep.subr.mxu0 0.0
    %3112 = vmatpush1.xpose.msra.mxu0 0.0
    %3113 = vmatprep.subr.mxu0 0.0
    %3114 = vmatpush1.xpose.msra.mxu0 0.0
    %3115 = vmatprep.subr.mxu0 0.0
    %3116 = vmatpush1.xpose.msra.mxu0 0.0
    %3117 = vmatprep.subr.mxu0 0.0
    %3118 = vmatpush1.xpose.msra.mxu0 0.0
    %3119 = vmatprep.subr.mxu0 0.0
    %3120 = vmatpush1.xpose.msra.mxu0 0.0
    %3121 = vmatprep.subr.mxu0 0.0
    %3122 = vmatpush1.xpose.msra.mxu0 0.0
    %3123 = vmatprep.subr.mxu0 0.0
    %3124 = vmatpush1.xpose.msra.mxu0 0.0
    %3125 = vmatprep.subr.mxu0 0.0
    %3126 = vmatpush1.xpose.msra.mxu0 0.0
    %3127 = vmatprep.subr.mxu0 0.0
    %3128 = vmatpush1.xpose.msra.mxu0 0.0
    %3129 = vmatprep.subr.mxu0 0.0
    %3130 = vmatpush1.xpose.msra.mxu0 0.0
    %3131 = vmatprep.subr.mxu0 0.0
    %3132 = vmatpush1.xpose.msra.mxu0 0.0
    %3133 = vmatprep.subr.mxu0 0.0
    %3134 = vmatpush1.xpose.msra.mxu0 0.0
    %3135 = vmatprep.subr.mxu0 0.0
    %3136 = vmatpush1.xpose.msra.mxu0 0.0
    %3137 = vmatprep.subr.mxu0 0.0
    %3138 = vmatpush1.xpose.msra.mxu0 0.0
    %3139 = vmatprep.subr.mxu0 0.0
    %3140 = vmatpush1.xpose.msra.mxu0 0.0
    %3141 = vmatprep.subr.mxu0 0.0
    %3142 = vmatpush1.xpose.msra.mxu0 0.0
    %3143 = vmatprep.subr.mxu0 0.0
    %3144 = vmatpush1.xpose.msra.mxu0 0.0
    %3145 = vmatprep.subr.mxu0 0.0
    %3146 = vmatpush1.xpose.msra.mxu0 0.0
    %3147 = vmatprep.subr.mxu0 0.0
    %3148 = vmatpush1.xpose.msra.mxu0 0.0
    %3149 = vmatprep.subr.mxu0 0.0
    %3150 = vmatpush1.xpose.msra.mxu0 0.0
    %3151 = vmatprep.subr.mxu0 0.0
    %3152 = vmatpush1.xpose.msra.mxu0 0.0
    %3153 = vmatprep.subr.mxu0 0.0
    %3154 = vmatpush1.xpose.msra.mxu0 0.0
    %3155 = vmatprep.subr.mxu0 0.0
    %3156 = vmatpush1.xpose.msra.mxu0 0.0
    %3157 = vmatprep.subr.mxu0 0.0
    %3158 = vmatpush1.xpose.msra.mxu0 0.0
    %3159 = vmatprep.subr.mxu0 0.0
    %3160 = vmatpush1.xpose.msra.mxu0 0.0
    %3161 = vmatprep.subr.mxu0 0.0
    %3162 = vmatpush1.xpose.msra.mxu0 0.0
    %3163 = vmatprep.subr.mxu0 0.0
    %3164 = vmatpush1.xpose.msra.mxu0 0.0
    %3165 = vmatprep.subr.mxu0 0.0
    %3166 = vmatpush1.xpose.msra.mxu0 0.0
    %3167 = vmatprep.subr.mxu0 0.0
    %3168 = vmatpush1.xpose.msra.mxu0 0.0
    %3169 = vmatprep.subr.mxu0 0.0
    %3170 = vmatpush1.xpose.msra.mxu0 0.0
    %3171 = vmatprep.mubr.f32.mxu0 0.0
    %3172 = vmatmul.mubr.f32.gmra.mrb[0].mxu0 %v3103
    %v3173 = vpop.f32.mrb[0].mxu0
    %v3174 = vadd.f32 0.0, %v3173
    %v3175 = vpop.f32.mrb[0].mxu0
    %3176 = vdwg.mxu0
    %v3177 = vmul.f32 %v3174, 0.35355338
    %v3178 = vadd.f32 %v3177, %v2837
    %v3179 = vsel %vm263, %v3178, -inf
    %3180 = vmax.xlane.f32.xlu0 %v3179
    %v3181 = vpop.xlane.xlu0 %3180
    %v3182 = vsub.f32 %v3178, %v3181
    %v3183 = vmul.f32 %v3182, 1.442695
    %v3184 = vpow.pop %v3183
    %v3185 = vsel %vm263, %v3184, 0.0
    %3186 = vadd.xlane.f32.xlu0 %v3185
    %v3187 = vpop.xlane.xlu0 %3186
    %v3188 = vrcp.pop %v3187
    %v3189 = vmul.f32 %v3184, %v3188
    %3190 = vrot.lane.b32.xlu0 %v2060, 48
    %v3191 = vpop.permute.xlu0 %3190
    %v3194 = vsel %vm263, %v3189, 0
    %3196 = vmatprep.subr.mxu0 0.0
    %3197 = vmatpush1.msra.mxu0 %v3191
    %3198 = vmatprep.subr.mxu0 0.0
    %3199 = vmatpush1.msra.mxu0 0.0
    %3200 = vmatprep.subr.mxu0 0.0
    %3201 = vmatpush1.msra.mxu0 0.0
    %3202 = vmatprep.subr.mxu0 0.0
    %3203 = vmatpush1.msra.mxu0 0.0
    %3204 = vmatprep.subr.mxu0 0.0
    %3205 = vmatpush1.msra.mxu0 0.0
    %3206 = vmatprep.subr.mxu0 0.0
    %3207 = vmatpush1.msra.mxu0 0.0
    %3208 = vmatprep.subr.mxu0 0.0
    %3209 = vmatpush1.msra.mxu0 0.0
    %3210 = vmatprep.subr.mxu0 0.0
    %3211 = vmatpush1.msra.mxu0 0.0
    %3212 = vmatprep.subr.mxu0 0.0
    %3213 = vmatpush1.msra.mxu0 0.0
    %3214 = vmatprep.subr.mxu0 0.0
    %3215 = vmatpush1.msra.mxu0 0.0
    %3216 = vmatprep.subr.mxu0 0.0
    %3217 = vmatpush1.msra.mxu0 0.0
    %3218 = vmatprep.subr.mxu0 0.0
    %3219 = vmatpush1.msra.mxu0 0.0
    %3220 = vmatprep.subr.mxu0 0.0
    %3221 = vmatpush1.msra.mxu0 0.0
    %3222 = vmatprep.subr.mxu0 0.0
    %3223 = vmatpush1.msra.mxu0 0.0
    %3224 = vmatprep.subr.mxu0 0.0
    %3225 = vmatpush1.msra.mxu0 0.0
    %3226 = vmatprep.subr.mxu0 0.0
    %3227 = vmatpush1.msra.mxu0 0.0
    %3228 = vmatprep.subr.mxu0 0.0
    %3229 = vmatpush1.msra.mxu0 0.0
    %3230 = vmatprep.subr.mxu0 0.0
    %3231 = vmatpush1.msra.mxu0 0.0
    %3232 = vmatprep.subr.mxu0 0.0
    %3233 = vmatpush1.msra.mxu0 0.0
    %3234 = vmatprep.subr.mxu0 0.0
    %3235 = vmatpush1.msra.mxu0 0.0
    %3236 = vmatprep.subr.mxu0 0.0
    %3237 = vmatpush1.msra.mxu0 0.0
    %3238 = vmatprep.subr.mxu0 0.0
    %3239 = vmatpush1.msra.mxu0 0.0
    %3240 = vmatprep.subr.mxu0 0.0
    %3241 = vmatpush1.msra.mxu0 0.0
    %3242 = vmatprep.subr.mxu0 0.0
    %3243 = vmatpush1.msra.mxu0 0.0
    %3244 = vmatprep.subr.mxu0 0.0
    %3245 = vmatpush1.msra.mxu0 0.0
    %3246 = vmatprep.subr.mxu0 0.0
    %3247 = vmatpush1.msra.mxu0 0.0
    %3248 = vmatprep.subr.mxu0 0.0
    %3249 = vmatpush1.msra.mxu0 0.0
    %3250 = vmatprep.subr.mxu0 0.0
    %3251 = vmatpush1.msra.mxu0 0.0
    %3252 = vmatprep.subr.mxu0 0.0
    %3253 = vmatpush1.msra.mxu0 0.0
    %3254 = vmatprep.subr.mxu0 0.0
    %3255 = vmatpush1.msra.mxu0 0.0
    %3256 = vmatprep.subr.mxu0 0.0
    %3257 = vmatpush1.msra.mxu0 0.0
    %3258 = vmatprep.subr.mxu0 0.0
    %3259 = vmatpush1.msra.mxu0 0.0
    %3260 = vmatprep.mubr.f32.mxu0 0.0
    %3261 = vmatmul.mubr.f32.gmra.mrb[0].mxu0 %v3194
    %v3262 = vpop.f32.mrb[0].mxu0
    %v3263 = vadd.f32 0.0, %v3262
    %v3264 = vpop.f32.mrb[0].mxu0
    %3265 = vdwg.mxu0
    %3267 = vrot.lane.b32.xlu0 %v3263, 16
    %v3268 = vpop.permute.xlu0 %3267
    %3270 = vst.msk [vmem:[#allocation3 + $0x8] sm:$0xff] %vm776, %v3268
    %3271 = vrot.lane.b32.xlu0 %v2060, 104
    %v3272 = vpop.permute.xlu0 %3271
    %3273 = vrot.lane.b32.xlu0 %v2060, 72
    %v3274 = vpop.permute.xlu0 %3273
    %v3275 = vsel %vm263, %v3272, 0
    %v3277 = vsel %vm263, %v3274, 0
    %3279 = vmatprep.subr.mxu0 0.0
    %3280 = vmatpush1.xpose.msra.mxu0 %v3277
    %3281 = vmatprep.subr.mxu0 0.0
    %3282 = vmatpush1.xpose.msra.mxu0 0.0
    %3283 = vmatprep.subr.mxu0 0.0
    %3284 = vmatpush1.xpose.msra.mxu0 0.0
    %3285 = vmatprep.subr.mxu0 0.0
    %3286 = vmatpush1.xpose.msra.mxu0 0.0
    %3287 = vmatprep.subr.mxu0 0.0
    %3288 = vmatpush1.xpose.msra.mxu0 0.0
    %3289 = vmatprep.subr.mxu0 0.0
    %3290 = vmatpush1.xpose.msra.mxu0 0.0
    %3291 = vmatprep.subr.mxu0 0.0
    %3292 = vmatpush1.xpose.msra.mxu0 0.0
    %3293 = vmatprep.subr.mxu0 0.0
    %3294 = vmatpush1.xpose.msra.mxu0 0.0
    %3295 = vmatprep.subr.mxu0 0.0
    %3296 = vmatpush1.xpose.msra.mxu0 0.0
    %3297 = vmatprep.subr.mxu0 0.0
    %3298 = vmatpush1.xpose.msra.mxu0 0.0
    %3299 = vmatprep.subr.mxu0 0.0
    %3300 = vmatpush1.xpose.msra.mxu0 0.0
    %3301 = vmatprep.subr.mxu0 0.0
    %3302 = vmatpush1.xpose.msra.mxu0 0.0
    %3303 = vmatprep.subr.mxu0 0.0
    %3304 = vmatpush1.xpose.msra.mxu0 0.0
    %3305 = vmatprep.subr.mxu0 0.0
    %3306 = vmatpush1.xpose.msra.mxu0 0.0
    %3307 = vmatprep.subr.mxu0 0.0
    %3308 = vmatpush1.xpose.msra.mxu0 0.0
    %3309 = vmatprep.subr.mxu0 0.0
    %3310 = vmatpush1.xpose.msra.mxu0 0.0
    %3311 = vmatprep.subr.mxu0 0.0
    %3312 = vmatpush1.xpose.msra.mxu0 0.0
    %3313 = vmatprep.subr.mxu0 0.0
    %3314 = vmatpush1.xpose.msra.mxu0 0.0
    %3315 = vmatprep.subr.mxu0 0.0
    %3316 = vmatpush1.xpose.msra.mxu0 0.0
    %3317 = vmatprep.subr.mxu0 0.0
    %3318 = vmatpush1.xpose.msra.mxu0 0.0
    %3319 = vmatprep.subr.mxu0 0.0
    %3320 = vmatpush1.xpose.msra.mxu0 0.0
    %3321 = vmatprep.subr.mxu0 0.0
    %3322 = vmatpush1.xpose.msra.mxu0 0.0
    %3323 = vmatprep.subr.mxu0 0.0
    %3324 = vmatpush1.xpose.msra.mxu0 0.0
    %3325 = vmatprep.subr.mxu0 0.0
    %3326 = vmatpush1.xpose.msra.mxu0 0.0
    %3327 = vmatprep.subr.mxu0 0.0
    %3328 = vmatpush1.xpose.msra.mxu0 0.0
    %3329 = vmatprep.subr.mxu0 0.0
    %3330 = vmatpush1.xpose.msra.mxu0 0.0
    %3331 = vmatprep.subr.mxu0 0.0
    %3332 = vmatpush1.xpose.msra.mxu0 0.0
    %3333 = vmatprep.subr.mxu0 0.0
    %3334 = vmatpush1.xpose.msra.mxu0 0.0
    %3335 = vmatprep.subr.mxu0 0.0
    %3336 = vmatpush1.xpose.msra.mxu0 0.0
    %3337 = vmatprep.subr.mxu0 0.0
    %3338 = vmatpush1.xpose.msra.mxu0 0.0
    %3339 = vmatprep.subr.mxu0 0.0
    %3340 = vmatpush1.xpose.msra.mxu0 0.0
    %3341 = vmatprep.subr.mxu0 0.0
    %3342 = vmatpush1.xpose.msra.mxu0 0.0
    %3343 = vmatprep.mubr.f32.mxu0 0.0
    %3344 = vmatmul.mubr.f32.gmra.mrb[0].mxu0 %v3275
    %v3345 = vpop.f32.mrb[0].mxu0
    %v3346 = vadd.f32 0.0, %v3345
    %v3347 = vpop.f32.mrb[0].mxu0
    %3348 = vdwg.mxu0
    %v3349 = vmul.f32 %v3346, 0.35355338
    %v3350 = vadd.f32 %v3349, %v2837
    %v3351 = vsel %vm263, %v3350, -inf
    %3352 = vmax.xlane.f32.xlu0 %v3351
    %v3353 = vpop.xlane.xlu0 %3352
    %v3354 = vsub.f32 %v3350, %v3353
    %v3355 = vmul.f32 %v3354, 1.442695
    %v3356 = vpow.pop %v3355
    %v3357 = vsel %vm263, %v3356, 0.0
    %3358 = vadd.xlane.f32.xlu0 %v3357
    %v3359 = vpop.xlane.xlu0 %3358
    %v3360 = vrcp.pop %v3359
    %v3361 = vmul.f32 %v3356, %v3360
    %3362 = vrot.lane.b32.xlu0 %v2060, 40
    %v3363 = vpop.permute.xlu0 %3362
    %v3366 = vsel %vm263, %v3361, 0
    %3368 = vmatprep.subr.mxu0 0.0
    %3369 = vmatpush1.msra.mxu0 %v3363
    %3370 = vmatprep.subr.mxu0 0.0
    %3371 = vmatpush1.msra.mxu0 0.0
    %3372 = vmatprep.subr.mxu0 0.0
    %3373 = vmatpush1.msra.mxu0 0.0
    %3374 = vmatprep.subr.mxu0 0.0
    %3375 = vmatpush1.msra.mxu0 0.0
    %3376 = vmatprep.subr.mxu0 0.0
    %3377 = vmatpush1.msra.mxu0 0.0
    %3378 = vmatprep.subr.mxu0 0.0
    %3379 = vmatpush1.msra.mxu0 0.0
    %3380 = vmatprep.subr.mxu0 0.0
    %3381 = vmatpush1.msra.mxu0 0.0
    %3382 = vmatprep.subr.mxu0 0.0
    %3383 = vmatpush1.msra.mxu0 0.0
    %3384 = vmatprep.subr.mxu0 0.0
    %3385 = vmatpush1.msra.mxu0 0.0
    %3386 = vmatprep.subr.mxu0 0.0
    %3387 = vmatpush1.msra.mxu0 0.0
    %3388 = vmatprep.subr.mxu0 0.0
    %3389 = vmatpush1.msra.mxu0 0.0
    %3390 = vmatprep.subr.mxu0 0.0
    %3391 = vmatpush1.msra.mxu0 0.0
    %3392 = vmatprep.subr.mxu0 0.0
    %3393 = vmatpush1.msra.mxu0 0.0
    %3394 = vmatprep.subr.mxu0 0.0
    %3395 = vmatpush1.msra.mxu0 0.0
    %3396 = vmatprep.subr.mxu0 0.0
    %3397 = vmatpush1.msra.mxu0 0.0
    %3398 = vmatprep.subr.mxu0 0.0
    %3399 = vmatpush1.msra.mxu0 0.0
    %3400 = vmatprep.subr.mxu0 0.0
    %3401 = vmatpush1.msra.mxu0 0.0
    %3402 = vmatprep.subr.mxu0 0.0
    %3403 = vmatpush1.msra.mxu0 0.0
    %3404 = vmatprep.subr.mxu0 0.0
    %3405 = vmatpush1.msra.mxu0 0.0
    %3406 = vmatprep.subr.mxu0 0.0
    %3407 = vmatpush1.msra.mxu0 0.0
    %3408 = vmatprep.subr.mxu0 0.0
    %3409 = vmatpush1.msra.mxu0 0.0
    %3410 = vmatprep.subr.mxu0 0.0
    %3411 = vmatpush1.msra.mxu0 0.0
    %3412 = vmatprep.subr.mxu0 0.0
    %3413 = vmatpush1.msra.mxu0 0.0
    %3414 = vmatprep.subr.mxu0 0.0
    %3415 = vmatpush1.msra.mxu0 0.0
    %3416 = vmatprep.subr.mxu0 0.0
    %3417 = vmatpush1.msra.mxu0 0.0
    %3418 = vmatprep.subr.mxu0 0.0
    %3419 = vmatpush1.msra.mxu0 0.0
    %3420 = vmatprep.subr.mxu0 0.0
    %3421 = vmatpush1.msra.mxu0 0.0
    %3422 = vmatprep.subr.mxu0 0.0
    %3423 = vmatpush1.msra.mxu0 0.0
    %3424 = vmatprep.subr.mxu0 0.0
    %3425 = vmatpush1.msra.mxu0 0.0
    %3426 = vmatprep.subr.mxu0 0.0
    %3427 = vmatpush1.msra.mxu0 0.0
    %3428 = vmatprep.subr.mxu0 0.0
    %3429 = vmatpush1.msra.mxu0 0.0
    %3430 = vmatprep.subr.mxu0 0.0
    %3431 = vmatpush1.msra.mxu0 0.0
    %3432 = vmatprep.mubr.f32.mxu0 0.0
    %3433 = vmatmul.mubr.f32.gmra.mrb[0].mxu0 %v3366
    %v3434 = vpop.f32.mrb[0].mxu0
    %v3435 = vadd.f32 0.0, %v3434
    %v3436 = vpop.f32.mrb[0].mxu0
    %3437 = vdwg.mxu0
    %3439 = vrot.lane.b32.xlu0 %v3435, 24
    %v3440 = vpop.permute.xlu0 %3439
    %3442 = vst.msk [vmem:[#allocation3 + $0x8] sm:$0xff] %vm949, %v3440
    %v3443 = vld [vmem:[#allocation3] sm:$0xff]
    %v3444 = vld [vmem:[#allocation3 + $0x8] sm:$0xff]
    %s3445 = scalar_lea.vmem %s5, 16
    %v3446 = vld [vmem:[%s3445] sm:$0xf]
    %v3447 = vld [vmem:[%s3445 + $0x4] sm:$0xf]
    %v3448 = vld [vmem:[%s3445 + $0x8] sm:$0xf]
    %v3449 = vld [vmem:[%s3445 + $0xc] sm:$0xf]
    %v3450 = vpack.c.bf16 %v3444, %v3443
    %v3451 = vld [vmem:[%s9 + $0xb] sm:$0x1]
    %v3452 = vlaneseq
    %v3453 = vshrl.u32 %v3452, 7
    %v3454 = vsub.s32 0, %v3453
    %v3455 = vrot.slane %v3451, %v3454
    %v3460 = vunpack.c.l.b16 %v3446
    %v3461 = vunpack.c.l.b16 %v3447
    %v3462 = vunpack.c.l.b16 %v3448
    %v3463 = vunpack.c.l.b16 %v3449
    %v3464 = vpack.c.b16 %v3461, %v3460
    %v3465 = vpack.c.b16 %v3463, %v3462
    %v3469 = vsel %vm151, %v3450, 0
    %3471 = vmatprep.subr.bf16.mxu0 0
    %3472 = vmatpush1.bf16.msra.mxu0 %v3464
    %3473 = vmatprep.subr.bf16.mxu0 0
    %3474 = vmatpush1.bf16.msra.mxu0 %v3465
    %3475 = vmatprep.subr.bf16.mxu0 0
    %3476 = vmatpush1.bf16.msra.mxu0 0
    %3477 = vmatprep.subr.bf16.mxu0 0
    %3478 = vmatpush1.bf16.msra.mxu0 0
    %3479 = vmatprep.subr.bf16.mxu0 0
    %3480 = vmatpush1.bf16.msra.mxu0 0
    %3481 = vmatprep.subr.bf16.mxu0 0
    %3482 = vmatpush1.bf16.msra.mxu0 0
    %3483 = vmatprep.subr.bf16.mxu0 0
    %3484 = vmatpush1.bf16.msra.mxu0 0
    %3485 = vmatprep.subr.bf16.mxu0 0
    %3486 = vmatpush1.bf16.msra.mxu0 0
    %3487 = vmatprep.subr.bf16.mxu0 0
    %3488 = vmatpush1.bf16.msra.mxu0 0
    %3489 = vmatprep.subr.bf16.mxu0 0
    %3490 = vmatpush1.bf16.msra.mxu0 0
    %3491 = vmatprep.subr.bf16.mxu0 0
    %3492 = vmatpush1.bf16.msra.mxu0 0
    %3493 = vmatprep.subr.bf16.mxu0 0
    %3494 = vmatpush1.bf16.msra.mxu0 0
    %3495 = vmatprep.subr.bf16.mxu0 0
    %3496 = vmatpush1.bf16.msra.mxu0 0
    %3497 = vmatprep.subr.bf16.mxu0 0
    %3498 = vmatpush1.bf16.msra.mxu0 0
    %3499 = vmatprep.subr.bf16.mxu0 0
    %3500 = vmatpush1.bf16.msra.mxu0 0
    %3501 = vmatprep.subr.bf16.mxu0 0
    %3502 = vmatpush1.bf16.msra.mxu0 0
    %3503 = vmatprep.mubr.bf16.mxu0 0
    %3504 = vmatmul.mubr.bf16.gmra.mrb[0].mxu0 %v3469
    %v3505 = vpop.f32.mrb[0].mxu0
    %v3506 = vadd.f32 %v3455, %v3505
    %v3507 = vpop.f32.mrb[0].mxu0
    %v3508 = vpop.f32.mrb[0].mxu0
    %v3509 = vadd.f32 %v3455, %v3508
    %v3510 = vpop.f32.mrb[0].mxu0
    %3511 = vdwg.mxu0
    %v3512 = vadd.f32 %v1994, %v3506
    %v3513 = vadd.f32 %v1995, %v3509
    %v3514 = vld [vmem:[%s9 + $0xc] sm:$0x1]
    %v3515 = vld [vmem:[%s9 + $0xd] sm:$0x1]
    %v3516 = vsel %vm151, %v3512, 0.0
    %3517 = vadd.xlane.f32.xlu0 %v3516
    %v3518 = vpop.xlane.xlu0 %3517
    %v3519 = vsel %vm151, %v3513, 0.0
    %3520 = vadd.xlane.f32.xlu0 %v3519
    %v3521 = vpop.xlane.xlu0 %3520
    %v3522 = vmul.f32 %v3518, %v158
    %v3523 = vmul.f32 %v3521, %v158
    %v3524 = vsub.f32 %v3512, %v3522
    %v3525 = vsub.f32 %v3513, %v3523
    %v3526 = vmul.f32 %v3524, %v3524
    %v3527 = vmul.f32 %v3525, %v3525
    %v3528 = vsel %vm151, %v3526, 0.0
    %3529 = vadd.xlane.f32.xlu0 %v3528
    %v3530 = vpop.xlane.xlu0 %3529
    %v3531 = vsel %vm151, %v3527, 0.0
    %3532 = vadd.xlane.f32.xlu0 %v3531
    %v3533 = vpop.xlane.xlu0 %3532
    %v3534 = vmul.f32 %v3530, %v158
    %v3535 = vmul.f32 %v3533, %v158
    %v3536 = vadd.f32 %v3534, 1e-12
    %v3537 = vadd.f32 %v3535, 1e-12
    %v3538 = vrsqrt.pop %v3536
    %v3539 = vrsqrt.pop %v3537
    %v3540 = vmul.f32 %v3524, %v3538
    %v3541 = vmul.f32 %v3525, %v3539
    %v3542 = vlaneseq
    %v3543 = vshrl.u32 %v3542, 7
    %v3544 = vsub.s32 0, %v3543
    %v3545 = vrot.slane %v3514, %v3544
    %v3546 = vmul.f32 %v3540, %v3545
    %v3547 = vmul.f32 %v3541, %v3545
    %v3548 = vlaneseq
    %v3549 = vshrl.u32 %v3548, 7
    %v3550 = vsub.s32 0, %v3549
    %v3551 = vrot.slane %v3515, %v3550
    %v3552 = vadd.f32 %v3546, %v3551
    %v3553 = vadd.f32 %v3547, %v3551
    %s3554 = scalar_lea.vmem %s6, 16
    %v3555 = vld [vmem:[%s3554] sm:$0xf]
    %v3556 = vld [vmem:[%s3554 + $0x4] sm:$0xf]
    %v3557 = vld [vmem:[%s3554 + $0x8] sm:$0xf]
    %v3558 = vld [vmem:[%s3554 + $0xc] sm:$0xf]
    %v3559 = vpack.c.bf16 %v3553, %v3552
    %v3560 = vld [vmem:[%s9 + $0xe] sm:$0x1]
    %v3561 = vlaneseq
    %v3562 = vshrl.u32 %v3561, 7
    %v3563 = vsub.s32 0, %v3562
    %v3564 = vrot.slane %v3560, %v3563
    %v3569 = vunpack.c.l.b16 %v3555
    %v3570 = vunpack.c.l.b16 %v3556
    %v3571 = vunpack.c.l.b16 %v3557
    %v3572 = vunpack.c.l.b16 %v3558
    %v3573 = vpack.c.b16 %v3570, %v3569
    %v3574 = vpack.c.b16 %v3572, %v3571
    %v3578 = vsel %vm151, %v3559, 0
    %3580 = vmatprep.subr.bf16.mxu0 0
    %3581 = vmatpush1.bf16.msra.mxu0 %v3573
    %3582 = vmatprep.subr.bf16.mxu0 0
    %3583 = vmatpush1.bf16.msra.mxu0 %v3574
    %3584 = vmatprep.subr.bf16.mxu0 0
    %3585 = vmatpush1.bf16.msra.mxu0 0
    %3586 = vmatprep.subr.bf16.mxu0 0
    %3587 = vmatpush1.bf16.msra.mxu0 0
    %3588 = vmatprep.subr.bf16.mxu0 0
    %3589 = vmatpush1.bf16.msra.mxu0 0
    %3590 = vmatprep.subr.bf16.mxu0 0
    %3591 = vmatpush1.bf16.msra.mxu0 0
    %3592 = vmatprep.subr.bf16.mxu0 0
    %3593 = vmatpush1.bf16.msra.mxu0 0
    %3594 = vmatprep.subr.bf16.mxu0 0
    %3595 = vmatpush1.bf16.msra.mxu0 0
    %3596 = vmatprep.subr.bf16.mxu0 0
    %3597 = vmatpush1.bf16.msra.mxu0 0
    %3598 = vmatprep.subr.bf16.mxu0 0
    %3599 = vmatpush1.bf16.msra.mxu0 0
    %3600 = vmatprep.subr.bf16.mxu0 0
    %3601 = vmatpush1.bf16.msra.mxu0 0
    %3602 = vmatprep.subr.bf16.mxu0 0
    %3603 = vmatpush1.bf16.msra.mxu0 0
    %3604 = vmatprep.subr.bf16.mxu0 0
    %3605 = vmatpush1.bf16.msra.mxu0 0
    %3606 = vmatprep.subr.bf16.mxu0 0
    %3607 = vmatpush1.bf16.msra.mxu0 0
    %3608 = vmatprep.subr.bf16.mxu0 0
    %3609 = vmatpush1.bf16.msra.mxu0 0
    %3610 = vmatprep.subr.bf16.mxu0 0
    %3611 = vmatpush1.bf16.msra.mxu0 0
    %3612 = vmatprep.mubr.bf16.mxu0 0
    %3613 = vmatmul.mubr.bf16.gmra.mrb[0].mxu0 %v3578
    %v3614 = vpop.f32.mrb[0].mxu0
    %v3615 = vadd.f32 %v3564, %v3614
    %v3616 = vpop.f32.mrb[0].mxu0
    %v3617 = vpop.f32.mrb[0].mxu0
    %v3618 = vadd.f32 %v3564, %v3617
    %v3619 = vpop.f32.mrb[0].mxu0
    %3620 = vdwg.mxu0
    %v3621 = vmul.f32 %v3615, 0.5
    %v3622 = vmul.f32 %v3618, 0.5
    %v3623 = vmul.f32 %v3615, 0.70710677
    %v3624 = vmul.f32 %v3618, 0.70710677
    %vm3625 = vcmp.ge.f32.partialorder %v3623, 0.0
    %vm3626 = vcmp.ge.f32.partialorder %v3624, 0.0
    %v3627 = vsel %vm3625, 1.0, -1.0
    %v3628 = vsel %vm3626, 1.0, -1.0
    %v3629 = vand.u32 2147483647, %v3623
    %v3630 = vand.u32 2147483647, %v3624
    %v3631 = vmul.f32 %v3629, 0.3275911
    %v3632 = vmul.f32 %v3630, 0.3275911
    %v3633 = vadd.f32 %v3631, 1.0
    %v3634 = vadd.f32 %v3632, 1.0
    %v3635 = vrcp.pop %v3633
    %v3636 = vmul.f32 1.0, %v3635
    %v3637 = vrcp.pop %v3634
    %v3638 = vmul.f32 1.0, %v3637
    %v3639 = vmul.f32 %v3636, 1.0614054
    %v3640 = vmul.f32 %v3638, 1.0614054
    %v3641 = vadd.f32 %v3639, -1.4531521
    %v3642 = vadd.f32 %v3640, -1.4531521
    %v3643 = vmul.f32 %v3641, %v3636
    %v3644 = vmul.f32 %v3642, %v3638
    %v3645 = vadd.f32 %v3643, 1.4214138
    %v3646 = vadd.f32 %v3644, 1.4214138
    %v3647 = vmul.f32 %v3645, %v3636
    %v3648 = vmul.f32 %v3646, %v3638
    %v3649 = vadd.f32 %v3647, -0.28449672
    %v3650 = vadd.f32 %v3648, -0.28449672
    %v3651 = vmul.f32 %v3649, %v3636
    %v3652 = vmul.f32 %v3650, %v3638
    %v3653 = vadd.f32 %v3651, 0.2548296
    %v3654 = vadd.f32 %v3652, 0.2548296
    %v3655 = vmul.f32 %v3653, %v3636
    %v3656 = vmul.f32 %v3654, %v3638
    %v3657 = vsub.f32 0.0, %v3629
    %v3658 = vsub.f32 0.0, %v3630
    %v3659 = vmul.f32 %v3657, %v3629
    %v3660 = vmul.f32 %v3658, %v3630
    %v3661 = vmul.f32 %v3659, 1.442695
    %v3662 = vpow.pop %v3661
    %v3663 = vmul.f32 %v3660, 1.442695
    %v3664 = vpow.pop %v3663
    %v3665 = vmul.f32 %v3655, %v3662
    %v3666 = vmul.f32 %v3656, %v3664
    %v3667 = vsub.f32 1.0, %v3665
    %v3668 = vsub.f32 1.0, %v3666
    %v3669 = vmul.f32 %v3627, %v3667
    %v3670 = vmul.f32 %v3628, %v3668
    %v3671 = vadd.f32 %v3669, 1.0
    %v3672 = vadd.f32 %v3670, 1.0
    %v3673 = vmul.f32 %v3621, %v3671
    %v3674 = vmul.f32 %v3622, %v3672
    %s3675 = scalar_lea.vmem %s7, 32
    %v3676 = vld [vmem:[%s3675] sm:$0xf]
    %v3677 = vld [vmem:[%s3675 + $0x4] sm:$0xf]
    %v3678 = vld [vmem:[%s3675 + $0x8] sm:$0xf]
    %v3679 = vld [vmem:[%s3675 + $0xc] sm:$0xf]
    %v3680 = vld [vmem:[%s3675 + $0x10] sm:$0xf]
    %v3681 = vld [vmem:[%s3675 + $0x14] sm:$0xf]
    %v3682 = vld [vmem:[%s3675 + $0x18] sm:$0xf]
    %v3683 = vld [vmem:[%s3675 + $0x1c] sm:$0xf]
    %v3684 = vpack.c.bf16 %v3674, %v3673
    %v3685 = vld [vmem:[%s9 + $0xf] sm:$0x1]
    %v3686 = vlaneseq
    %v3687 = vshrl.u32 %v3686, 7
    %v3688 = vsub.s32 0, %v3687
    %v3689 = vrot.slane %v3685, %v3688
    %v3698 = vunpack.c.l.b16 %v3676
    %v3699 = vunpack.c.l.b16 %v3677
    %v3700 = vunpack.c.l.b16 %v3678
    %v3701 = vunpack.c.l.b16 %v3679
    %v3702 = vunpack.c.l.b16 %v3680
    %v3703 = vunpack.c.l.b16 %v3681
    %v3704 = vunpack.c.l.b16 %v3682
    %v3705 = vunpack.c.l.b16 %v3683
    %v3706 = vpack.c.b16 %v3699, %v3698
    %v3707 = vpack.c.b16 %v3701, %v3700
    %v3708 = vpack.c.b16 %v3703, %v3702
    %v3709 = vpack.c.b16 %v3705, %v3704
    %v3715 = vsel %vm1909, %v3684, 0
    %3717 = vmatprep.subr.bf16.mxu0 0
    %3718 = vmatpush1.bf16.msra.mxu0 %v3706
    %3719 = vmatprep.subr.bf16.mxu0 0
    %3720 = vmatpush1.bf16.msra.mxu0 %v3707
    %3721 = vmatprep.subr.bf16.mxu0 0
    %3722 = vmatpush1.bf16.msra.mxu0 %v3708
    %3723 = vmatprep.subr.bf16.mxu0 0
    %3724 = vmatpush1.bf16.msra.mxu0 %v3709
    %3725 = vmatprep.subr.bf16.mxu0 0
    %3726 = vmatpush1.bf16.msra.mxu0 0
    %3727 = vmatprep.subr.bf16.mxu0 0
    %3728 = vmatpush1.bf16.msra.mxu0 0
    %3729 = vmatprep.subr.bf16.mxu0 0
    %3730 = vmatpush1.bf16.msra.mxu0 0
    %3731 = vmatprep.subr.bf16.mxu0 0
    %3732 = vmatpush1.bf16.msra.mxu0 0
    %3733 = vmatprep.subr.bf16.mxu0 0
    %3734 = vmatpush1.bf16.msra.mxu0 0
    %3735 = vmatprep.subr.bf16.mxu0 0
    %3736 = vmatpush1.bf16.msra.mxu0 0
    %3737 = vmatprep.subr.bf16.mxu0 0
    %3738 = vmatpush1.bf16.msra.mxu0 0
    %3739 = vmatprep.subr.bf16.mxu0 0
    %3740 = vmatpush1.bf16.msra.mxu0 0
    %3741 = vmatprep.subr.bf16.mxu0 0
    %3742 = vmatpush1.bf16.msra.mxu0 0
    %3743 = vmatprep.subr.bf16.mxu0 0
    %3744 = vmatpush1.bf16.msra.mxu0 0
    %3745 = vmatprep.subr.bf16.mxu0 0
    %3746 = vmatpush1.bf16.msra.mxu0 0
    %3747 = vmatprep.subr.bf16.mxu0 0
    %3748 = vmatpush1.bf16.msra.mxu0 0
    %3749 = vmatprep.mubr.bf16.mxu0 0
    %3750 = vmatmul.mubr.bf16.gmra.mrb[0].mxu0 %v3715
    %v3751 = vpop.f32.mrb[0].mxu0
    %v3752 = vadd.f32 %v3689, %v3751
    %v3753 = vpop.f32.mrb[0].mxu0
    %v3754 = vpop.f32.mrb[0].mxu0
    %v3755 = vadd.f32 %v3689, %v3754
    %v3756 = vpop.f32.mrb[0].mxu0
    %3757 = vdwg.mxu0
    %v3758 = vadd.f32 %v3552, %v3752
    %v3759 = vadd.f32 %v3553, %v3755
    %v3760 = vld [vmem:[%s9 + $0x10] sm:$0x1]
    %v3761 = vld [vmem:[%s9 + $0x11] sm:$0x1]
    %v3762 = vsel %vm151, %v3758, 0.0
    %3763 = vadd.xlane.f32.xlu0 %v3762
    %v3764 = vpop.xlane.xlu0 %3763
    %v3765 = vsel %vm151, %v3759, 0.0
    %3766 = vadd.xlane.f32.xlu0 %v3765
    %v3767 = vpop.xlane.xlu0 %3766
    %v3768 = vmul.f32 %v3764, %v158
    %v3769 = vmul.f32 %v3767, %v158
    %v3770 = vsub.f32 %v3758, %v3768
    %v3771 = vsub.f32 %v3759, %v3769
    %v3772 = vmul.f32 %v3770, %v3770
    %v3773 = vmul.f32 %v3771, %v3771
    %v3774 = vsel %vm151, %v3772, 0.0
    %3775 = vadd.xlane.f32.xlu0 %v3774
    %v3776 = vpop.xlane.xlu0 %3775
    %v3777 = vsel %vm151, %v3773, 0.0
    %3778 = vadd.xlane.f32.xlu0 %v3777
    %v3779 = vpop.xlane.xlu0 %3778
    %v3780 = vmul.f32 %v3776, %v158
    %v3781 = vmul.f32 %v3779, %v158
    %v3782 = vadd.f32 %v3780, 1e-12
    %v3783 = vadd.f32 %v3781, 1e-12
    %v3784 = vrsqrt.pop %v3782
    %v3785 = vrsqrt.pop %v3783
    %v3786 = vmul.f32 %v3770, %v3784
    %v3787 = vmul.f32 %v3771, %v3785
    %v3788 = vlaneseq
    %v3789 = vshrl.u32 %v3788, 7
    %v3790 = vsub.s32 0, %v3789
    %v3791 = vrot.slane %v3760, %v3790
    %v3792 = vmul.f32 %v3786, %v3791
    %v3793 = vmul.f32 %v3787, %v3791
    %v3794 = vlaneseq
    %v3795 = vshrl.u32 %v3794, 7
    %v3796 = vsub.s32 0, %v3795
    %v3797 = vrot.slane %v3761, %v3796
    %v3798 = vadd.f32 %v3792, %v3797
    %v3799 = vadd.f32 %v3793, %v3797
    %v3801 = vrot.slane %v3799, 7
    %vm3803 = vcmask 1040384
    %v3804 = vsel %vm3803, %v3798, %v3801
    %v3805 = vld [vmem:[%s8] sm:$0xf]
    %v3806 = vld [vmem:[%s8 + $0x4] sm:$0xf]
    %v3807 = vld [vmem:[%s8 + $0x8] sm:$0xf]
    %v3808 = vld [vmem:[%s8 + $0xc] sm:$0xf]
    %v3809 = vpack.c.bf16 %v3804, %v3804
    %v3810 = vld [vmem:[%s9 + $0x12] sm:$0x1]
    %v3811 = vlaneseq
    %v3812 = vshrl.u32 %v3811, 7
    %v3813 = vsub.s32 0, %v3812
    %v3814 = vrot.slane %v3810, %v3813
    %v3819 = vunpack.c.l.b16 %v3805
    %v3820 = vunpack.c.l.b16 %v3806
    %v3821 = vunpack.c.l.b16 %v3807
    %v3822 = vunpack.c.l.b16 %v3808
    %v3823 = vpack.c.b16 %v3820, %v3819
    %v3824 = vpack.c.b16 %v3822, %v3821
    %v3828 = vsel %vm151, %v3809, 0
    %3830 = vmatprep.subr.bf16.mxu0 0
    %3831 = vmatpush1.bf16.msra.mxu0 %v3823
    %3832 = vmatprep.subr.bf16.mxu0 0
    %3833 = vmatpush1.bf16.msra.mxu0 %v3824
    %3834 = vmatprep.subr.bf16.mxu0 0
    %3835 = vmatpush1.bf16.msra.mxu0 0
    %3836 = vmatprep.subr.bf16.mxu0 0
    %3837 = vmatpush1.bf16.msra.mxu0 0
    %3838 = vmatprep.subr.bf16.mxu0 0
    %3839 = vmatpush1.bf16.msra.mxu0 0
    %3840 = vmatprep.subr.bf16.mxu0 0
    %3841 = vmatpush1.bf16.msra.mxu0 0
    %3842 = vmatprep.subr.bf16.mxu0 0
    %3843 = vmatpush1.bf16.msra.mxu0 0
    %3844 = vmatprep.subr.bf16.mxu0 0
    %3845 = vmatpush1.bf16.msra.mxu0 0
    %3846 = vmatprep.subr.bf16.mxu0 0
    %3847 = vmatpush1.bf16.msra.mxu0 0
    %3848 = vmatprep.subr.bf16.mxu0 0
    %3849 = vmatpush1.bf16.msra.mxu0 0
    %3850 = vmatprep.subr.bf16.mxu0 0
    %3851 = vmatpush1.bf16.msra.mxu0 0
    %3852 = vmatprep.subr.bf16.mxu0 0
    %3853 = vmatpush1.bf16.msra.mxu0 0
    %3854 = vmatprep.subr.bf16.mxu0 0
    %3855 = vmatpush1.bf16.msra.mxu0 0
    %3856 = vmatprep.subr.bf16.mxu0 0
    %3857 = vmatpush1.bf16.msra.mxu0 0
    %3858 = vmatprep.subr.bf16.mxu0 0
    %3859 = vmatpush1.bf16.msra.mxu0 0
    %3860 = vmatprep.subr.bf16.mxu0 0
    %3861 = vmatpush1.bf16.msra.mxu0 0
    %3862 = vmatprep.mubr.bf16.mxu0 0
    %3863 = vmatmul.mubr.bf16.gmra.mrb[0].mxu0 %v3828
    %v3864 = vpop.f32.mrb[0].mxu0
    %v3865 = vadd.f32 %v3814, %v3864
    %v3866 = vpop.f32.mrb[0].mxu0
    %v3867 = vpop.f32.mrb[0].mxu0
    %v3868 = vpop.f32.mrb[0].mxu0
    %3869 = vdwg.mxu0
    %v3870 = vmax.f32 %v3865, 0.0
    %v3871 = vpack.c.bf16 %v3870, %v3870
    %v3872 = vld [vmem:[%s9 + $0x13] sm:$0x1]
    %v3873 = vlaneseq
    %v3874 = vshrl.u32 %v3873, 7
    %v3875 = vsub.s32 0, %v3874
    %v3876 = vrot.slane %v3872, %v3875
    %3877 = vrot.lane.b32.xlu0 %v3823, 96
    %v3878 = vpop.permute.xlu0 %3877
    %3879 = vrot.lane.b32.xlu0 %v3824, 96
    %v3880 = vpop.permute.xlu0 %3879
    %v3884 = vsel %vm151, %v3871, 0
    %3886 = vmatprep.subr.bf16.mxu0 0
    %3887 = vmatpush1.bf16.msra.mxu0 %v3878
    %3888 = vmatprep.subr.bf16.mxu0 0
    %3889 = vmatpush1.bf16.msra.mxu0 %v3880
    %3890 = vmatprep.subr.bf16.mxu0 0
    %3891 = vmatpush1.bf16.msra.mxu0 0
    %3892 = vmatprep.subr.bf16.mxu0 0
    %3893 = vmatpush1.bf16.msra.mxu0 0
    %3894 = vmatprep.subr.bf16.mxu0 0
    %3895 = vmatpush1.bf16.msra.mxu0 0
    %3896 = vmatprep.subr.bf16.mxu0 0
    %3897 = vmatpush1.bf16.msra.mxu0 0
    %3898 = vmatprep.subr.bf16.mxu0 0
    %3899 = vmatpush1.bf16.msra.mxu0 0
    %3900 = vmatprep.subr.bf16.mxu0 0
    %3901 = vmatpush1.bf16.msra.mxu0 0
    %3902 = vmatprep.subr.bf16.mxu0 0
    %3903 = vmatpush1.bf16.msra.mxu0 0
    %3904 = vmatprep.subr.bf16.mxu0 0
    %3905 = vmatpush1.bf16.msra.mxu0 0
    %3906 = vmatprep.subr.bf16.mxu0 0
    %3907 = vmatpush1.bf16.msra.mxu0 0
    %3908 = vmatprep.subr.bf16.mxu0 0
    %3909 = vmatpush1.bf16.msra.mxu0 0
    %3910 = vmatprep.subr.bf16.mxu0 0
    %3911 = vmatpush1.bf16.msra.mxu0 0
    %3912 = vmatprep.subr.bf16.mxu0 0
    %3913 = vmatpush1.bf16.msra.mxu0 0
    %3914 = vmatprep.subr.bf16.mxu0 0
    %3915 = vmatpush1.bf16.msra.mxu0 0
    %3916 = vmatprep.subr.bf16.mxu0 0
    %3917 = vmatpush1.bf16.msra.mxu0 0
    %3918 = vmatprep.mubr.bf16.mxu0 0
    %3919 = vmatmul.mubr.bf16.gmra.mrb[0].mxu0 %v3884
    %v3920 = vpop.f32.mrb[0].mxu0
    %v3921 = vadd.f32 %v3876, %v3920
    %v3922 = vpop.f32.mrb[0].mxu0
    %v3923 = vpop.f32.mrb[0].mxu0
    %v3924 = vpop.f32.mrb[0].mxu0
    %3925 = vdwg.mxu0
    %v3926 = vmax.f32 %v3921, 0.0
    %v3927 = vpack.c.bf16 %v3926, %v3926
    %v3928 = vld [vmem:[%s9 + $0x14] sm:$0x1]
    %v3929 = vlaneseq
    %v3930 = vshrl.u32 %v3929, 7
    %v3931 = vsub.s32 0, %v3930
    %v3932 = vrot.slane %v3928, %v3931
    %3933 = vrot.lane.b32.xlu0 %v3823, 64
    %v3934 = vpop.permute.xlu0 %3933
    %3935 = vrot.lane.b32.xlu0 %v3824, 64
    %v3936 = vpop.permute.xlu0 %3935
    %v3940 = vsel %vm151, %v3927, 0
    %3942 = vmatprep.subr.bf16.mxu0 0
    %3943 = vmatpush1.bf16.msra.mxu0 %v3934
    %3944 = vmatprep.subr.bf16.mxu0 0
    %3945 = vmatpush1.bf16.msra.mxu0 %v3936
    %3946 = vmatprep.subr.bf16.mxu0 0
    %3947 = vmatpush1.bf16.msra.mxu0 0
    %3948 = vmatprep.subr.bf16.mxu0 0
    %3949 = vmatpush1.bf16.msra.mxu0 0
    %3950 = vmatprep.subr.bf16.mxu0 0
    %3951 = vmatpush1.bf16.msra.mxu0 0
    %3952 = vmatprep.subr.bf16.mxu0 0
    %3953 = vmatpush1.bf16.msra.mxu0 0
    %3954 = vmatprep.subr.bf16.mxu0 0
    %3955 = vmatpush1.bf16.msra.mxu0 0
    %3956 = vmatprep.subr.bf16.mxu0 0
    %3957 = vmatpush1.bf16.msra.mxu0 0
    %3958 = vmatprep.subr.bf16.mxu0 0
    %3959 = vmatpush1.bf16.msra.mxu0 0
    %3960 = vmatprep.subr.bf16.mxu0 0
    %3961 = vmatpush1.bf16.msra.mxu0 0
    %3962 = vmatprep.subr.bf16.mxu0 0
    %3963 = vmatpush1.bf16.msra.mxu0 0
    %3964 = vmatprep.subr.bf16.mxu0 0
    %3965 = vmatpush1.bf16.msra.mxu0 0
    %3966 = vmatprep.subr.bf16.mxu0 0
    %3967 = vmatpush1.bf16.msra.mxu0 0
    %3968 = vmatprep.subr.bf16.mxu0 0
    %3969 = vmatpush1.bf16.msra.mxu0 0
    %3970 = vmatprep.subr.bf16.mxu0 0
    %3971 = vmatpush1.bf16.msra.mxu0 0
    %3972 = vmatprep.subr.bf16.mxu0 0
    %3973 = vmatpush1.bf16.msra.mxu0 0
    %3974 = vmatprep.mubr.bf16.mxu0 0
    %3975 = vmatmul.mubr.bf16.gmra.mrb[0].mxu0 %v3940
    %v3976 = vpop.f32.mrb[0].mxu0
    %v3977 = vadd.f32 %v3932, %v3976
    %v3978 = vpop.f32.mrb[0].mxu0
    %v3979 = vpop.f32.mrb[0].mxu0
    %v3980 = vpop.f32.mrb[0].mxu0
    %3981 = vdwg.mxu0
    %vm3982 = vcmask 25600
    %v3983 = vsel %vm3982, %v3977, -inf
    %3984 = vmax.xlane.f32.xlu0 %v3983
    %v3985 = vpop.xlane.xlu0 %3984
    %v3986 = vsub.f32 %v3977, %v3985
    %v3987 = vmul.f32 %v3986, 1.442695
    %v3988 = vpow.pop %v3987
    %v3989 = vsel %vm3982, %v3988, 0.0
    %3990 = vadd.xlane.f32.xlu0 %v3989
    %v3991 = vpop.xlane.xlu0 %3990
    %v3992 = vlog2.pop %v3991
    %v3993 = vmul.f32 %v3992, 0.6931472
    %v3994 = vadd.f32 %v3993, %v3985
    %v3995 = vsub.f32 %v3977, %v3994
    %3996 = vst.msk [vmem:[#allocation7] sm:$0x3] %vm3982, %v3995
    // Predicated region
    $region46: #{bert_classification_forward.1} parent=1 // pred_check
      _
    $region47: #{bert_classification_forward.1} parent=1 // pred_check_branch
      %3998 = sbr.rel (0) target = $region49
    $region48: #{bert_classification_forward.1} parent=1 // pred_region
      %s4000 = ssub.s32 32, 32
      %4001 = vsyncadd [#allocation5], %s4000
      %s4003 = sshll.u32 [#allocation7], 4
      %s4004 = int_to_ptr.vmem [resolvable:$true] %s4003
      %4006 = dma.vmem_to_hbm [thread:$0]  %s4004, 32, %s10, [#allocation5]
    $region49: #{bert_classification_forward.1} parent=1 // pred_fallthru
      _
    // Predicated region
    $region50: #{bert_classification_forward.1} parent=1 // pred_check
      _
    $region51: #{bert_classification_forward.1} parent=1 // pred_check_branch
      %4008 = sbr.rel (0) target = $region53
    $region52: #{bert_classification_forward.1} parent=1 // pred_region
      %4009 = dma.done [#allocation5], 32
    $region53: #{bert_classification_forward.1} parent=1 // pred_fallthru
      _
    %4010 = vsyncpa [#allocation5], 1
    %4011 = vsyncpa [#allocation6], 1

</llo_original>
